<compile_context>
chip_gen: v7x
topology: tpu7x:2x2x1
jax: 0.10.0
libtpu: 0.0.40
codegen_flags: <defaults>
</compile_context>

<pallas_src>
import functools
import math

import jax
import jax.numpy as jnp
from jax import lax
from jax.experimental import pallas as pl
from jax.experimental.pallas import tpu as pltpu

# bf16 weights/operands halve weight-DMA bytes and use the native MXU bf16 path
# on all generations; accumulation / LN / softmax stay f32.  Set both to
# jnp.float32 for closer bit-parity with an f32 PyTorch reference.
WEIGHT_DTYPE = jnp.bfloat16
MATMUL_DTYPE = jnp.bfloat16

# Row layout of the packed per-layer bias / LayerNorm slab.
_ROW_SA_IN, _ROW_SA_OUT = 0, 1
_ROW_CA_Q, _ROW_CA_KV, _ROW_CA_OUT = 2, 3, 4
_ROW_FF1, _ROW_FF2 = 5, 6
_ROW_LN1_G, _ROW_LN1_B = 7, 8
_ROW_LN2_G, _ROW_LN2_B = 9, 10
_ROW_LN3_G, _ROW_LN3_B = 11, 12
_N_BIAS_ROWS = 13


def _round_up(x, m):
    return (x + m - 1) // m * m


def _vmem_limit_bytes():
    """Scoped-VMEM request: ~3/4 of physical (96 MiB v5e/v6e, 48 MiB v7x)."""
    cap = 64 * 1024 * 1024                      # conservative fallback (v7x size)
    try:
        info = pltpu.get_tpu_info()
        cap = int(getattr(info, "vmem_capacity_bytes", cap))
    except Exception:
        pass
    return max(32 * 1024 * 1024, min(100 * 1024 * 1024, (3 * cap) // 4))


def _mm(a, b):
    """MXU matmul: bf16 operands, f32 accumulation."""
    return jnp.dot(a.astype(MATMUL_DTYPE), b.astype(MATMUL_DTYPE),
                   preferred_element_type=jnp.float32)


def _add_ln(x, y, g, b, eps):
    """Post-norm residual block: LayerNorm(x + y) over the last dim (f32 stats)."""
    z = x + y
    mu = jnp.mean(z, axis=-1, keepdims=True)
    var = jnp.mean(jnp.square(z - mu), axis=-1, keepdims=True)
    return (z - mu) * lax.rsqrt(var + eps) * g + b


def _attention(q, k, v, slab_ref, num_heads, head_dim, scale, *, causal, valid_kv):
    """Multi-head attention.  q:(Bb,Tq,H), k/v:(Bb,Tk,H); per-head outputs are
    written into slab_ref (Bb,Tq,H) instead of concatenated along lanes.
    Keys with index >= valid_kv are masked (handles zero-padded memory rows)."""
    _, tq, _ = q.shape
    tk = k.shape[1]

    neg = None
    if causal or valid_kv < tk:
        row = lax.broadcasted_iota(jnp.int32, (tq, tk), 0)
        col = lax.broadcasted_iota(jnp.int32, (tq, tk), 1)
        bad = None
        if causal:
            bad = col > row
        if valid_kv < tk:
            kmask = col >= valid_kv
            bad = kmask if bad is None else (bad | kmask)
        # large-negative (not -inf) so a hypothetical fully-masked row stays finite
        neg = jnp.where(bad, jnp.float32(-1e30), jnp.float32(0.0))[None, :, :]

    for h in range(num_heads):
        sl = slice(h * head_dim, (h + 1) * head_dim)
        qh = (q[:, :, sl] * scale).astype(MATMUL_DTYPE)
        kh = k[:, :, sl].astype(MATMUL_DTYPE)
        vh = v[:, :, sl].astype(MATMUL_DTYPE)
        s = jnp.einsum('bqd,bkd->bqk', qh, kh, preferred_element_type=jnp.float32)
        if neg is not None:
            s = s + neg
        s = s - jnp.max(s, axis=-1, keepdims=True)
        p = jnp.exp(s)
        # approx reciprocal runs on the EUP slot (~1e-3 rel error; inference only)
        p = p * pl.reciprocal(jnp.sum(p, axis=-1, keepdims=True), approx=True)
        slab_ref[:, :, sl] = jnp.einsum('bqk,bkd->bqd', p.astype(MATMUL_DTYPE), vh,
                                        preferred_element_type=jnp.float32)


# --------------------------- fused decoder stack -----------------------------

def _decoder_stack_kernel(h0_ref, mem_ref,
                          sa_in_w_ref, sa_out_w_ref,
                          ca_q_w_ref, ca_kv_w_ref, ca_out_w_ref,
                          ff1_w_ref, ff2_w_ref, bias_ref,
                          h_ref, slab_ref,
                          *, num_heads, head_dim, scale, eps, valid_mem):
    """Grid = (batch_block, layer).  h_ref (Bb, Tq_p, H) is revisited across the
    layer axis so the activation stays resident in VMEM for the whole stack."""
    Bb, Tq, H = h_ref.shape
    Sm = mem_ref.shape[1]
    F = ff1_w_ref.shape[1]

    # Layer 0: seed the carried activation with the projected target tokens.
    @pl.when(pl.program_id(1) == 0)
    def _init():
        h_ref[...] = h0_ref[...]

    biases = bias_ref[...]                       # (13, WB) f32

    def brow(row, width):                        # (1, width) broadcast over rows
        return biases[row:row + 1, :width]

    h2 = h_ref[...].reshape(Bb * Tq, H)          # flattened rows for all matmuls
    mem2 = mem_ref[...].reshape(Bb * Sm, H)

    # ---- self-attention (causal; padded keys excluded by the causal mask) ----
    qkv = _mm(h2, sa_in_w_ref[...]) + brow(_ROW_SA_IN, 3 * H)
    q = qkv[:, 0 * H:1 * H].reshape(Bb, Tq, H)
    k = qkv[:, 1 * H:2 * H].reshape(Bb, Tq, H)
    v = qkv[:, 2 * H:3 * H].reshape(Bb, Tq, H)
    _attention(q, k, v, slab_ref, num_heads, head_dim, scale,
               causal=True, valid_kv=Tq)
    attn = _mm(slab_ref[...].reshape(Bb * Tq, H), sa_out_w_ref[...]) \
        + brow(_ROW_SA_OUT, H)
    h2 = _add_ln(h2, attn, brow(_ROW_LN1_G, H), brow(_ROW_LN1_B, H), eps)

    # ---- cross-attention (q from tgt, k/v from memory; padded memory masked) ----
    q = (_mm(h2, ca_q_w_ref[...]) + brow(_ROW_CA_Q, H)).reshape(Bb, Tq, H)
    kv = _mm(mem2, ca_kv_w_ref[...]) + brow(_ROW_CA_KV, 2 * H)
    k = kv[:, 0 * H:1 * H].reshape(Bb, Sm, H)
    v = kv[:, 1 * H:2 * H].reshape(Bb, Sm, H)
    _attention(q, k, v, slab_ref, num_heads, head_dim, scale,
               causal=False, valid_kv=valid_mem)
    attn = _mm(slab_ref[...].reshape(Bb * Tq, H), ca_out_w_ref[...]) \
        + brow(_ROW_CA_OUT, H)
    h2 = _add_ln(h2, attn, brow(_ROW_LN2_G, H), brow(_ROW_LN2_B, H), eps)

    # ---- feed-forward (ReLU: default activation of nn.TransformerDecoderLayer) ----
    ff = jnp.maximum(_mm(h2, ff1_w_ref[...]) + brow(_ROW_FF1, F), 0.0)
    ff = _mm(ff, ff2_w_ref[...]) + brow(_ROW_FF2, H)
    h2 = _add_ln(h2, ff, brow(_ROW_LN3_G, H), brow(_ROW_LN3_B, H), eps)

    h_ref[...] = h2.reshape(Bb, Tq, H)


def _pick_batch_block(B, Tq, Sm, H, F, budget_bytes):
    """Largest divisor Bb of B whose per-step working set fits the VMEM budget."""
    wsize = jnp.dtype(WEIGHT_DTYPE).itemsize
    layer_weights = (8 * H * H + 2 * H * F) * wsize + _N_BIAS_ROWS * max(3 * H, F) * 4
    fixed = 2 * layer_weights                      # double-buffered layer weights
    # TODO(synk): if `fixed` alone exceeds the v7x budget (very large H/F), tile
    # the FFN F axis (inner emit_pipeline / third grid axis) instead.

    def per_step(bb):
        act = bb * Tq * H * 4 * 5                  # h0 (2 bufs) + h out (2) + slab
        memb = bb * Sm * H * 4 * 2                 # memory (2 bufs)
        inter = bb * (Tq * (3 * H + F) + Sm * 2 * H + 2 * Tq * max(Tq, Sm)) * 4
        return act + memb + inter

    best = 1
    for bb in range(1, B + 1):
        if B % bb == 0 and fixed + per_step(bb) <= budget_bytes:
            best = bb
    return best


def _decoder_stack(h0, mem, params, *, num_heads, valid_mem, eps=1e-5):
    B, Tq_p, H = h0.shape
    Sm_p = mem.shape[1]
    L = params["sa_in_w"].shape[0]
    F = params["ff1_w"].shape[2]
    assert H % num_heads == 0
    head_dim = H // num_heads
    scale = 1.0 / math.sqrt(head_dim)

    vmem_limit = _vmem_limit_bytes()
    Bb = _pick_batch_block(B, Tq_p, Sm_p, H, F, int(vmem_limit * 0.85))

    kernel = functools.partial(
        _decoder_stack_kernel, num_heads=num_heads, head_dim=head_dim,
        scale=scale, eps=eps, valid_mem=valid_mem)

    batch3 = lambda n, d: pl.BlockSpec((Bb, n, d), lambda b, l: (b, 0, 0))
    layerw = lambda d1, d2: pl.BlockSpec((None, d1, d2), lambda b, l: (l, 0, 0))

    # TODO(synk): on v7x, a leading CORE_PARALLEL batch-block axis (or
    # pl.core_map over a tensorcore mesh) would split work across both
    # TensorCores; left as plain "parallel" here for portability.
    return pl.pallas_call(
        kernel,
        out_shape=jax.ShapeDtypeStruct((B, Tq_p, H), jnp.float32),
        grid=(B // Bb, L),
        in_specs=[
            batch3(Tq_p, H),                      # projected target tokens
            batch3(Sm_p, H),                      # memory (features)
            layerw(H, 3 * H),                     # self-attn in_proj
            layerw(H, H),                         # self-attn out_proj
            layerw(H, H),                         # cross-attn q proj
            layerw(H, 2 * H),                     # cross-attn k/v proj
            layerw(H, H),                         # cross-attn out_proj
            layerw(H, F),                         # ffn linear1
            layerw(F, H),                         # ffn linear2
            layerw(_N_BIAS_ROWS, params["bias_pack"].shape[2]),   # bias/LN slab
        ],
        out_specs=batch3(Tq_p, H),
        scratch_shapes=[pltpu.VMEM((Bb, Tq_p, H), jnp.float32)],
        compiler_params=pltpu.CompilerParams(
            dimension_semantics=("parallel", "arbitrary"),
            vmem_limit_bytes=vmem_limit),
    )(h0, mem,
      params["sa_in_w"], params["sa_out_w"],
      params["ca_q_w"], params["ca_kv_w"], params["ca_out_w"],
      params["ff1_w"], params["ff2_w"], params["bias_pack"])


# --------------------------- vocab projection ---------------------------------

def _vocab_proj_kernel(x_ref, w_ref, b_ref, o_ref):
    o_ref[...] = (_mm(x_ref[...], w_ref[...]) + b_ref[...]).astype(o_ref.dtype)


def _pick_row_block(M):
    for bm in (512, 256, 128):
        if M >= bm and M % bm == 0:
            return bm
    return M


def vocab_projection(x, w_p, b_p):
    """x:(M,K) @ w_p:(K,Vp) + b_p:(1,Vp).  Vp is pre-padded lane-dense; both the
    row axis and the vocab axis are tiled and marked 'parallel'."""
    M, K = x.shape
    Vp = w_p.shape[1]
    bn = Vp
    for cand in (2048, 1024, 512, 256, 128):
        if Vp % cand == 0:
            bn = cand
            break
    bm = _pick_row_block(M)
    return pl.pallas_call(
        _vocab_proj_kernel,
        out_shape=jax.ShapeDtypeStruct((M, Vp), jnp.float32),
        grid=(M // bm, Vp // bn),
        in_specs=[pl.BlockSpec((bm, K), lambda i, j: (i, 0)),
                  pl.BlockSpec((K, bn), lambda i, j: (0, j)),
                  pl.BlockSpec((1, bn), lambda i, j: (0, j))],
        out_specs=pl.BlockSpec((bm, bn), lambda i, j: (i, j)),
        compiler_params=pltpu.CompilerParams(
            dimension_semantics=("parallel", "parallel"),
            vmem_limit_bytes=_vmem_limit_bytes()),
    )(x, w_p, b_p)


# --------------------------- parameters ---------------------------------------

def make_params(key, emb_size, vocab_size, num_layers, dec_hidden, ff_dim, max_len):
    """Kernel-ready layout: linear weights pre-transposed (in, out) and stacked
    per layer, stored in bf16; biases/LN params packed into one (L, 13, W) slab;
    hidden->vocab zero-padded to a lane-dense vocab width."""
    keys = iter(jax.random.split(key, 32))
    H, F, L, E = dec_hidden, ff_dim, num_layers, emb_size

    def rnd(shape, scale=0.05):
        return jax.random.normal(next(keys), shape, jnp.float32) * scale

    def wmat(shape, scale=0.05):
        return rnd(shape, scale).astype(WEIGHT_DTYPE)

    # hidden -> vocab (zero-padded to a multiple of 128, and 1024 if large)
    Vp = _round_up(vocab_size, 128)
    if Vp >= 1024:
        Vp = _round_up(Vp, 1024)
    h2v_w = rnd((H, vocab_size))
    h2v_b = rnd((vocab_size,), 0.01)
    h2v_w_p = jnp.zeros((H, Vp), jnp.float32).at[:, :vocab_size].set(h2v_w)
    h2v_b_p = jnp.zeros((1, Vp), jnp.float32).at[0, :vocab_size].set(h2v_b)

    # packed per-layer biases + LayerNorm affine params: (L, 13, WB) f32
    WB = max(3 * H, F)
    bias_rows = {
        _ROW_SA_IN:  rnd((L, 3 * H), 0.01),
        _ROW_SA_OUT: rnd((L, H), 0.01),
        _ROW_CA_Q:   rnd((L, H), 0.01),
        _ROW_CA_KV:  rnd((L, 2 * H), 0.01),
        _ROW_CA_OUT: rnd((L, H), 0.01),
        _ROW_FF1:    rnd((L, F), 0.01),
        _ROW_FF2:    rnd((L, H), 0.01),
        _ROW_LN1_G: jnp.ones((L, H), jnp.float32),
        _ROW_LN1_B: jnp.zeros((L, H), jnp.float32),
        _ROW_LN2_G: jnp.ones((L, H), jnp.float32),
        _ROW_LN2_B: jnp.zeros((L, H), jnp.float32),
        _ROW_LN3_G: jnp.ones((L, H), jnp.float32),
        _ROW_LN3_B: jnp.zeros((L, H), jnp.float32),
    }
    bias_pack = jnp.zeros((L, _N_BIAS_ROWS, WB), jnp.float32)
    for row, vec in bias_rows.items():
        bias_pack = bias_pack.at[:, row, :vec.shape[1]].set(vec)

    return {
        # embedding path (stays in XLA glue)
        "embedding": rnd((vocab_size, E), 1.0),     # nn.Embedding weight
        "pos_enc":   rnd((1, max_len, E), 0.02),    # (module inits zeros)
        "e2h_w":     rnd((E, H)),                   # (in, out)
        "e2h_b":     rnd((H,), 0.01),
        # vocab projection (padded; weight bf16)
        "h2v_w":     h2v_w_p.astype(WEIGHT_DTYPE),
        "h2v_b":     h2v_b_p,
        # stacked per-layer decoder weights, pre-transposed, bf16
        "sa_in_w":  wmat((L, H, 3 * H)),            # q|k|v stacking matches torch
        "sa_out_w": wmat((L, H, H)),
        "ca_q_w":   wmat((L, H, H)),
        "ca_kv_w":  wmat((L, H, 2 * H)),
        "ca_out_w": wmat((L, H, H)),
        "ff1_w":    wmat((L, H, F)),
        "ff2_w":    wmat((L, F, H)),
        "bias_pack": bias_pack,
    }


# --------------------------- forward pass --------------------------------------

def transformer_decoder_forward(params, features, captions, *, num_heads, vocab_size):
    B, T = captions.shape
    H = params["e2h_w"].shape[1]
    Tq = T - 1
    Sm = features.shape[1]
    if T > params["pos_enc"].shape[1]:
        raise ValueError(f"Sequence length {T} exceeds maximum "
                         f"{params['pos_enc'].shape[1]}")

    # --- XLA glue: token-id gather + positional encoding + emb->hidden proj ---
    # TODO(synk): the embedding gather has no clean Pallas equivalent at this
    # size; the small E->H Linear is hoisted out of the fused layer loop per the
    # perf review.  Dropout is identity (inference mode).
    emb = jnp.take(params["embedding"], captions, axis=0) + params["pos_enc"][:, :T, :]
    tgt = emb[:, :Tq, :]                                       # drop last token
    h0 = jnp.dot(tgt, params["e2h_w"]) + params["e2h_b"]       # (B, Tq, H) f32

    # Pad sequence (sublane) axes to multiples of 8 so in-kernel reshapes are
    # tile-aligned no-ops; padded memory keys are masked inside the kernel and
    # padded query rows are sliced off below.
    Tq_p, Sm_p = _round_up(Tq, 8), _round_up(Sm, 8)
    h0p = jnp.pad(h0, ((0, 0), (0, Tq_p - Tq), (0, 0)))
    memp = jnp.pad(features.astype(jnp.float32), ((0, 0), (0, Sm_p - Sm), (0, 0)))

    h = _decoder_stack(h0p, memp, params, num_heads=num_heads, valid_mem=Sm)
    h = h[:, :Tq, :]

    # --- hidden -> vocab projection (lane-dense padded vocab, bf16 weight) ---
    logits_p = vocab_projection(h.reshape(B * Tq, H),
                                params["h2v_w"], params["h2v_b"])
    # TODO(synk): if the consumer tolerates a padded vocab axis, return logits_p
    # directly and skip this extra HBM round trip.
    logits = logits_p[:, :vocab_size].reshape(B, Tq, vocab_size)
    return logits, None


# --------------------------- main -----------------------------------------------

if __name__ == "__main__":
    emb_size, vocab_size, num_heads, num_layers = 32, 50, 4, 2
    dec_hidden, ff_dim, max_len = 32, 64, 16
    B, T, Sm = 2, 8, 6

    key = jax.random.PRNGKey(0)
    kp, kf, kc = jax.random.split(key, 3)

    params = make_params(kp, emb_size, vocab_size, num_layers,
                         dec_hidden, ff_dim, max_len)
    features = jax.random.normal(kf, (B, Sm, dec_hidden), jnp.float32)
    captions = jax.random.randint(kc, (B, T), 0, vocab_size, dtype=jnp.int32)

    fwd = jax.jit(functools.partial(transformer_decoder_forward,
                                    num_heads=num_heads, vocab_size=vocab_size))
    logits, _ = fwd(params, features, captions)
    jax.block_until_ready(logits)

    assert logits.shape == (B, T - 1, vocab_size), logits.shape
    assert bool(jnp.all(jnp.isfinite(logits)))
    print("KERNEL_OK")
</pallas_src>

<mosaic_0001>
module attributes {stable_mosaic.version = 11 : i64} {
  func.func @_vocab_proj_kernel(%arg0: i32, %arg1: i32, %arg2: memref<14x32xf32, #tpu.memory_space<vmem>>, %arg3: memref<32x128xbf16, #tpu.memory_space<vmem>>, %arg4: memref<1x128xf32, #tpu.memory_space<vmem>>, %arg5: memref<14x128xf32, #tpu.memory_space<vmem>>) attributes {dimension_semantics = [#tpu.dimension_semantics<parallel>, #tpu.dimension_semantics<parallel>], iteration_bounds = array<i64: 1, 1>, scalar_prefetch = 0 : i64, scratch_operands = 0 : i64, tpu.core_type = #tpu.core_type<tc>, window_params = [{transform_indices = @transform_0, window_bounds = array<i64: 14, 32>}, {transform_indices = @transform_1, window_bounds = array<i64: 32, 128>}, {transform_indices = @transform_2, window_bounds = array<i64: 1, 128>}, {transform_indices = @transform_3, window_bounds = array<i64: 14, 128>}]} {
    %c0 = arith.constant 0 : index
    %c0_0 = arith.constant 0 : index
    %0 = vector.load %arg2[%c0, %c0_0] : memref<14x32xf32, #tpu.memory_space<vmem>>, vector<14x32xf32>
    %c0_1 = arith.constant 0 : index
    %c0_2 = arith.constant 0 : index
    %1 = vector.load %arg3[%c0_1, %c0_2] : memref<32x128xbf16, #tpu.memory_space<vmem>>, vector<32x128xbf16>
    %2 = arith.truncf %0 : vector<14x32xf32> to vector<14x32xbf16>
    %cst = arith.constant dense<0.000000e+00> : vector<14x128xf32>
    %3 = tpu.matmul %2, %1, %cst {dimension_numbers = #tpu.dot_dimension_numbers<[1], [0], [0], [1], [0, 0, 1, 1], [], []>} : vector<14x32xbf16>, vector<32x128xbf16>, vector<14x128xf32> -> vector<14x128xf32>
    %c0_3 = arith.constant 0 : index
    %c0_4 = arith.constant 0 : index
    %4 = vector.load %arg4[%c0_3, %c0_4] : memref<1x128xf32, #tpu.memory_space<vmem>>, vector<1x128xf32>
    %5 = vector.broadcast %4 : vector<1x128xf32> to vector<14x128xf32>
    %6 = arith.addf %3, %5 : vector<14x128xf32>
    %c0_5 = arith.constant 0 : index
    %c0_6 = arith.constant 0 : index
    %7 = vector.load %arg5[%c0_5, %c0_6] : memref<14x128xf32, #tpu.memory_space<vmem>>, vector<14x128xf32>
    tpu.vector_store %arg5[%c0_5, %c0_6], %6 {strides = array<i32>} : memref<14x128xf32, #tpu.memory_space<vmem>>, vector<14x128xf32>,
    return
  }
  func.func @transform_0(%arg0: i32, %arg1: i32) -> (i32, i32) {
    %c0_i32 = arith.constant 0 : i32
    %c0_i32_0 = arith.constant 0 : i32
    return %arg0, %c0_i32 : i32, i32
  }
  func.func @transform_1(%arg0: i32, %arg1: i32) -> (i32, i32) {
    %c0_i32 = arith.constant 0 : i32
    %c0_i32_0 = arith.constant 0 : i32
    return %c0_i32, %arg1 : i32, i32
  }
  func.func @transform_2(%arg0: i32, %arg1: i32) -> (i32, i32) {
    %c0_i32 = arith.constant 0 : i32
    %c0_i32_0 = arith.constant 0 : i32
    return %c0_i32, %arg1 : i32, i32
  }
  func.func @transform_3(%arg0: i32, %arg1: i32) -> (i32, i32) {
    %c0_i32 = arith.constant 0 : i32
    return %arg0, %arg1 : i32, i32
  }
}

module attributes {stable_mosaic.version = 11 : i64} {
  func.func @_decoder_stack_kernel(%arg0: i32, %arg1: i32, %arg2: memref<2x8x32xf32, #tpu.memory_space<vmem>>, %arg3: memref<2x8x32xf32, #tpu.memory_space<vmem>>, %arg4: memref<1x32x96xbf16, #tpu.memory_space<vmem>>, %arg5: memref<1x32x32xbf16, #tpu.memory_space<vmem>>, %arg6: memref<1x32x32xbf16, #tpu.memory_space<vmem>>, %arg7: memref<1x32x64xbf16, #tpu.memory_space<vmem>>, %arg8: memref<1x32x32xbf16, #tpu.memory_space<vmem>>, %arg9: memref<1x32x64xbf16, #tpu.memory_space<vmem>>, %arg10: memref<1x64x32xbf16, #tpu.memory_space<vmem>>, %arg11: memref<1x13x96xf32, #tpu.memory_space<vmem>>, %arg12: memref<2x8x32xf32, #tpu.memory_space<vmem>>, %arg13: memref<2x8x32xf32, #tpu.memory_space<vmem>>) attributes {dimension_semantics = [#tpu.dimension_semantics<parallel>, #tpu.dimension_semantics<arbitrary>], iteration_bounds = array<i64: 1, 2>, scalar_prefetch = 0 : i64, scratch_operands = 1 : i64, tpu.core_type = #tpu.core_type<tc>, window_params = [{transform_indices = @transform_0, window_bounds = array<i64: 2, 8, 32>}, {transform_indices = @transform_1, window_bounds = array<i64: 2, 8, 32>}, {transform_indices = @transform_2, window_bounds = array<i64: 1, 32, 96>}, {transform_indices = @transform_3, window_bounds = array<i64: 1, 32, 32>}, {transform_indices = @transform_4, window_bounds = array<i64: 1, 32, 32>}, {transform_indices = @transform_5, window_bounds = array<i64: 1, 32, 64>}, {transform_indices = @transform_6, window_bounds = array<i64: 1, 32, 32>}, {transform_indices = @transform_7, window_bounds = array<i64: 1, 32, 64>}, {transform_indices = @transform_8, window_bounds = array<i64: 1, 64, 32>}, {transform_indices = @transform_9, window_bounds = array<i64: 1, 13, 96>}, {transform_indices = @transform_10, window_bounds = array<i64: 2, 8, 32>}]} {
    %c0_i32 = arith.constant 0 : i32
    %0 = arith.cmpi eq, %arg1, %c0_i32 : i32
    %1 = arith.extui %0 : i1 to i32
    %c0_i32_0 = arith.constant 0 : i32
    %2 = arith.cmpi ne, %1, %c0_i32_0 : i32
    scf.if %2 {
      %c0_126 = arith.constant 0 : index
      %c0_127 = arith.constant 0 : index
      %c0_128 = arith.constant 0 : index
      %358 = vector.load %arg2[%c0_126, %c0_127, %c0_128] : memref<2x8x32xf32, #tpu.memory_space<vmem>>, vector<2x8x32xf32>
      %c0_129 = arith.constant 0 : index
      %c0_130 = arith.constant 0 : index
      %c0_131 = arith.constant 0 : index
      %359 = vector.load %arg12[%c0_129, %c0_130, %c0_131] : memref<2x8x32xf32, #tpu.memory_space<vmem>>, vector<2x8x32xf32>
      tpu.vector_store %arg12[%c0_129, %c0_130, %c0_131], %358 {strides = array<i32>} : memref<2x8x32xf32, #tpu.memory_space<vmem>>, vector<2x8x32xf32>,
    } else {
    }
    %c0 = arith.constant 0 : index
    %c0_1 = arith.constant 0 : index
    %c0_2 = arith.constant 0 : index
    %3 = vector.load %arg11[%c0, %c0_1, %c0_2] : memref<1x13x96xf32, #tpu.memory_space<vmem>>, vector<1x13x96xf32>
    %4 = vector.shape_cast %3 : vector<1x13x96xf32> to vector<13x96xf32>
    %c0_3 = arith.constant 0 : index
    %c0_4 = arith.constant 0 : index
    %c0_5 = arith.constant 0 : index
    %5 = vector.load %arg12[%c0_3, %c0_4, %c0_5] : memref<2x8x32xf32, #tpu.memory_space<vmem>>, vector<2x8x32xf32>
    %6 = vector.shape_cast %5 : vector<2x8x32xf32> to vector<16x32xf32>
    %c0_6 = arith.constant 0 : index
    %c0_7 = arith.constant 0 : index
    %c0_8 = arith.constant 0 : index
    %7 = vector.load %arg3[%c0_6, %c0_7, %c0_8] : memref<2x8x32xf32, #tpu.memory_space<vmem>>, vector<2x8x32xf32>
    %8 = vector.shape_cast %7 : vector<2x8x32xf32> to vector<16x32xf32>
    %c0_9 = arith.constant 0 : index
    %c0_10 = arith.constant 0 : index
    %c0_11 = arith.constant 0 : index
    %9 = vector.load %arg4[%c0_9, %c0_10, %c0_11] : memref<1x32x96xbf16, #tpu.memory_space<vmem>>, vector<1x32x96xbf16>
    %10 = vector.shape_cast %9 : vector<1x32x96xbf16> to vector<32x96xbf16>
    %11 = arith.truncf %6 : vector<16x32xf32> to vector<16x32xbf16>
    %cst = arith.constant dense<0.000000e+00> : vector<16x96xf32>
    %12 = tpu.matmul %11, %10, %cst {dimension_numbers = #tpu.dot_dimension_numbers<[1], [0], [0], [1], [0, 0, 1, 1], [], []>} : vector<16x32xbf16>, vector<32x96xbf16>, vector<16x96xf32> -> vector<16x96xf32>
    %13 = vector.extract_strided_slice %4 {offsets = [0, 0], sizes = [1, 96], strides = [1, 1]} : vector<13x96xf32> to vector<1x96xf32>
    %14 = vector.broadcast %13 : vector<1x96xf32> to vector<16x96xf32>
    %15 = arith.addf %12, %14 : vector<16x96xf32>
    %16 = vector.extract_strided_slice %15 {offsets = [0, 0], sizes = [16, 32], strides = [1, 1]} : vector<16x96xf32> to vector<16x32xf32>
    %17 = vector.shape_cast %16 : vector<16x32xf32> to vector<2x8x32xf32>
    %18 = vector.extract_strided_slice %15 {offsets = [0, 32], sizes = [16, 32], strides = [1, 1]} : vector<16x96xf32> to vector<16x32xf32>
    %19 = vector.shape_cast %18 : vector<16x32xf32> to vector<2x8x32xf32>
    %20 = vector.extract_strided_slice %15 {offsets = [0, 64], sizes = [16, 32], strides = [1, 1]} : vector<16x96xf32> to vector<16x32xf32>
    %21 = vector.shape_cast %20 : vector<16x32xf32> to vector<2x8x32xf32>
    %22 = tpu.iota {dimensions = array<i32: 0>} : vector<8x8xi32>
    %23 = tpu.iota {dimensions = array<i32: 1>} : vector<8x8xi32>
    %24 = arith.cmpi sgt, %23, %22 : vector<8x8xi32>
    %cst_12 = arith.constant -1.000000e+30 : f32
    %cst_13 = arith.constant 0.000000e+00 : f32
    %25 = vector.broadcast %cst_12 : f32 to vector<8x8xf32>
    %26 = vector.broadcast %cst_13 : f32 to vector<8x8xf32>
    %27 = arith.select %24, %25, %26 : vector<8x8xi1>, vector<8x8xf32>
    %28 = vector.shape_cast %27 : vector<8x8xf32> to vector<1x8x8xf32>
    %29 = vector.extract_strided_slice %17 {offsets = [0, 0, 0], sizes = [2, 8, 8], strides = [1, 1, 1]} : vector<2x8x32xf32> to vector<2x8x8xf32>
    %cst_14 = arith.constant 0.353553385 : f32
    %30 = vector.broadcast %cst_14 : f32 to vector<2x8x8xf32>
    %31 = arith.mulf %29, %30 : vector<2x8x8xf32>
    %32 = arith.truncf %31 : vector<2x8x8xf32> to vector<2x8x8xbf16>
    %33 = vector.extract_strided_slice %19 {offsets = [0, 0, 0], sizes = [2, 8, 8], strides = [1, 1, 1]} : vector<2x8x32xf32> to vector<2x8x8xf32>
    %34 = arith.truncf %33 : vector<2x8x8xf32> to vector<2x8x8xbf16>
    %35 = vector.extract_strided_slice %21 {offsets = [0, 0, 0], sizes = [2, 8, 8], strides = [1, 1, 1]} : vector<2x8x32xf32> to vector<2x8x8xf32>
    %36 = arith.truncf %35 : vector<2x8x8xf32> to vector<2x8x8xbf16>
    "tpu.trace_start"() <{level = 10 : i32, message = "bqd,bkd->bqk"}> : () -> ()
    %cst_15 = arith.constant dense<0.000000e+00> : vector<2x8x8xf32>
    %37 = tpu.matmul %32, %34, %cst_15 {dimension_numbers = #tpu.dot_dimension_numbers<[2], [2], [1], [1], [0, 0, 0, 1, 1, 1], [0], [0]>} : vector<2x8x8xbf16>, vector<2x8x8xbf16>, vector<2x8x8xf32> -> vector<2x8x8xf32>
    "tpu.trace_stop"() : () -> ()
    %38 = vector.broadcast %28 : vector<1x8x8xf32> to vector<2x8x8xf32>
    %39 = arith.addf %37, %38 : vector<2x8x8xf32>
    %cst_16 = arith.constant dense<0xFF800000> : vector<2x8xf32>
    %40 = vector.multi_reduction <maximumf>, %39, %cst_16 [2] : vector<2x8x8xf32> to vector<2x8xf32>
    %41 = vector.shape_cast %40 : vector<2x8xf32> to vector<2x8x1xf32>
    %42 = vector.broadcast %41 : vector<2x8x1xf32> to vector<2x8x8xf32>
    %43 = arith.subf %39, %42 : vector<2x8x8xf32>
    %44 = math.exp %43 : vector<2x8x8xf32>
    %cst_17 = arith.constant dense<0.000000e+00> : vector<2x8xf32>
    %45 = vector.multi_reduction <add>, %44, %cst_17 [2] : vector<2x8x8xf32> to vector<2x8xf32>
    %46 = vector.shape_cast %45 : vector<2x8xf32> to vector<2x8x1xf32>
    %47 = tpu.reciprocal %46 {approx = true} : vector<2x8x1xf32> -> vector<2x8x1xf32>
    %48 = vector.broadcast %47 : vector<2x8x1xf32> to vector<2x8x8xf32>
    %49 = arith.mulf %44, %48 : vector<2x8x8xf32>
    %50 = arith.truncf %49 : vector<2x8x8xf32> to vector<2x8x8xbf16>
    "tpu.trace_start"() <{level = 10 : i32, message = "bqk,bkd->bqd"}> : () -> ()
    %cst_18 = arith.constant dense<0.000000e+00> : vector<2x8x8xf32>
    %51 = tpu.matmul %50, %36, %cst_18 {dimension_numbers = #tpu.dot_dimension_numbers<[2], [1], [1], [2], [0, 0, 0, 1, 1, 2], [0], [0]>} : vector<2x8x8xbf16>, vector<2x8x8xbf16>, vector<2x8x8xf32> -> vector<2x8x8xf32>
    "tpu.trace_stop"() : () -> ()
    %c0_19 = arith.constant 0 : index
    %c0_20 = arith.constant 0 : index
    %c0_21 = arith.constant 0 : index
    %52 = vector.load %arg13[%c0_19, %c0_20, %c0_21] : memref<2x8x32xf32, #tpu.memory_space<vmem>>, vector<2x8x8xf32>
    tpu.vector_store %arg13[%c0_19, %c0_20, %c0_21], %51 {strides = array<i32>} : memref<2x8x32xf32, #tpu.memory_space<vmem>>, vector<2x8x8xf32>,
    %53 = vector.extract_strided_slice %17 {offsets = [0, 0, 8], sizes = [2, 8, 8], strides = [1, 1, 1]} : vector<2x8x32xf32> to vector<2x8x8xf32>
    %cst_22 = arith.constant 0.353553385 : f32
    %54 = vector.broadcast %cst_22 : f32 to vector<2x8x8xf32>
    %55 = arith.mulf %53, %54 : vector<2x8x8xf32>
    %56 = arith.truncf %55 : vector<2x8x8xf32> to vector<2x8x8xbf16>
    %57 = vector.extract_strided_slice %19 {offsets = [0, 0, 8], sizes = [2, 8, 8], strides = [1, 1, 1]} : vector<2x8x32xf32> to vector<2x8x8xf32>
    %58 = arith.truncf %57 : vector<2x8x8xf32> to vector<2x8x8xbf16>
    %59 = vector.extract_strided_slice %21 {offsets = [0, 0, 8], sizes = [2, 8, 8], strides = [1, 1, 1]} : vector<2x8x32xf32> to vector<2x8x8xf32>
    %60 = arith.truncf %59 : vector<2x8x8xf32> to vector<2x8x8xbf16>
    "tpu.trace_start"() <{level = 10 : i32, message = "bqd,bkd->bqk"}> : () -> ()
    %cst_23 = arith.constant dense<0.000000e+00> : vector<2x8x8xf32>
    %61 = tpu.matmul %56, %58, %cst_23 {dimension_numbers = #tpu.dot_dimension_numbers<[2], [2], [1], [1], [0, 0, 0, 1, 1, 1], [0], [0]>} : vector<2x8x8xbf16>, vector<2x8x8xbf16>, vector<2x8x8xf32> -> vector<2x8x8xf32>
    "tpu.trace_stop"() : () -> ()
    %62 = vector.broadcast %28 : vector<1x8x8xf32> to vector<2x8x8xf32>
    %63 = arith.addf %61, %62 : vector<2x8x8xf32>
    %cst_24 = arith.constant dense<0xFF800000> : vector<2x8xf32>
    %64 = vector.multi_reduction <maximumf>, %63, %cst_24 [2] : vector<2x8x8xf32> to vector<2x8xf32>
    %65 = vector.shape_cast %64 : vector<2x8xf32> to vector<2x8x1xf32>
    %66 = vector.broadcast %65 : vector<2x8x1xf32> to vector<2x8x8xf32>
    %67 = arith.subf %63, %66 : vector<2x8x8xf32>
    %68 = math.exp %67 : vector<2x8x8xf32>
    %cst_25 = arith.constant dense<0.000000e+00> : vector<2x8xf32>
    %69 = vector.multi_reduction <add>, %68, %cst_25 [2] : vector<2x8x8xf32> to vector<2x8xf32>
    %70 = vector.shape_cast %69 : vector<2x8xf32> to vector<2x8x1xf32>
    %71 = tpu.reciprocal %70 {approx = true} : vector<2x8x1xf32> -> vector<2x8x1xf32>
    %72 = vector.broadcast %71 : vector<2x8x1xf32> to vector<2x8x8xf32>
    %73 = arith.mulf %68, %72 : vector<2x8x8xf32>
    %74 = arith.truncf %73 : vector<2x8x8xf32> to vector<2x8x8xbf16>
    "tpu.trace_start"() <{level = 10 : i32, message = "bqk,bkd->bqd"}> : () -> ()
    %cst_26 = arith.constant dense<0.000000e+00> : vector<2x8x8xf32>
    %75 = tpu.matmul %74, %60, %cst_26 {dimension_numbers = #tpu.dot_dimension_numbers<[2], [1], [1], [2], [0, 0, 0, 1, 1, 2], [0], [0]>} : vector<2x8x8xbf16>, vector<2x8x8xbf16>, vector<2x8x8xf32> -> vector<2x8x8xf32>
    "tpu.trace_stop"() : () -> ()
    %c0_27 = arith.constant 0 : index
    %c0_28 = arith.constant 0 : index
    %c8 = arith.constant 8 : index
    %76 = vector.load %arg13[%c0_27, %c0_28, %c8] : memref<2x8x32xf32, #tpu.memory_space<vmem>>, vector<2x8x8xf32>
    tpu.vector_store %arg13[%c0_27, %c0_28, %c8], %75 {strides = array<i32>} : memref<2x8x32xf32, #tpu.memory_space<vmem>>, vector<2x8x8xf32>,
    %77 = vector.extract_strided_slice %17 {offsets = [0, 0, 16], sizes = [2, 8, 8], strides = [1, 1, 1]} : vector<2x8x32xf32> to vector<2x8x8xf32>
    %cst_29 = arith.constant 0.353553385 : f32
    %78 = vector.broadcast %cst_29 : f32 to vector<2x8x8xf32>
    %79 = arith.mulf %77, %78 : vector<2x8x8xf32>
    %80 = arith.truncf %79 : vector<2x8x8xf32> to vector<2x8x8xbf16>
    %81 = vector.extract_strided_slice %19 {offsets = [0, 0, 16], sizes = [2, 8, 8], strides = [1, 1, 1]} : vector<2x8x32xf32> to vector<2x8x8xf32>
    %82 = arith.truncf %81 : vector<2x8x8xf32> to vector<2x8x8xbf16>
    %83 = vector.extract_strided_slice %21 {offsets = [0, 0, 16], sizes = [2, 8, 8], strides = [1, 1, 1]} : vector<2x8x32xf32> to vector<2x8x8xf32>
    %84 = arith.truncf %83 : vector<2x8x8xf32> to vector<2x8x8xbf16>
    "tpu.trace_start"() <{level = 10 : i32, message = "bqd,bkd->bqk"}> : () -> ()
    %cst_30 = arith.constant dense<0.000000e+00> : vector<2x8x8xf32>
    %85 = tpu.matmul %80, %82, %cst_30 {dimension_numbers = #tpu.dot_dimension_numbers<[2], [2], [1], [1], [0, 0, 0, 1, 1, 1], [0], [0]>} : vector<2x8x8xbf16>, vector<2x8x8xbf16>, vector<2x8x8xf32> -> vector<2x8x8xf32>
    "tpu.trace_stop"() : () -> ()
    %86 = vector.broadcast %28 : vector<1x8x8xf32> to vector<2x8x8xf32>
    %87 = arith.addf %85, %86 : vector<2x8x8xf32>
    %cst_31 = arith.constant dense<0xFF800000> : vector<2x8xf32>
    %88 = vector.multi_reduction <maximumf>, %87, %cst_31 [2] : vector<2x8x8xf32> to vector<2x8xf32>
    %89 = vector.shape_cast %88 : vector<2x8xf32> to vector<2x8x1xf32>
    %90 = vector.broadcast %89 : vector<2x8x1xf32> to vector<2x8x8xf32>
    %91 = arith.subf %87, %90 : vector<2x8x8xf32>
    %92 = math.exp %91 : vector<2x8x8xf32>
    %cst_32 = arith.constant dense<0.000000e+00> : vector<2x8xf32>
    %93 = vector.multi_reduction <add>, %92, %cst_32 [2] : vector<2x8x8xf32> to vector<2x8xf32>
    %94 = vector.shape_cast %93 : vector<2x8xf32> to vector<2x8x1xf32>
    %95 = tpu.reciprocal %94 {approx = true} : vector<2x8x1xf32> -> vector<2x8x1xf32>
    %96 = vector.broadcast %95 : vector<2x8x1xf32> to vector<2x8x8xf32>
    %97 = arith.mulf %92, %96 : vector<2x8x8xf32>
    %98 = arith.truncf %97 : vector<2x8x8xf32> to vector<2x8x8xbf16>
    "tpu.trace_start"() <{level = 10 : i32, message = "bqk,bkd->bqd"}> : () -> ()
    %cst_33 = arith.constant dense<0.000000e+00> : vector<2x8x8xf32>
    %99 = tpu.matmul %98, %84, %cst_33 {dimension_numbers = #tpu.dot_dimension_numbers<[2], [1], [1], [2], [0, 0, 0, 1, 1, 2], [0], [0]>} : vector<2x8x8xbf16>, vector<2x8x8xbf16>, vector<2x8x8xf32> -> vector<2x8x8xf32>
    "tpu.trace_stop"() : () -> ()
    %c0_34 = arith.constant 0 : index
    %c0_35 = arith.constant 0 : index
    %c16 = arith.constant 16 : index
    %100 = vector.load %arg13[%c0_34, %c0_35, %c16] : memref<2x8x32xf32, #tpu.memory_space<vmem>>, vector<2x8x8xf32>
    tpu.vector_store %arg13[%c0_34, %c0_35, %c16], %99 {strides = array<i32>} : memref<2x8x32xf32, #tpu.memory_space<vmem>>, vector<2x8x8xf32>,
    %101 = vector.extract_strided_slice %17 {offsets = [0, 0, 24], sizes = [2, 8, 8], strides = [1, 1, 1]} : vector<2x8x32xf32> to vector<2x8x8xf32>
    %cst_36 = arith.constant 0.353553385 : f32
    %102 = vector.broadcast %cst_36 : f32 to vector<2x8x8xf32>
    %103 = arith.mulf %101, %102 : vector<2x8x8xf32>
    %104 = arith.truncf %103 : vector<2x8x8xf32> to vector<2x8x8xbf16>
    %105 = vector.extract_strided_slice %19 {offsets = [0, 0, 24], sizes = [2, 8, 8], strides = [1, 1, 1]} : vector<2x8x32xf32> to vector<2x8x8xf32>
    %106 = arith.truncf %105 : vector<2x8x8xf32> to vector<2x8x8xbf16>
    %107 = vector.extract_strided_slice %21 {offsets = [0, 0, 24], sizes = [2, 8, 8], strides = [1, 1, 1]} : vector<2x8x32xf32> to vector<2x8x8xf32>
    %108 = arith.truncf %107 : vector<2x8x8xf32> to vector<2x8x8xbf16>
    "tpu.trace_start"() <{level = 10 : i32, message = "bqd,bkd->bqk"}> : () -> ()
    %cst_37 = arith.constant dense<0.000000e+00> : vector<2x8x8xf32>
    %109 = tpu.matmul %104, %106, %cst_37 {dimension_numbers = #tpu.dot_dimension_numbers<[2], [2], [1], [1], [0, 0, 0, 1, 1, 1], [0], [0]>} : vector<2x8x8xbf16>, vector<2x8x8xbf16>, vector<2x8x8xf32> -> vector<2x8x8xf32>
    "tpu.trace_stop"() : () -> ()
    %110 = vector.broadcast %28 : vector<1x8x8xf32> to vector<2x8x8xf32>
    %111 = arith.addf %109, %110 : vector<2x8x8xf32>
    %cst_38 = arith.constant dense<0xFF800000> : vector<2x8xf32>
    %112 = vector.multi_reduction <maximumf>, %111, %cst_38 [2] : vector<2x8x8xf32> to vector<2x8xf32>
    %113 = vector.shape_cast %112 : vector<2x8xf32> to vector<2x8x1xf32>
    %114 = vector.broadcast %113 : vector<2x8x1xf32> to vector<2x8x8xf32>
    %115 = arith.subf %111, %114 : vector<2x8x8xf32>
    %116 = math.exp %115 : vector<2x8x8xf32>
    %cst_39 = arith.constant dense<0.000000e+00> : vector<2x8xf32>
    %117 = vector.multi_reduction <add>, %116, %cst_39 [2] : vector<2x8x8xf32> to vector<2x8xf32>
    %118 = vector.shape_cast %117 : vector<2x8xf32> to vector<2x8x1xf32>
    %119 = tpu.reciprocal %118 {approx = true} : vector<2x8x1xf32> -> vector<2x8x1xf32>
    %120 = vector.broadcast %119 : vector<2x8x1xf32> to vector<2x8x8xf32>
    %121 = arith.mulf %116, %120 : vector<2x8x8xf32>
    %122 = arith.truncf %121 : vector<2x8x8xf32> to vector<2x8x8xbf16>
    "tpu.trace_start"() <{level = 10 : i32, message = "bqk,bkd->bqd"}> : () -> ()
    %cst_40 = arith.constant dense<0.000000e+00> : vector<2x8x8xf32>
    %123 = tpu.matmul %122, %108, %cst_40 {dimension_numbers = #tpu.dot_dimension_numbers<[2], [1], [1], [2], [0, 0, 0, 1, 1, 2], [0], [0]>} : vector<2x8x8xbf16>, vector<2x8x8xbf16>, vector<2x8x8xf32> -> vector<2x8x8xf32>
    "tpu.trace_stop"() : () -> ()
    %c0_41 = arith.constant 0 : index
    %c0_42 = arith.constant 0 : index
    %c24 = arith.constant 24 : index
    %124 = vector.load %arg13[%c0_41, %c0_42, %c24] : memref<2x8x32xf32, #tpu.memory_space<vmem>>, vector<2x8x8xf32>
    tpu.vector_store %arg13[%c0_41, %c0_42, %c24], %123 {strides = array<i32>} : memref<2x8x32xf32, #tpu.memory_space<vmem>>, vector<2x8x8xf32>,
    %c0_43 = arith.constant 0 : index
    %c0_44 = arith.constant 0 : index
    %c0_45 = arith.constant 0 : index
    %125 = vector.load %arg13[%c0_43, %c0_44, %c0_45] : memref<2x8x32xf32, #tpu.memory_space<vmem>>, vector<2x8x32xf32>
    %126 = vector.shape_cast %125 : vector<2x8x32xf32> to vector<16x32xf32>
    %c0_46 = arith.constant 0 : index
    %c0_47 = arith.constant 0 : index
    %c0_48 = arith.constant 0 : index
    %127 = vector.load %arg5[%c0_46, %c0_47, %c0_48] : memref<1x32x32xbf16, #tpu.memory_space<vmem>>, vector<1x32x32xbf16>
    %128 = vector.shape_cast %127 : vector<1x32x32xbf16> to vector<32x32xbf16>
    %129 = arith.truncf %126 : vector<16x32xf32> to vector<16x32xbf16>
    %cst_49 = arith.constant dense<0.000000e+00> : vector<16x32xf32>
    %130 = tpu.matmul %129, %128, %cst_49 {dimension_numbers = #tpu.dot_dimension_numbers<[1], [0], [0], [1], [0, 0, 1, 1], [], []>} : vector<16x32xbf16>, vector<32x32xbf16>, vector<16x32xf32> -> vector<16x32xf32>
    %131 = vector.extract_strided_slice %4 {offsets = [1, 0], sizes = [1, 32], strides = [1, 1]} : vector<13x96xf32> to vector<1x32xf32>
    %132 = vector.broadcast %131 : vector<1x32xf32> to vector<16x32xf32>
    %133 = arith.addf %130, %132 : vector<16x32xf32>
    %134 = vector.extract_strided_slice %4 {offsets = [7, 0], sizes = [1, 32], strides = [1, 1]} : vector<13x96xf32> to vector<1x32xf32>
    %135 = vector.extract_strided_slice %4 {offsets = [8, 0], sizes = [1, 32], strides = [1, 1]} : vector<13x96xf32> to vector<1x32xf32>
    %136 = arith.addf %6, %133 : vector<16x32xf32>
    %cst_50 = arith.constant dense<0.000000e+00> : vector<16xf32>
    %137 = vector.multi_reduction <add>, %136, %cst_50 [1] : vector<16x32xf32> to vector<16xf32>
    %138 = vector.shape_cast %137 : vector<16xf32> to vector<16x1xf32>
    %cst_51 = arith.constant 3.200000e+01 : f32
    %139 = vector.broadcast %cst_51 : f32 to vector<16x1xf32>
    %140 = arith.divf %138, %139 : vector<16x1xf32>
    %141 = vector.broadcast %140 : vector<16x1xf32> to vector<16x32xf32>
    %142 = arith.subf %136, %141 : vector<16x32xf32>
    %143 = arith.mulf %142, %142 : vector<16x32xf32>
    %cst_52 = arith.constant dense<0.000000e+00> : vector<16xf32>
    %144 = vector.multi_reduction <add>, %143, %cst_52 [1] : vector<16x32xf32> to vector<16xf32>
    %145 = vector.shape_cast %144 : vector<16xf32> to vector<16x1xf32>
    %cst_53 = arith.constant 3.200000e+01 : f32
    %146 = vector.broadcast %cst_53 : f32 to vector<16x1xf32>
    %147 = arith.divf %145, %146 : vector<16x1xf32>
    %148 = vector.broadcast %140 : vector<16x1xf32> to vector<16x32xf32>
    %149 = arith.subf %136, %148 : vector<16x32xf32>
    %cst_54 = arith.constant 9.99999974E-6 : f32
    %150 = vector.broadcast %cst_54 : f32 to vector<16x1xf32>
    %151 = arith.addf %147, %150 : vector<16x1xf32>
    %152 = math.rsqrt %151 : vector<16x1xf32>
    %153 = vector.broadcast %152 : vector<16x1xf32> to vector<16x32xf32>
    %154 = arith.mulf %149, %153 : vector<16x32xf32>
    %155 = vector.broadcast %134 : vector<1x32xf32> to vector<16x32xf32>
    %156 = arith.mulf %154, %155 : vector<16x32xf32>
    %157 = vector.broadcast %135 : vector<1x32xf32> to vector<16x32xf32>
    %158 = arith.addf %156, %157 : vector<16x32xf32>
    %c0_55 = arith.constant 0 : index
    %c0_56 = arith.constant 0 : index
    %c0_57 = arith.constant 0 : index
    %159 = vector.load %arg6[%c0_55, %c0_56, %c0_57] : memref<1x32x32xbf16, #tpu.memory_space<vmem>>, vector<1x32x32xbf16>
    %160 = vector.shape_cast %159 : vector<1x32x32xbf16> to vector<32x32xbf16>
    %161 = arith.truncf %158 : vector<16x32xf32> to vector<16x32xbf16>
    %cst_58 = arith.constant dense<0.000000e+00> : vector<16x32xf32>
    %162 = tpu.matmul %161, %160, %cst_58 {dimension_numbers = #tpu.dot_dimension_numbers<[1], [0], [0], [1], [0, 0, 1, 1], [], []>} : vector<16x32xbf16>, vector<32x32xbf16>, vector<16x32xf32> -> vector<16x32xf32>
    %163 = vector.extract_strided_slice %4 {offsets = [2, 0], sizes = [1, 32], strides = [1, 1]} : vector<13x96xf32> to vector<1x32xf32>
    %164 = vector.broadcast %163 : vector<1x32xf32> to vector<16x32xf32>
    %165 = arith.addf %162, %164 : vector<16x32xf32>
    %166 = vector.shape_cast %165 : vector<16x32xf32> to vector<2x8x32xf32>
    %c0_59 = arith.constant 0 : index
    %c0_60 = arith.constant 0 : index
    %c0_61 = arith.constant 0 : index
    %167 = vector.load %arg7[%c0_59, %c0_60, %c0_61] : memref<1x32x64xbf16, #tpu.memory_space<vmem>>, vector<1x32x64xbf16>
    %168 = vector.shape_cast %167 : vector<1x32x64xbf16> to vector<32x64xbf16>
    %169 = arith.truncf %8 : vector<16x32xf32> to vector<16x32xbf16>
    %cst_62 = arith.constant dense<0.000000e+00> : vector<16x64xf32>
    %170 = tpu.matmul %169, %168, %cst_62 {dimension_numbers = #tpu.dot_dimension_numbers<[1], [0], [0], [1], [0, 0, 1, 1], [], []>} : vector<16x32xbf16>, vector<32x64xbf16>, vector<16x64xf32> -> vector<16x64xf32>
    %171 = vector.extract_strided_slice %4 {offsets = [3, 0], sizes = [1, 64], strides = [1, 1]} : vector<13x96xf32> to vector<1x64xf32>
    %172 = vector.broadcast %171 : vector<1x64xf32> to vector<16x64xf32>
    %173 = arith.addf %170, %172 : vector<16x64xf32>
    %174 = vector.extract_strided_slice %173 {offsets = [0, 0], sizes = [16, 32], strides = [1, 1]} : vector<16x64xf32> to vector<16x32xf32>
    %175 = vector.shape_cast %174 : vector<16x32xf32> to vector<2x8x32xf32>
    %176 = vector.extract_strided_slice %173 {offsets = [0, 32], sizes = [16, 32], strides = [1, 1]} : vector<16x64xf32> to vector<16x32xf32>
    %177 = vector.shape_cast %176 : vector<16x32xf32> to vector<2x8x32xf32>
    %178 = tpu.iota {dimensions = array<i32: 1>} : vector<8x8xi32>
    %c6_i32 = arith.constant 6 : i32
    %179 = vector.broadcast %c6_i32 : i32 to vector<8x8xi32>
    %180 = arith.cmpi sge, %178, %179 : vector<8x8xi32>
    %cst_63 = arith.constant -1.000000e+30 : f32
    %cst_64 = arith.constant 0.000000e+00 : f32
    %181 = vector.broadcast %cst_63 : f32 to vector<8x8xf32>
    %182 = vector.broadcast %cst_64 : f32 to vector<8x8xf32>
    %183 = arith.select %180, %181, %182 : vector<8x8xi1>, vector<8x8xf32>
    %184 = vector.shape_cast %183 : vector<8x8xf32> to vector<1x8x8xf32>
    %185 = vector.extract_strided_slice %166 {offsets = [0, 0, 0], sizes = [2, 8, 8], strides = [1, 1, 1]} : vector<2x8x32xf32> to vector<2x8x8xf32>
    %cst_65 = arith.constant 0.353553385 : f32
    %186 = vector.broadcast %cst_65 : f32 to vector<2x8x8xf32>
    %187 = arith.mulf %185, %186 : vector<2x8x8xf32>
    %188 = arith.truncf %187 : vector<2x8x8xf32> to vector<2x8x8xbf16>
    %189 = vector.extract_strided_slice %175 {offsets = [0, 0, 0], sizes = [2, 8, 8], strides = [1, 1, 1]} : vector<2x8x32xf32> to vector<2x8x8xf32>
    %190 = arith.truncf %189 : vector<2x8x8xf32> to vector<2x8x8xbf16>
    %191 = vector.extract_strided_slice %177 {offsets = [0, 0, 0], sizes = [2, 8, 8], strides = [1, 1, 1]} : vector<2x8x32xf32> to vector<2x8x8xf32>
    %192 = arith.truncf %191 : vector<2x8x8xf32> to vector<2x8x8xbf16>
    "tpu.trace_start"() <{level = 10 : i32, message = "bqd,bkd->bqk"}> : () -> ()
    %cst_66 = arith.constant dense<0.000000e+00> : vector<2x8x8xf32>
    %193 = tpu.matmul %188, %190, %cst_66 {dimension_numbers = #tpu.dot_dimension_numbers<[2], [2], [1], [1], [0, 0, 0, 1, 1, 1], [0], [0]>} : vector<2x8x8xbf16>, vector<2x8x8xbf16>, vector<2x8x8xf32> -> vector<2x8x8xf32>
    "tpu.trace_stop"() : () -> ()
    %194 = vector.broadcast %184 : vector<1x8x8xf32> to vector<2x8x8xf32>
    %195 = arith.addf %193, %194 : vector<2x8x8xf32>
    %cst_67 = arith.constant dense<0xFF800000> : vector<2x8xf32>
    %196 = vector.multi_reduction <maximumf>, %195, %cst_67 [2] : vector<2x8x8xf32> to vector<2x8xf32>
    %197 = vector.shape_cast %196 : vector<2x8xf32> to vector<2x8x1xf32>
    %198 = vector.broadcast %197 : vector<2x8x1xf32> to vector<2x8x8xf32>
    %199 = arith.subf %195, %198 : vector<2x8x8xf32>
    %200 = math.exp %199 : vector<2x8x8xf32>
    %cst_68 = arith.constant dense<0.000000e+00> : vector<2x8xf32>
    %201 = vector.multi_reduction <add>, %200, %cst_68 [2] : vector<2x8x8xf32> to vector<2x8xf32>
    %202 = vector.shape_cast %201 : vector<2x8xf32> to vector<2x8x1xf32>
    %203 = tpu.reciprocal %202 {approx = true} : vector<2x8x1xf32> -> vector<2x8x1xf32>
    %204 = vector.broadcast %203 : vector<2x8x1xf32> to vector<2x8x8xf32>
    %205 = arith.mulf %200, %204 : vector<2x8x8xf32>
    %206 = arith.truncf %205 : vector<2x8x8xf32> to vector<2x8x8xbf16>
    "tpu.trace_start"() <{level = 10 : i32, message = "bqk,bkd->bqd"}> : () -> ()
    %cst_69 = arith.constant dense<0.000000e+00> : vector<2x8x8xf32>
    %207 = tpu.matmul %206, %192, %cst_69 {dimension_numbers = #tpu.dot_dimension_numbers<[2], [1], [1], [2], [0, 0, 0, 1, 1, 2], [0], [0]>} : vector<2x8x8xbf16>, vector<2x8x8xbf16>, vector<2x8x8xf32> -> vector<2x8x8xf32>
    "tpu.trace_stop"() : () -> ()
    %c0_70 = arith.constant 0 : index
    %c0_71 = arith.constant 0 : index
    %c0_72 = arith.constant 0 : index
    %208 = vector.load %arg13[%c0_70, %c0_71, %c0_72] : memref<2x8x32xf32, #tpu.memory_space<vmem>>, vector<2x8x8xf32>
    tpu.vector_store %arg13[%c0_70, %c0_71, %c0_72], %207 {strides = array<i32>} : memref<2x8x32xf32, #tpu.memory_space<vmem>>, vector<2x8x8xf32>,
    %209 = vector.extract_strided_slice %166 {offsets = [0, 0, 8], sizes = [2, 8, 8], strides = [1, 1, 1]} : vector<2x8x32xf32> to vector<2x8x8xf32>
    %cst_73 = arith.constant 0.353553385 : f32
    %210 = vector.broadcast %cst_73 : f32 to vector<2x8x8xf32>
    %211 = arith.mulf %209, %210 : vector<2x8x8xf32>
    %212 = arith.truncf %211 : vector<2x8x8xf32> to vector<2x8x8xbf16>
    %213 = vector.extract_strided_slice %175 {offsets = [0, 0, 8], sizes = [2, 8, 8], strides = [1, 1, 1]} : vector<2x8x32xf32> to vector<2x8x8xf32>
    %214 = arith.truncf %213 : vector<2x8x8xf32> to vector<2x8x8xbf16>
    %215 = vector.extract_strided_slice %177 {offsets = [0, 0, 8], sizes = [2, 8, 8], strides = [1, 1, 1]} : vector<2x8x32xf32> to vector<2x8x8xf32>
    %216 = arith.truncf %215 : vector<2x8x8xf32> to vector<2x8x8xbf16>
    "tpu.trace_start"() <{level = 10 : i32, message = "bqd,bkd->bqk"}> : () -> ()
    %cst_74 = arith.constant dense<0.000000e+00> : vector<2x8x8xf32>
    %217 = tpu.matmul %212, %214, %cst_74 {dimension_numbers = #tpu.dot_dimension_numbers<[2], [2], [1], [1], [0, 0, 0, 1, 1, 1], [0], [0]>} : vector<2x8x8xbf16>, vector<2x8x8xbf16>, vector<2x8x8xf32> -> vector<2x8x8xf32>
    "tpu.trace_stop"() : () -> ()
    %218 = vector.broadcast %184 : vector<1x8x8xf32> to vector<2x8x8xf32>
    %219 = arith.addf %217, %218 : vector<2x8x8xf32>
    %cst_75 = arith.constant dense<0xFF800000> : vector<2x8xf32>
    %220 = vector.multi_reduction <maximumf>, %219, %cst_75 [2] : vector<2x8x8xf32> to vector<2x8xf32>
    %221 = vector.shape_cast %220 : vector<2x8xf32> to vector<2x8x1xf32>
    %222 = vector.broadcast %221 : vector<2x8x1xf32> to vector<2x8x8xf32>
    %223 = arith.subf %219, %222 : vector<2x8x8xf32>
    %224 = math.exp %223 : vector<2x8x8xf32>
    %cst_76 = arith.constant dense<0.000000e+00> : vector<2x8xf32>
    %225 = vector.multi_reduction <add>, %224, %cst_76 [2] : vector<2x8x8xf32> to vector<2x8xf32>
    %226 = vector.shape_cast %225 : vector<2x8xf32> to vector<2x8x1xf32>
    %227 = tpu.reciprocal %226 {approx = true} : vector<2x8x1xf32> -> vector<2x8x1xf32>
    %228 = vector.broadcast %227 : vector<2x8x1xf32> to vector<2x8x8xf32>
    %229 = arith.mulf %224, %228 : vector<2x8x8xf32>
    %230 = arith.truncf %229 : vector<2x8x8xf32> to vector<2x8x8xbf16>
    "tpu.trace_start"() <{level = 10 : i32, message = "bqk,bkd->bqd"}> : () -> ()
    %cst_77 = arith.constant dense<0.000000e+00> : vector<2x8x8xf32>
    %231 = tpu.matmul %230, %216, %cst_77 {dimension_numbers = #tpu.dot_dimension_numbers<[2], [1], [1], [2], [0, 0, 0, 1, 1, 2], [0], [0]>} : vector<2x8x8xbf16>, vector<2x8x8xbf16>, vector<2x8x8xf32> -> vector<2x8x8xf32>
    "tpu.trace_stop"() : () -> ()
    %c0_78 = arith.constant 0 : index
    %c0_79 = arith.constant 0 : index
    %c8_80 = arith.constant 8 : index
    %232 = vector.load %arg13[%c0_78, %c0_79, %c8_80] : memref<2x8x32xf32, #tpu.memory_space<vmem>>, vector<2x8x8xf32>
    tpu.vector_store %arg13[%c0_78, %c0_79, %c8_80], %231 {strides = array<i32>} : memref<2x8x32xf32, #tpu.memory_space<vmem>>, vector<2x8x8xf32>,
    %233 = vector.extract_strided_slice %166 {offsets = [0, 0, 16], sizes = [2, 8, 8], strides = [1, 1, 1]} : vector<2x8x32xf32> to vector<2x8x8xf32>
    %cst_81 = arith.constant 0.353553385 : f32
    %234 = vector.broadcast %cst_81 : f32 to vector<2x8x8xf32>
    %235 = arith.mulf %233, %234 : vector<2x8x8xf32>
    %236 = arith.truncf %235 : vector<2x8x8xf32> to vector<2x8x8xbf16>
    %237 = vector.extract_strided_slice %175 {offsets = [0, 0, 16], sizes = [2, 8, 8], strides = [1, 1, 1]} : vector<2x8x32xf32> to vector<2x8x8xf32>
    %238 = arith.truncf %237 : vector<2x8x8xf32> to vector<2x8x8xbf16>
    %239 = vector.extract_strided_slice %177 {offsets = [0, 0, 16], sizes = [2, 8, 8], strides = [1, 1, 1]} : vector<2x8x32xf32> to vector<2x8x8xf32>
    %240 = arith.truncf %239 : vector<2x8x8xf32> to vector<2x8x8xbf16>
    "tpu.trace_start"() <{level = 10 : i32, message = "bqd,bkd->bqk"}> : () -> ()
    %cst_82 = arith.constant dense<0.000000e+00> : vector<2x8x8xf32>
    %241 = tpu.matmul %236, %238, %cst_82 {dimension_numbers = #tpu.dot_dimension_numbers<[2], [2], [1], [1], [0, 0, 0, 1, 1, 1], [0], [0]>} : vector<2x8x8xbf16>, vector<2x8x8xbf16>, vector<2x8x8xf32> -> vector<2x8x8xf32>
    "tpu.trace_stop"() : () -> ()
    %242 = vector.broadcast %184 : vector<1x8x8xf32> to vector<2x8x8xf32>
    %243 = arith.addf %241, %242 : vector<2x8x8xf32>
    %cst_83 = arith.constant dense<0xFF800000> : vector<2x8xf32>
    %244 = vector.multi_reduction <maximumf>, %243, %cst_83 [2] : vector<2x8x8xf32> to vector<2x8xf32>
    %245 = vector.shape_cast %244 : vector<2x8xf32> to vector<2x8x1xf32>
    %246 = vector.broadcast %245 : vector<2x8x1xf32> to vector<2x8x8xf32>
    %247 = arith.subf %243, %246 : vector<2x8x8xf32>
    %248 = math.exp %247 : vector<2x8x8xf32>
    %cst_84 = arith.constant dense<0.000000e+00> : vector<2x8xf32>
    %249 = vector.multi_reduction <add>, %248, %cst_84 [2] : vector<2x8x8xf32> to vector<2x8xf32>
    %250 = vector.shape_cast %249 : vector<2x8xf32> to vector<2x8x1xf32>
    %251 = tpu.reciprocal %250 {approx = true} : vector<2x8x1xf32> -> vector<2x8x1xf32>
    %252 = vector.broadcast %251 : vector<2x8x1xf32> to vector<2x8x8xf32>
    %253 = arith.mulf %248, %252 : vector<2x8x8xf32>
    %254 = arith.truncf %253 : vector<2x8x8xf32> to vector<2x8x8xbf16>
    "tpu.trace_start"() <{level = 10 : i32, message = "bqk,bkd->bqd"}> : () -> ()
    %cst_85 = arith.constant dense<0.000000e+00> : vector<2x8x8xf32>
    %255 = tpu.matmul %254, %240, %cst_85 {dimension_numbers = #tpu.dot_dimension_numbers<[2], [1], [1], [2], [0, 0, 0, 1, 1, 2], [0], [0]>} : vector<2x8x8xbf16>, vector<2x8x8xbf16>, vector<2x8x8xf32> -> vector<2x8x8xf32>
    "tpu.trace_stop"() : () -> ()
    %c0_86 = arith.constant 0 : index
    %c0_87 = arith.constant 0 : index
    %c16_88 = arith.constant 16 : index
    %256 = vector.load %arg13[%c0_86, %c0_87, %c16_88] : memref<2x8x32xf32, #tpu.memory_space<vmem>>, vector<2x8x8xf32>
    tpu.vector_store %arg13[%c0_86, %c0_87, %c16_88], %255 {strides = array<i32>} : memref<2x8x32xf32, #tpu.memory_space<vmem>>, vector<2x8x8xf32>,
    %257 = vector.extract_strided_slice %166 {offsets = [0, 0, 24], sizes = [2, 8, 8], strides = [1, 1, 1]} : vector<2x8x32xf32> to vector<2x8x8xf32>
    %cst_89 = arith.constant 0.353553385 : f32
    %258 = vector.broadcast %cst_89 : f32 to vector<2x8x8xf32>
    %259 = arith.mulf %257, %258 : vector<2x8x8xf32>
    %260 = arith.truncf %259 : vector<2x8x8xf32> to vector<2x8x8xbf16>
    %261 = vector.extract_strided_slice %175 {offsets = [0, 0, 24], sizes = [2, 8, 8], strides = [1, 1, 1]} : vector<2x8x32xf32> to vector<2x8x8xf32>
    %262 = arith.truncf %261 : vector<2x8x8xf32> to vector<2x8x8xbf16>
    %263 = vector.extract_strided_slice %177 {offsets = [0, 0, 24], sizes = [2, 8, 8], strides = [1, 1, 1]} : vector<2x8x32xf32> to vector<2x8x8xf32>
    %264 = arith.truncf %263 : vector<2x8x8xf32> to vector<2x8x8xbf16>
    "tpu.trace_start"() <{level = 10 : i32, message = "bqd,bkd->bqk"}> : () -> ()
    %cst_90 = arith.constant dense<0.000000e+00> : vector<2x8x8xf32>
    %265 = tpu.matmul %260, %262, %cst_90 {dimension_numbers = #tpu.dot_dimension_numbers<[2], [2], [1], [1], [0, 0, 0, 1, 1, 1], [0], [0]>} : vector<2x8x8xbf16>, vector<2x8x8xbf16>, vector<2x8x8xf32> -> vector<2x8x8xf32>
    "tpu.trace_stop"() : () -> ()
    %266 = vector.broadcast %184 : vector<1x8x8xf32> to vector<2x8x8xf32>
    %267 = arith.addf %265, %266 : vector<2x8x8xf32>
    %cst_91 = arith.constant dense<0xFF800000> : vector<2x8xf32>
    %268 = vector.multi_reduction <maximumf>, %267, %cst_91 [2] : vector<2x8x8xf32> to vector<2x8xf32>
    %269 = vector.shape_cast %268 : vector<2x8xf32> to vector<2x8x1xf32>
    %270 = vector.broadcast %269 : vector<2x8x1xf32> to vector<2x8x8xf32>
    %271 = arith.subf %267, %270 : vector<2x8x8xf32>
    %272 = math.exp %271 : vector<2x8x8xf32>
    %cst_92 = arith.constant dense<0.000000e+00> : vector<2x8xf32>
    %273 = vector.multi_reduction <add>, %272, %cst_92 [2] : vector<2x8x8xf32> to vector<2x8xf32>
    %274 = vector.shape_cast %273 : vector<2x8xf32> to vector<2x8x1xf32>
    %275 = tpu.reciprocal %274 {approx = true} : vector<2x8x1xf32> -> vector<2x8x1xf32>
    %276 = vector.broadcast %275 : vector<2x8x1xf32> to vector<2x8x8xf32>
    %277 = arith.mulf %272, %276 : vector<2x8x8xf32>
    %278 = arith.truncf %277 : vector<2x8x8xf32> to vector<2x8x8xbf16>
    "tpu.trace_start"() <{level = 10 : i32, message = "bqk,bkd->bqd"}> : () -> ()
    %cst_93 = arith.constant dense<0.000000e+00> : vector<2x8x8xf32>
    %279 = tpu.matmul %278, %264, %cst_93 {dimension_numbers = #tpu.dot_dimension_numbers<[2], [1], [1], [2], [0, 0, 0, 1, 1, 2], [0], [0]>} : vector<2x8x8xbf16>, vector<2x8x8xbf16>, vector<2x8x8xf32> -> vector<2x8x8xf32>
    "tpu.trace_stop"() : () -> ()
    %c0_94 = arith.constant 0 : index
    %c0_95 = arith.constant 0 : index
    %c24_96 = arith.constant 24 : index
    %280 = vector.load %arg13[%c0_94, %c0_95, %c24_96] : memref<2x8x32xf32, #tpu.memory_space<vmem>>, vector<2x8x8xf32>
    tpu.vector_store %arg13[%c0_94, %c0_95, %c24_96], %279 {strides = array<i32>} : memref<2x8x32xf32, #tpu.memory_space<vmem>>, vector<2x8x8xf32>,
    %c0_97 = arith.constant 0 : index
    %c0_98 = arith.constant 0 : index
    %c0_99 = arith.constant 0 : index
    %281 = vector.load %arg13[%c0_97, %c0_98, %c0_99] : memref<2x8x32xf32, #tpu.memory_space<vmem>>, vector<2x8x32xf32>
    %282 = vector.shape_cast %281 : vector<2x8x32xf32> to vector<16x32xf32>
    %c0_100 = arith.constant 0 : index
    %c0_101 = arith.constant 0 : index
    %c0_102 = arith.constant 0 : index
    %283 = vector.load %arg8[%c0_100, %c0_101, %c0_102] : memref<1x32x32xbf16, #tpu.memory_space<vmem>>, vector<1x32x32xbf16>
    %284 = vector.shape_cast %283 : vector<1x32x32xbf16> to vector<32x32xbf16>
    %285 = arith.truncf %282 : vector<16x32xf32> to vector<16x32xbf16>
    %cst_103 = arith.constant dense<0.000000e+00> : vector<16x32xf32>
    %286 = tpu.matmul %285, %284, %cst_103 {dimension_numbers = #tpu.dot_dimension_numbers<[1], [0], [0], [1], [0, 0, 1, 1], [], []>} : vector<16x32xbf16>, vector<32x32xbf16>, vector<16x32xf32> -> vector<16x32xf32>
    %287 = vector.extract_strided_slice %4 {offsets = [4, 0], sizes = [1, 32], strides = [1, 1]} : vector<13x96xf32> to vector<1x32xf32>
    %288 = vector.broadcast %287 : vector<1x32xf32> to vector<16x32xf32>
    %289 = arith.addf %286, %288 : vector<16x32xf32>
    %290 = vector.extract_strided_slice %4 {offsets = [9, 0], sizes = [1, 32], strides = [1, 1]} : vector<13x96xf32> to vector<1x32xf32>
    %291 = vector.extract_strided_slice %4 {offsets = [10, 0], sizes = [1, 32], strides = [1, 1]} : vector<13x96xf32> to vector<1x32xf32>
    %292 = arith.addf %158, %289 : vector<16x32xf32>
    %cst_104 = arith.constant dense<0.000000e+00> : vector<16xf32>
    %293 = vector.multi_reduction <add>, %292, %cst_104 [1] : vector<16x32xf32> to vector<16xf32>
    %294 = vector.shape_cast %293 : vector<16xf32> to vector<16x1xf32>
    %cst_105 = arith.constant 3.200000e+01 : f32
    %295 = vector.broadcast %cst_105 : f32 to vector<16x1xf32>
    %296 = arith.divf %294, %295 : vector<16x1xf32>
    %297 = vector.broadcast %296 : vector<16x1xf32> to vector<16x32xf32>
    %298 = arith.subf %292, %297 : vector<16x32xf32>
    %299 = arith.mulf %298, %298 : vector<16x32xf32>
    %cst_106 = arith.constant dense<0.000000e+00> : vector<16xf32>
    %300 = vector.multi_reduction <add>, %299, %cst_106 [1] : vector<16x32xf32> to vector<16xf32>
    %301 = vector.shape_cast %300 : vector<16xf32> to vector<16x1xf32>
    %cst_107 = arith.constant 3.200000e+01 : f32
    %302 = vector.broadcast %cst_107 : f32 to vector<16x1xf32>
    %303 = arith.divf %301, %302 : vector<16x1xf32>
    %304 = vector.broadcast %296 : vector<16x1xf32> to vector<16x32xf32>
    %305 = arith.subf %292, %304 : vector<16x32xf32>
    %cst_108 = arith.constant 9.99999974E-6 : f32
    %306 = vector.broadcast %cst_108 : f32 to vector<16x1xf32>
    %307 = arith.addf %303, %306 : vector<16x1xf32>
    %308 = math.rsqrt %307 : vector<16x1xf32>
    %309 = vector.broadcast %308 : vector<16x1xf32> to vector<16x32xf32>
    %310 = arith.mulf %305, %309 : vector<16x32xf32>
    %311 = vector.broadcast %290 : vector<1x32xf32> to vector<16x32xf32>
    %312 = arith.mulf %310, %311 : vector<16x32xf32>
    %313 = vector.broadcast %291 : vector<1x32xf32> to vector<16x32xf32>
    %314 = arith.addf %312, %313 : vector<16x32xf32>
    %c0_109 = arith.constant 0 : index
    %c0_110 = arith.constant 0 : index
    %c0_111 = arith.constant 0 : index
    %315 = vector.load %arg9[%c0_109, %c0_110, %c0_111] : memref<1x32x64xbf16, #tpu.memory_space<vmem>>, vector<1x32x64xbf16>
    %316 = vector.shape_cast %315 : vector<1x32x64xbf16> to vector<32x64xbf16>
    %317 = arith.truncf %314 : vector<16x32xf32> to vector<16x32xbf16>
    %cst_112 = arith.constant dense<0.000000e+00> : vector<16x64xf32>
    %318 = tpu.matmul %317, %316, %cst_112 {dimension_numbers = #tpu.dot_dimension_numbers<[1], [0], [0], [1], [0, 0, 1, 1], [], []>} : vector<16x32xbf16>, vector<32x64xbf16>, vector<16x64xf32> -> vector<16x64xf32>
    %319 = vector.extract_strided_slice %4 {offsets = [5, 0], sizes = [1, 64], strides = [1, 1]} : vector<13x96xf32> to vector<1x64xf32>
    %320 = vector.broadcast %319 : vector<1x64xf32> to vector<16x64xf32>
    %321 = arith.addf %318, %320 : vector<16x64xf32>
    %cst_113 = arith.constant 0.000000e+00 : f32
    %322 = vector.broadcast %cst_113 : f32 to vector<16x64xf32>
    %323 = arith.maximumf %321, %322 : vector<16x64xf32>
    %c0_114 = arith.constant 0 : index
    %c0_115 = arith.constant 0 : index
    %c0_116 = arith.constant 0 : index
    %324 = vector.load %arg10[%c0_114, %c0_115, %c0_116] : memref<1x64x32xbf16, #tpu.memory_space<vmem>>, vector<1x64x32xbf16>
    %325 = vector.shape_cast %324 : vector<1x64x32xbf16> to vector<64x32xbf16>
    %326 = arith.truncf %323 : vector<16x64xf32> to vector<16x64xbf16>
    %cst_117 = arith.constant dense<0.000000e+00> : vector<16x32xf32>
    %327 = tpu.matmul %326, %325, %cst_117 {dimension_numbers = #tpu.dot_dimension_numbers<[1], [0], [0], [1], [0, 0, 1, 1], [], []>} : vector<16x64xbf16>, vector<64x32xbf16>, vector<16x32xf32> -> vector<16x32xf32>
    %328 = vector.extract_strided_slice %4 {offsets = [6, 0], sizes = [1, 32], strides = [1, 1]} : vector<13x96xf32> to vector<1x32xf32>
    %329 = vector.broadcast %328 : vector<1x32xf32> to vector<16x32xf32>
    %330 = arith.addf %327, %329 : vector<16x32xf32>
    %331 = vector.extract_strided_slice %4 {offsets = [11, 0], sizes = [1, 32], strides = [1, 1]} : vector<13x96xf32> to vector<1x32xf32>
    %332 = vector.extract_strided_slice %4 {offsets = [12, 0], sizes = [1, 32], strides = [1, 1]} : vector<13x96xf32> to vector<1x32xf32>
    %333 = arith.addf %314, %330 : vector<16x32xf32>
    %cst_118 = arith.constant dense<0.000000e+00> : vector<16xf32>
    %334 = vector.multi_reduction <add>, %333, %cst_118 [1] : vector<16x32xf32> to vector<16xf32>
    %335 = vector.shape_cast %334 : vector<16xf32> to vector<16x1xf32>
    %cst_119 = arith.constant 3.200000e+01 : f32
    %336 = vector.broadcast %cst_119 : f32 to vector<16x1xf32>
    %337 = arith.divf %335, %336 : vector<16x1xf32>
    %338 = vector.broadcast %337 : vector<16x1xf32> to vector<16x32xf32>
    %339 = arith.subf %333, %338 : vector<16x32xf32>
    %340 = arith.mulf %339, %339 : vector<16x32xf32>
    %cst_120 = arith.constant dense<0.000000e+00> : vector<16xf32>
    %341 = vector.multi_reduction <add>, %340, %cst_120 [1] : vector<16x32xf32> to vector<16xf32>
    %342 = vector.shape_cast %341 : vector<16xf32> to vector<16x1xf32>
    %cst_121 = arith.constant 3.200000e+01 : f32
    %343 = vector.broadcast %cst_121 : f32 to vector<16x1xf32>
    %344 = arith.divf %342, %343 : vector<16x1xf32>
    %345 = vector.broadcast %337 : vector<16x1xf32> to vector<16x32xf32>
    %346 = arith.subf %333, %345 : vector<16x32xf32>
    %cst_122 = arith.constant 9.99999974E-6 : f32
    %347 = vector.broadcast %cst_122 : f32 to vector<16x1xf32>
    %348 = arith.addf %344, %347 : vector<16x1xf32>
    %349 = math.rsqrt %348 : vector<16x1xf32>
    %350 = vector.broadcast %349 : vector<16x1xf32> to vector<16x32xf32>
    %351 = arith.mulf %346, %350 : vector<16x32xf32>
    %352 = vector.broadcast %331 : vector<1x32xf32> to vector<16x32xf32>
    %353 = arith.mulf %351, %352 : vector<16x32xf32>
    %354 = vector.broadcast %332 : vector<1x32xf32> to vector<16x32xf32>
    %355 = arith.addf %353, %354 : vector<16x32xf32>
    %356 = vector.shape_cast %355 : vector<16x32xf32> to vector<2x8x32xf32>
    %c0_123 = arith.constant 0 : index
    %c0_124 = arith.constant 0 : index
    %c0_125 = arith.constant 0 : index
    %357 = vector.load %arg12[%c0_123, %c0_124, %c0_125] : memref<2x8x32xf32, #tpu.memory_space<vmem>>, vector<2x8x32xf32>
    tpu.vector_store %arg12[%c0_123, %c0_124, %c0_125], %356 {strides = array<i32>} : memref<2x8x32xf32, #tpu.memory_space<vmem>>, vector<2x8x32xf32>,
    return
  }
  func.func @transform_0(%arg0: i32, %arg1: i32) -> (i32, i32, i32) {
    %c0_i32 = arith.constant 0 : i32
    %c0_i32_0 = arith.constant 0 : i32
    %c0_i32_1 = arith.constant 0 : i32
    return %arg0, %c0_i32, %c0_i32_0 : i32, i32, i32
  }
  func.func @transform_1(%arg0: i32, %arg1: i32) -> (i32, i32, i32) {
    %c0_i32 = arith.constant 0 : i32
    %c0_i32_0 = arith.constant 0 : i32
    %c0_i32_1 = arith.constant 0 : i32
    return %arg0, %c0_i32, %c0_i32_0 : i32, i32, i32
  }
  func.func @transform_2(%arg0: i32, %arg1: i32) -> (i32, i32, i32) {
    %c0_i32 = arith.constant 0 : i32
    %c0_i32_0 = arith.constant 0 : i32
    %c0_i32_1 = arith.constant 0 : i32
    return %arg1, %c0_i32, %c0_i32_0 : i32, i32, i32
  }
  func.func @transform_3(%arg0: i32, %arg1: i32) -> (i32, i32, i32) {
    %c0_i32 = arith.constant 0 : i32
    %c0_i32_0 = arith.constant 0 : i32
    %c0_i32_1 = arith.constant 0 : i32
    return %arg1, %c0_i32, %c0_i32_0 : i32, i32, i32
  }
  func.func @transform_4(%arg0: i32, %arg1: i32) -> (i32, i32, i32) {
    %c0_i32 = arith.constant 0 : i32
    %c0_i32_0 = arith.constant 0 : i32
    %c0_i32_1 = arith.constant 0 : i32
    return %arg1, %c0_i32, %c0_i32_0 : i32, i32, i32
  }
  func.func @transform_5(%arg0: i32, %arg1: i32) -> (i32, i32, i32) {
    %c0_i32 = arith.constant 0 : i32
    %c0_i32_0 = arith.constant 0 : i32
    %c0_i32_1 = arith.constant 0 : i32
    return %arg1, %c0_i32, %c0_i32_0 : i32, i32, i32
  }
  func.func @transform_6(%arg0: i32, %arg1: i32) -> (i32, i32, i32) {
    %c0_i32 = arith.constant 0 : i32
    %c0_i32_0 = arith.constant 0 : i32
    %c0_i32_1 = arith.constant 0 : i32
    return %arg1, %c0_i32, %c0_i32_0 : i32, i32, i32
  }
  func.func @transform_7(%arg0: i32, %arg1: i32) -> (i32, i32, i32) {
    %c0_i32 = arith.constant 0 : i32
    %c0_i32_0 = arith.constant 0 : i32
    %c0_i32_1 = arith.constant 0 : i32
    return %arg1, %c0_i32, %c0_i32_0 : i32, i32, i32
  }
  func.func @transform_8(%arg0: i32, %arg1: i32) -> (i32, i32, i32) {
    %c0_i32 = arith.constant 0 : i32
    %c0_i32_0 = arith.constant 0 : i32
    %c0_i32_1 = arith.constant 0 : i32
    return %arg1, %c0_i32, %c0_i32_0 : i32, i32, i32
  }
  func.func @transform_9(%arg0: i32, %arg1: i32) -> (i32, i32, i32) {
    %c0_i32 = arith.constant 0 : i32
    %c0_i32_0 = arith.constant 0 : i32
    %c0_i32_1 = arith.constant 0 : i32
    return %arg1, %c0_i32, %c0_i32_0 : i32, i32, i32
  }
  func.func @transform_10(%arg0: i32, %arg1: i32) -> (i32, i32, i32) {
    %c0_i32 = arith.constant 0 : i32
    %c0_i32_0 = arith.constant 0 : i32
    %c0_i32_1 = arith.constant 0 : i32
    return %arg0, %c0_i32, %c0_i32_0 : i32, i32, i32
  }
}

</mosaic_0001>

<llo_original>
// kernel: transformer_decoder_forward.3
$region0: #{transformer_decoder_forward.3}
  #allocation0 [shape = 'u32[]', space=smem, size = 0x4, offset = 0x4, fixed_abs, tag = 'smem constant byte address 0x4 - core index']
  #allocation1 [shape = 'u32[144,128]{1,0:T(1,128)}', space=vmem, size = 0x12000, scoped, tag = 'internal scratch']
  %s0 = inlined_call_operand.vmem [shape: f32[14,32], index: 0, kind: input, shape index: {}]
  %s1 = inlined_call_operand.vmem [shape: bf16[32,128], index: 1, kind: input, shape index: {}]
  %s2 = inlined_call_operand.vmem [shape: f32[1,128], index: 2, kind: input, shape index: {}]
  %s3 = inlined_call_operand.vmem [shape: f32[14,128], index: 3, kind: output, shape index: {}]
  %s4 = sld [smem:[#allocation0]]
  $region22: #{transformer_decoder_forward.3} parent=0
    _
  %s6 = ssub.s32 1, %s4
  %s7 = scalar_select 0, %s6, %s4
  // Predicated region
  $region2: #{transformer_decoder_forward.3} parent=0 // pred_check
    _
  $region3: #{transformer_decoder_forward.3} parent=0 // pred_check_branch
    %9 = sbr.rel (0) target = $region5
  $region4: #{transformer_decoder_forward.3} parent=0 // pred_region
    _
  $region5: #{transformer_decoder_forward.3} parent=0 // pred_fallthru
    _
  // Predicated region
  $region6: #{transformer_decoder_forward.3} parent=0 // pred_check
    _
  $region7: #{transformer_decoder_forward.3} parent=0 // pred_check_branch
    %11 = sbr.rel (0) target = $region9
  $region8: #{transformer_decoder_forward.3} parent=0 // pred_region
    _
  $region9: #{transformer_decoder_forward.3} parent=0 // pred_fallthru
    _
  // Predicated region
  $region10: #{transformer_decoder_forward.3} parent=0 // pred_check
    _
  $region11: #{transformer_decoder_forward.3} parent=0 // pred_check_branch
    %13 = sbr.rel (0) target = $region13
  $region12: #{transformer_decoder_forward.3} parent=0 // pred_region
    _
  $region13: #{transformer_decoder_forward.3} parent=0 // pred_fallthru
    _
  %v15 = vld [vmem:[%s0] sm:$0xff]
  %v16 = vld [vmem:[%s0 + $0x8] sm:$0x3f]
  %v17 = vld [vmem:[%s1] sm:$0xf]
  %v18 = vld [vmem:[%s1 + $0x4] sm:$0xf]
  %v19 = vld [vmem:[%s1 + $0x8] sm:$0xf]
  %v20 = vld [vmem:[%s1 + $0xc] sm:$0xf]
  %v21 = vpack.c.bf16 %v16, %v15
  %v22 = vld [vmem:[%s2] sm:$0x1]
  %v24 = vlaneseq
  %v25 = vshrl.u32 %v24, 7
  %v26 = vsub.s32 0, %v25
  %v27 = vrot.slane %v22, %v26
  %v33 = vunpack.c.l.b16 %v17
  %v34 = vunpack.c.l.b16 %v18
  %v35 = vunpack.c.l.b16 %v19
  %v36 = vunpack.c.l.b16 %v20
  %v37 = vpack.c.b16 %v34, %v33
  %v38 = vpack.c.b16 %v36, %v35
  %vm41 = vcmask 261120
  %v43 = vsel %vm41, %v21, 0
  %45 = vmatprep.subr.bf16.mxu0 0
  %46 = vmatpush1.bf16.msra.mxu0 %v37
  %47 = vmatprep.subr.bf16.mxu0 0
  %48 = vmatpush1.bf16.msra.mxu0 %v38
  %49 = vmatprep.subr.bf16.mxu0 0
  %50 = vmatpush1.bf16.msra.mxu0 0
  %51 = vmatprep.subr.bf16.mxu0 0
  %52 = vmatpush1.bf16.msra.mxu0 0
  %53 = vmatprep.subr.bf16.mxu0 0
  %54 = vmatpush1.bf16.msra.mxu0 0
  %55 = vmatprep.subr.bf16.mxu0 0
  %56 = vmatpush1.bf16.msra.mxu0 0
  %57 = vmatprep.subr.bf16.mxu0 0
  %58 = vmatpush1.bf16.msra.mxu0 0
  %59 = vmatprep.subr.bf16.mxu0 0
  %60 = vmatpush1.bf16.msra.mxu0 0
  %61 = vmatprep.subr.bf16.mxu0 0
  %62 = vmatpush1.bf16.msra.mxu0 0
  %63 = vmatprep.subr.bf16.mxu0 0
  %64 = vmatpush1.bf16.msra.mxu0 0
  %65 = vmatprep.subr.bf16.mxu0 0
  %66 = vmatpush1.bf16.msra.mxu0 0
  %67 = vmatprep.subr.bf16.mxu0 0
  %68 = vmatpush1.bf16.msra.mxu0 0
  %69 = vmatprep.subr.bf16.mxu0 0
  %70 = vmatpush1.bf16.msra.mxu0 0
  %71 = vmatprep.subr.bf16.mxu0 0
  %72 = vmatpush1.bf16.msra.mxu0 0
  %73 = vmatprep.subr.bf16.mxu0 0
  %74 = vmatpush1.bf16.msra.mxu0 0
  %75 = vmatprep.subr.bf16.mxu0 0
  %76 = vmatpush1.bf16.msra.mxu0 0
  %77 = vmatprep.mubr.bf16.mxu0 0
  %78 = vmatmul.mubr.bf16.gmra.mrb[0].mxu0 %v43
  %v79 = vpop.f32.mrb[0].mxu0
  %v80 = vadd.f32 %v27, %v79
  %v81 = vpop.f32.mrb[0].mxu0
  %v82 = vpop.f32.mrb[0].mxu0
  %v83 = vadd.f32 %v27, %v82
  %v84 = vpop.f32.mrb[0].mxu0
  %85 = vdwg.mxu0
  %86 = vst [vmem:[%s3] sm:$0xff] %v80
  %87 = vst [vmem:[%s3 + $0x8] sm:$0x3f] %v83
  // Predicated region
  $region14: #{transformer_decoder_forward.3} parent=0 // pred_check
    _
  $region15: #{transformer_decoder_forward.3} parent=0 // pred_check_branch
    %89 = sbr.rel (0) target = $region17
  $region16: #{transformer_decoder_forward.3} parent=0 // pred_region
    _
  $region17: #{transformer_decoder_forward.3} parent=0 // pred_fallthru
    _
  // Predicated region
  $region18: #{transformer_decoder_forward.3} parent=0 // pred_check
    _
  $region19: #{transformer_decoder_forward.3} parent=0 // pred_check_branch
    %91 = sbr.rel (0) target = $region21
  $region20: #{transformer_decoder_forward.3} parent=0 // pred_region
    _
  $region21: #{transformer_decoder_forward.3} parent=0 // pred_fallthru
    _

// kernel: transformer_decoder_forward.2
$region0: #{transformer_decoder_forward.2}
  #allocation0 [shape = 'u32[]', space=smem, size = 0x4, offset = 0x4, fixed_abs, tag = 'smem constant byte address 0x4 - core index']
  #allocation1 [shape = 'u32[144,128]{1,0:T(1,128)}', space=vmem, size = 0x12000, scoped, tag = 'internal scratch']
  #allocation2 [shape = 'f32[2,8,32]{2,1,0:T(8,128)}', space=vmem, size = 0x2000, scoped, tag = 'scratch operand']
  %s0 = inlined_call_operand.vmem [shape: f32[2,8,32], index: 0, kind: input, shape index: {}]
  %s1 = inlined_call_operand.vmem [shape: f32[2,8,32], index: 1, kind: input, shape index: {}]
  %s2 = inlined_call_operand.vmem [shape: bf16[2,32,96], index: 2, kind: input, shape index: {}]
  %s3 = inlined_call_operand.vmem [shape: bf16[2,32,32], index: 3, kind: input, shape index: {}]
  %s4 = inlined_call_operand.vmem [shape: bf16[2,32,32], index: 4, kind: input, shape index: {}]
  %s5 = inlined_call_operand.vmem [shape: bf16[2,32,64], index: 5, kind: input, shape index: {}]
  %s6 = inlined_call_operand.vmem [shape: bf16[2,32,32], index: 6, kind: input, shape index: {}]
  %s7 = inlined_call_operand.vmem [shape: bf16[2,32,64], index: 7, kind: input, shape index: {}]
  %s8 = inlined_call_operand.vmem [shape: bf16[2,64,32], index: 8, kind: input, shape index: {}]
  %s9 = inlined_call_operand.vmem [shape: f32[2,13,96], index: 9, kind: input, shape index: {}]
  %s10 = inlined_call_operand.vmem [shape: f32[2,8,32], index: 10, kind: output, shape index: {}]
  %s11 = sld [smem:[#allocation0]]
  $region77: #{transformer_decoder_forward.2} parent=0
    _
  %s13 = ssub.s32 1, %s11
  %s14 = scalar_select 0, %s13, %s11
  loop: start=0, step=1, limit=4
  $region2: #{transformer_decoder_forward.2} parent=0 // loop_pre_header
    _
  $region3: #{transformer_decoder_forward.2} parent=0 // loop_header
    %s16 = sphi 0, %s20
    %p17 = scmp.ge.s32.totalorder %s16, 4
    %s23 = sphi 0, %s35
    %s24 = sphi 0, %s31
    %s25 = sphi 0, %s23
    %s26 = sphi 0, %s24
    %s27 = sphi 0, %s25
    %s28 = sphi 0, %s26
    %s38 = sphi 0, %s40
    %s41 = sphi 0, %s38
    %s42 = sphi 0, %s41
    %s58 = sphi 0, %s42
    %s64 = sphi 0, %s66
    %s67 = sphi 0, %s64
    %s68 = sphi 0, %s67
    %s84 = sphi 0, %s68
    %s90 = sphi 0, %s92
    %s93 = sphi 0, %s90
    %s94 = sphi 0, %s93
    %s110 = sphi 0, %s94
    %s116 = sphi 0, %s118
    %s119 = sphi 0, %s116
    %s120 = sphi 0, %s119
    %s136 = sphi 0, %s120
    %s142 = sphi 0, %s144
    %s145 = sphi 0, %s142
    %s146 = sphi 0, %s145
    %s162 = sphi 0, %s146
    %s168 = sphi 0, %s170
    %s171 = sphi 0, %s168
    %s172 = sphi 0, %s171
    %s188 = sphi 0, %s172
    %s194 = sphi 0, %s196
    %s197 = sphi 0, %s194
    %s198 = sphi 0, %s197
    %s214 = sphi 0, %s198
    %s220 = sphi 0, %s222
    %s223 = sphi 0, %s220
    %s224 = sphi 0, %s223
    %s240 = sphi 0, %s224
    %s246 = sphi 0, %s248
    %s249 = sphi 0, %s246
    %s250 = sphi 0, %s249
    %s266 = sphi 0, %s250
    %s272 = sphi 0, %s274
    %s275 = sphi 0, %s272
    %s276 = sphi 0, %s275
    %s292 = sphi 0, %s276
    %s298 = sphi 0, %s300
    %s301 = sphi 0, %s298
    %s302 = sphi 0, %s301
    %s318 = sphi 0, %s302
  $region4: #{transformer_decoder_forward.2} parent=0 // loop_header_branch
    %19 = sbr.rel (%p17) target = $region8
  $region5: #{transformer_decoder_forward.2} parent=0 // loop_body
    %s21 = ssub.s32 %s16, 1
    %s22 = ssub.s32 %s16, 2
    %s29 = sadd.s32 1, %s24
    %p30 = scmp.ge.s32.totalorder %s29, 2
    %s31 = scalar_select %p30, 0, %s29
    %s32 = sadd.s32 1, %s23
    %s33 = scalar_select %p30, %s32, %s23
    %p34 = scmp.ge.s32.totalorder %s33, 1
    %s35 = scalar_select %p34, 0, %s33
    %s36 = ssub.s32 %s23, %s35
    %p37 = scmp.eq.s32.totalorder %s36, 0
    %s39 = sadd.s32 %s38, 1
    %s40 = scalar_select %p37, %s38, %s39
    %p43 = pneg %p37
    %p44 = scmp.eq.s32.totalorder %s16, 1
    %p45 = por %p43, %p44
    %p46 = scmp.ne.s32.totalorder %s38, %s41
    %p47 = scmp.eq.s32.totalorder %s16, 0
    %p48 = por %p46, %p47
    %p49 = scmp.ne.s32.totalorder %s38, %s41
    %p50 = scmp.eq.s32.totalorder %s21, 1
    %p51 = por %p49, %p50
    %p52 = scmp.ne.s32.totalorder %s41, %s42
    %p53 = scmp.eq.s32.totalorder %s21, 0
    %p54 = por %p52, %p53
    %p55 = scmp.ne.s32.totalorder %s41, %s42
    %p56 = scmp.eq.s32.totalorder %s22, 1
    %p57 = por %p55, %p56
    %p59 = scmp.ne.s32.totalorder %s42, %s58
    %p60 = scmp.eq.s32.totalorder %s22, 0
    %p61 = por %p59, %p60
    %s62 = ssub.s32 %s23, %s35
    %p63 = scmp.eq.s32.totalorder %s62, 0
    %s65 = sadd.s32 %s64, 1
    %s66 = scalar_select %p63, %s64, %s65
    %p69 = pneg %p63
    %p70 = scmp.eq.s32.totalorder %s16, 1
    %p71 = por %p69, %p70
    %p72 = scmp.ne.s32.totalorder %s64, %s67
    %p73 = scmp.eq.s32.totalorder %s16, 0
    %p74 = por %p72, %p73
    %p75 = scmp.ne.s32.totalorder %s64, %s67
    %p76 = scmp.eq.s32.totalorder %s21, 1
    %p77 = por %p75, %p76
    %p78 = scmp.ne.s32.totalorder %s67, %s68
    %p79 = scmp.eq.s32.totalorder %s21, 0
    %p80 = por %p78, %p79
    %p81 = scmp.ne.s32.totalorder %s67, %s68
    %p82 = scmp.eq.s32.totalorder %s22, 1
    %p83 = por %p81, %p82
    %p85 = scmp.ne.s32.totalorder %s68, %s84
    %p86 = scmp.eq.s32.totalorder %s22, 0
    %p87 = por %p85, %p86
    %s88 = ssub.s32 %s24, %s31
    %p89 = scmp.eq.s32.totalorder %s88, 0
    %s91 = sadd.s32 %s90, 1
    %s92 = scalar_select %p89, %s90, %s91
    %p95 = pneg %p89
    %p96 = scmp.eq.s32.totalorder %s16, 1
    %p97 = por %p95, %p96
    %p98 = scmp.ne.s32.totalorder %s90, %s93
    %p99 = scmp.eq.s32.totalorder %s16, 0
    %p100 = por %p98, %p99
    %p101 = scmp.ne.s32.totalorder %s90, %s93
    %p102 = scmp.eq.s32.totalorder %s21, 1
    %p103 = por %p101, %p102
    %p104 = scmp.ne.s32.totalorder %s93, %s94
    %p105 = scmp.eq.s32.totalorder %s21, 0
    %p106 = por %p104, %p105
    %p107 = scmp.ne.s32.totalorder %s93, %s94
    %p108 = scmp.eq.s32.totalorder %s22, 1
    %p109 = por %p107, %p108
    %p111 = scmp.ne.s32.totalorder %s94, %s110
    %p112 = scmp.eq.s32.totalorder %s22, 0
    %p113 = por %p111, %p112
    %s114 = ssub.s32 %s24, %s31
    %p115 = scmp.eq.s32.totalorder %s114, 0
    %s117 = sadd.s32 %s116, 1
    %s118 = scalar_select %p115, %s116, %s117
    %p121 = pneg %p115
    %p122 = scmp.eq.s32.totalorder %s16, 1
    %p123 = por %p121, %p122
    %p124 = scmp.ne.s32.totalorder %s116, %s119
    %p125 = scmp.eq.s32.totalorder %s16, 0
    %p126 = por %p124, %p125
    %p127 = scmp.ne.s32.totalorder %s116, %s119
    %p128 = scmp.eq.s32.totalorder %s21, 1
    %p129 = por %p127, %p128
    %p130 = scmp.ne.s32.totalorder %s119, %s120
    %p131 = scmp.eq.s32.totalorder %s21, 0
    %p132 = por %p130, %p131
    %p133 = scmp.ne.s32.totalorder %s119, %s120
    %p134 = scmp.eq.s32.totalorder %s22, 1
    %p135 = por %p133, %p134
    %p137 = scmp.ne.s32.totalorder %s120, %s136
    %p138 = scmp.eq.s32.totalorder %s22, 0
    %p139 = por %p137, %p138
    %s140 = ssub.s32 %s24, %s31
    %p141 = scmp.eq.s32.totalorder %s140, 0
    %s143 = sadd.s32 %s142, 1
    %s144 = scalar_select %p141, %s142, %s143
    %p147 = pneg %p141
    %p148 = scmp.eq.s32.totalorder %s16, 1
    %p149 = por %p147, %p148
    %p150 = scmp.ne.s32.totalorder %s142, %s145
    %p151 = scmp.eq.s32.totalorder %s16, 0
    %p152 = por %p150, %p151
    %p153 = scmp.ne.s32.totalorder %s142, %s145
    %p154 = scmp.eq.s32.totalorder %s21, 1
    %p155 = por %p153, %p154
    %p156 = scmp.ne.s32.totalorder %s145, %s146
    %p157 = scmp.eq.s32.totalorder %s21, 0
    %p158 = por %p156, %p157
    %p159 = scmp.ne.s32.totalorder %s145, %s146
    %p160 = scmp.eq.s32.totalorder %s22, 1
    %p161 = por %p159, %p160
    %p163 = scmp.ne.s32.totalorder %s146, %s162
    %p164 = scmp.eq.s32.totalorder %s22, 0
    %p165 = por %p163, %p164
    %s166 = ssub.s32 %s24, %s31
    %p167 = scmp.eq.s32.totalorder %s166, 0
    %s169 = sadd.s32 %s168, 1
    %s170 = scalar_select %p167, %s168, %s169
    %p173 = pneg %p167
    %p174 = scmp.eq.s32.totalorder %s16, 1
    %p175 = por %p173, %p174
    %p176 = scmp.ne.s32.totalorder %s168, %s171
    %p177 = scmp.eq.s32.totalorder %s16, 0
    %p178 = por %p176, %p177
    %p179 = scmp.ne.s32.totalorder %s168, %s171
    %p180 = scmp.eq.s32.totalorder %s21, 1
    %p181 = por %p179, %p180
    %p182 = scmp.ne.s32.totalorder %s171, %s172
    %p183 = scmp.eq.s32.totalorder %s21, 0
    %p184 = por %p182, %p183
    %p185 = scmp.ne.s32.totalorder %s171, %s172
    %p186 = scmp.eq.s32.totalorder %s22, 1
    %p187 = por %p185, %p186
    %p189 = scmp.ne.s32.totalorder %s172, %s188
    %p190 = scmp.eq.s32.totalorder %s22, 0
    %p191 = por %p189, %p190
    %s192 = ssub.s32 %s24, %s31
    %p193 = scmp.eq.s32.totalorder %s192, 0
    %s195 = sadd.s32 %s194, 1
    %s196 = scalar_select %p193, %s194, %s195
    %p199 = pneg %p193
    %p200 = scmp.eq.s32.totalorder %s16, 1
    %p201 = por %p199, %p200
    %p202 = scmp.ne.s32.totalorder %s194, %s197
    %p203 = scmp.eq.s32.totalorder %s16, 0
    %p204 = por %p202, %p203
    %p205 = scmp.ne.s32.totalorder %s194, %s197
    %p206 = scmp.eq.s32.totalorder %s21, 1
    %p207 = por %p205, %p206
    %p208 = scmp.ne.s32.totalorder %s197, %s198
    %p209 = scmp.eq.s32.totalorder %s21, 0
    %p210 = por %p208, %p209
    %p211 = scmp.ne.s32.totalorder %s197, %s198
    %p212 = scmp.eq.s32.totalorder %s22, 1
    %p213 = por %p211, %p212
    %p215 = scmp.ne.s32.totalorder %s198, %s214
    %p216 = scmp.eq.s32.totalorder %s22, 0
    %p217 = por %p215, %p216
    %s218 = ssub.s32 %s24, %s31
    %p219 = scmp.eq.s32.totalorder %s218, 0
    %s221 = sadd.s32 %s220, 1
    %s222 = scalar_select %p219, %s220, %s221
    %p225 = pneg %p219
    %p226 = scmp.eq.s32.totalorder %s16, 1
    %p227 = por %p225, %p226
    %p228 = scmp.ne.s32.totalorder %s220, %s223
    %p229 = scmp.eq.s32.totalorder %s16, 0
    %p230 = por %p228, %p229
    %p231 = scmp.ne.s32.totalorder %s220, %s223
    %p232 = scmp.eq.s32.totalorder %s21, 1
    %p233 = por %p231, %p232
    %p234 = scmp.ne.s32.totalorder %s223, %s224
    %p235 = scmp.eq.s32.totalorder %s21, 0
    %p236 = por %p234, %p235
    %p237 = scmp.ne.s32.totalorder %s223, %s224
    %p238 = scmp.eq.s32.totalorder %s22, 1
    %p239 = por %p237, %p238
    %p241 = scmp.ne.s32.totalorder %s224, %s240
    %p242 = scmp.eq.s32.totalorder %s22, 0
    %p243 = por %p241, %p242
    %s244 = ssub.s32 %s24, %s31
    %p245 = scmp.eq.s32.totalorder %s244, 0
    %s247 = sadd.s32 %s246, 1
    %s248 = scalar_select %p245, %s246, %s247
    %p251 = pneg %p245
    %p252 = scmp.eq.s32.totalorder %s16, 1
    %p253 = por %p251, %p252
    %p254 = scmp.ne.s32.totalorder %s246, %s249
    %p255 = scmp.eq.s32.totalorder %s16, 0
    %p256 = por %p254, %p255
    %p257 = scmp.ne.s32.totalorder %s246, %s249
    %p258 = scmp.eq.s32.totalorder %s21, 1
    %p259 = por %p257, %p258
    %p260 = scmp.ne.s32.totalorder %s249, %s250
    %p261 = scmp.eq.s32.totalorder %s21, 0
    %p262 = por %p260, %p261
    %p263 = scmp.ne.s32.totalorder %s249, %s250
    %p264 = scmp.eq.s32.totalorder %s22, 1
    %p265 = por %p263, %p264
    %p267 = scmp.ne.s32.totalorder %s250, %s266
    %p268 = scmp.eq.s32.totalorder %s22, 0
    %p269 = por %p267, %p268
    %s270 = ssub.s32 %s24, %s31
    %p271 = scmp.eq.s32.totalorder %s270, 0
    %s273 = sadd.s32 %s272, 1
    %s274 = scalar_select %p271, %s272, %s273
    %p277 = pneg %p271
    %p278 = scmp.eq.s32.totalorder %s16, 1
    %p279 = por %p277, %p278
    %p280 = scmp.ne.s32.totalorder %s272, %s275
    %p281 = scmp.eq.s32.totalorder %s16, 0
    %p282 = por %p280, %p281
    %p283 = scmp.ne.s32.totalorder %s272, %s275
    %p284 = scmp.eq.s32.totalorder %s21, 1
    %p285 = por %p283, %p284
    %p286 = scmp.ne.s32.totalorder %s275, %s276
    %p287 = scmp.eq.s32.totalorder %s21, 0
    %p288 = por %p286, %p287
    %p289 = scmp.ne.s32.totalorder %s275, %s276
    %p290 = scmp.eq.s32.totalorder %s22, 1
    %p291 = por %p289, %p290
    %p293 = scmp.ne.s32.totalorder %s276, %s292
    %p294 = scmp.eq.s32.totalorder %s22, 0
    %p295 = por %p293, %p294
    %s296 = ssub.s32 %s23, %s35
    %p297 = scmp.eq.s32.totalorder %s296, 0
    %s299 = sadd.s32 %s298, 1
    %s300 = scalar_select %p297, %s298, %s299
    %p303 = pneg %p297
    %p304 = scmp.eq.s32.totalorder %s16, 1
    %p305 = por %p303, %p304
    %p306 = scmp.ne.s32.totalorder %s298, %s301
    %p307 = scmp.eq.s32.totalorder %s16, 0
    %p308 = por %p306, %p307
    %p309 = scmp.ne.s32.totalorder %s298, %s301
    %p310 = scmp.eq.s32.totalorder %s21, 1
    %p311 = por %p309, %p310
    %p312 = scmp.ne.s32.totalorder %s301, %s302
    %p313 = scmp.eq.s32.totalorder %s21, 0
    %p314 = por %p312, %p313
    %p315 = scmp.ne.s32.totalorder %s301, %s302
    %p316 = scmp.eq.s32.totalorder %s22, 1
    %p317 = por %p315, %p316
    %p319 = scmp.ne.s32.totalorder %s302, %s318
    %p320 = scmp.eq.s32.totalorder %s22, 0
    %p321 = por %p319, %p320
    %p322 = scmp.le.s32.totalorder 1, %s16
    %p323 = scmp.lt.s32.totalorder %s16, 3
    %p324 = pnand %p322, %p323
    %p325 = pneg %p324
    // Predicated region
    $region9: #{transformer_decoder_forward.2} parent=5 // pred_check
      _
    $region10: #{transformer_decoder_forward.2} parent=5 // pred_check_branch
      %327 = sbr.rel (%p324) target = $region12
    $region11: #{transformer_decoder_forward.2} parent=5 // pred_region
      %s328 = ssub.s32 %s16, 1
      // Predicated region
      $region13: #{transformer_decoder_forward.2} parent=11 // pred_check
        %p329 = pneg %p54
      $region14: #{transformer_decoder_forward.2} parent=11 // pred_check_branch
        %331 = sbr.rel (%p329) target = $region16
      $region15: #{transformer_decoder_forward.2} parent=11 // pred_region
        %s332 = smul.u32 2, %s25
        %p333 = scmp.lt.s32.totalorder %s332, 1
        %s334 = scalar_select %p333, %s332, 1
        %s335 = smul.addr %s334, 8
        %s336 = scalar_lea.vmem %s0, %s335
        %s337 = smul.u32 2, %s25
      $region16: #{transformer_decoder_forward.2} parent=11 // pred_fallthru
        _
      // Predicated region
      $region17: #{transformer_decoder_forward.2} parent=11 // pred_check
        %p338 = pneg %p80
      $region18: #{transformer_decoder_forward.2} parent=11 // pred_check_branch
        %340 = sbr.rel (%p338) target = $region20
      $region19: #{transformer_decoder_forward.2} parent=11 // pred_region
        %s341 = smul.u32 2, %s25
        %p342 = scmp.lt.s32.totalorder %s341, 1
        %s343 = scalar_select %p342, %s341, 1
        %s344 = smul.addr %s343, 8
        %s345 = scalar_lea.vmem %s1, %s344
        %s346 = smul.u32 2, %s25
      $region20: #{transformer_decoder_forward.2} parent=11 // pred_fallthru
        _
    $region12: #{transformer_decoder_forward.2} parent=5 // pred_fallthru
      _
    %p347 = scmp.lt.s32.totalorder %s16, 2
    // Predicated region
    $region21: #{transformer_decoder_forward.2} parent=5 // pred_check
      %p348 = pneg %p347
    $region22: #{transformer_decoder_forward.2} parent=5 // pred_check_branch
      %350 = sbr.rel (%p348) target = $region24
    $region23: #{transformer_decoder_forward.2} parent=5 // pred_region
      // Predicated region
      $region25: #{transformer_decoder_forward.2} parent=23 // pred_check
        %p351 = pneg %p100
      $region26: #{transformer_decoder_forward.2} parent=23 // pred_check_branch
        %353 = sbr.rel (%p351) target = $region28
      $region27: #{transformer_decoder_forward.2} parent=23 // pred_region
        %p354 = scmp.lt.s32.totalorder %s24, 1
        %s355 = scalar_select %p354, %s24, 1
        %s356 = smul.addr %s355, 4
        %s357 = smul.addr %s356, 4
        %s358 = scalar_lea.vmem %s2, %s357
      $region28: #{transformer_decoder_forward.2} parent=23 // pred_fallthru
        _
      // Predicated region
      $region29: #{transformer_decoder_forward.2} parent=23 // pred_check
        %p359 = pneg %p126
      $region30: #{transformer_decoder_forward.2} parent=23 // pred_check_branch
        %361 = sbr.rel (%p359) target = $region32
      $region31: #{transformer_decoder_forward.2} parent=23 // pred_region
        %p362 = scmp.lt.s32.totalorder %s24, 1
        %s363 = scalar_select %p362, %s24, 1
        %s364 = smul.addr %s363, 4
        %s365 = smul.addr %s364, 4
        %s366 = scalar_lea.vmem %s3, %s365
      $region32: #{transformer_decoder_forward.2} parent=23 // pred_fallthru
        _
      // Predicated region
      $region33: #{transformer_decoder_forward.2} parent=23 // pred_check
        %p367 = pneg %p152
      $region34: #{transformer_decoder_forward.2} parent=23 // pred_check_branch
        %369 = sbr.rel (%p367) target = $region36
      $region35: #{transformer_decoder_forward.2} parent=23 // pred_region
        %p370 = scmp.lt.s32.totalorder %s24, 1
        %s371 = scalar_select %p370, %s24, 1
        %s372 = smul.addr %s371, 4
        %s373 = smul.addr %s372, 4
        %s374 = scalar_lea.vmem %s4, %s373
      $region36: #{transformer_decoder_forward.2} parent=23 // pred_fallthru
        _
      // Predicated region
      $region37: #{transformer_decoder_forward.2} parent=23 // pred_check
        %p375 = pneg %p178
      $region38: #{transformer_decoder_forward.2} parent=23 // pred_check_branch
        %377 = sbr.rel (%p375) target = $region40
      $region39: #{transformer_decoder_forward.2} parent=23 // pred_region
        %p378 = scmp.lt.s32.totalorder %s24, 1
        %s379 = scalar_select %p378, %s24, 1
        %s380 = smul.addr %s379, 4
        %s381 = smul.addr %s380, 4
        %s382 = scalar_lea.vmem %s5, %s381
      $region40: #{transformer_decoder_forward.2} parent=23 // pred_fallthru
        _
      // Predicated region
      $region41: #{transformer_decoder_forward.2} parent=23 // pred_check
        %p383 = pneg %p204
      $region42: #{transformer_decoder_forward.2} parent=23 // pred_check_branch
        %385 = sbr.rel (%p383) target = $region44
      $region43: #{transformer_decoder_forward.2} parent=23 // pred_region
        %p386 = scmp.lt.s32.totalorder %s24, 1
        %s387 = scalar_select %p386, %s24, 1
        %s388 = smul.addr %s387, 4
        %s389 = smul.addr %s388, 4
        %s390 = scalar_lea.vmem %s6, %s389
      $region44: #{transformer_decoder_forward.2} parent=23 // pred_fallthru
        _
      // Predicated region
      $region45: #{transformer_decoder_forward.2} parent=23 // pred_check
        %p391 = pneg %p230
      $region46: #{transformer_decoder_forward.2} parent=23 // pred_check_branch
        %393 = sbr.rel (%p391) target = $region48
      $region47: #{transformer_decoder_forward.2} parent=23 // pred_region
        %p394 = scmp.lt.s32.totalorder %s24, 1
        %s395 = scalar_select %p394, %s24, 1
        %s396 = smul.addr %s395, 4
        %s397 = smul.addr %s396, 4
        %s398 = scalar_lea.vmem %s7, %s397
      $region48: #{transformer_decoder_forward.2} parent=23 // pred_fallthru
        _
      // Predicated region
      $region49: #{transformer_decoder_forward.2} parent=23 // pred_check
        %p399 = pneg %p256
      $region50: #{transformer_decoder_forward.2} parent=23 // pred_check_branch
        %401 = sbr.rel (%p399) target = $region52
      $region51: #{transformer_decoder_forward.2} parent=23 // pred_region
        %p402 = scmp.lt.s32.totalorder %s24, 1
        %s403 = scalar_select %p402, %s24, 1
        %s404 = smul.addr %s403, 8
        %s405 = smul.addr %s404, 4
        %s406 = scalar_lea.vmem %s8, %s405
      $region52: #{transformer_decoder_forward.2} parent=23 // pred_fallthru
        _
      // Predicated region
      $region53: #{transformer_decoder_forward.2} parent=23 // pred_check
        %p407 = pneg %p282
      $region54: #{transformer_decoder_forward.2} parent=23 // pred_check_branch
        %409 = sbr.rel (%p407) target = $region56
      $region55: #{transformer_decoder_forward.2} parent=23 // pred_region
        %p410 = scmp.lt.s32.totalorder %s24, 1
        %s411 = scalar_select %p410, %s24, 1
        %s412 = smul.addr %s411, 2
        %s413 = smul.addr %s412, 8
        %s414 = scalar_lea.vmem %s9, %s413
      $region56: #{transformer_decoder_forward.2} parent=23 // pred_fallthru
        _
    $region24: #{transformer_decoder_forward.2} parent=5 // pred_fallthru
      _
    %p415 = scmp.le.s32.totalorder 1, %s16
    %p416 = scmp.lt.s32.totalorder %s16, 3
    %p417 = pnand %p415, %p416
    %p418 = pneg %p417
    // Predicated region
    $region57: #{transformer_decoder_forward.2} parent=5 // pred_check
      _
    $region58: #{transformer_decoder_forward.2} parent=5 // pred_check_branch
      %420 = sbr.rel (%p417) target = $region60
    $region59: #{transformer_decoder_forward.2} parent=5 // pred_region
      %s421 = ssub.s32 %s16, 1
      %s422 = smul.u32 2, %s25
      %p423 = scmp.lt.s32.totalorder %s422, 1
      %s424 = scalar_select %p423, %s422, 1
      %s425 = smul.addr %s424, 8
      %s426 = scalar_lea.vmem %s0, %s425
      %p427 = pneg %p54
      %p428 = pneg %p51
      %s429 = smul.u32 2, %s25
      %p430 = scmp.lt.s32.totalorder %s429, 1
      %s431 = scalar_select %p430, %s429, 1
      %s432 = smul.addr %s431, 8
      %s433 = scalar_lea.vmem %s1, %s432
      %p434 = pneg %p80
      %p435 = pneg %p77
      %p436 = scmp.lt.s32.totalorder %s26, 1
      %s437 = scalar_select %p436, %s26, 1
      %s438 = smul.addr %s437, 4
      %s439 = smul.addr %s438, 4
      %s440 = scalar_lea.vmem %s2, %s439
      %p441 = pneg %p106
      %p442 = pneg %p103
      %p443 = scmp.lt.s32.totalorder %s26, 1
      %s444 = scalar_select %p443, %s26, 1
      %s445 = smul.addr %s444, 4
      %s446 = smul.addr %s445, 4
      %s447 = scalar_lea.vmem %s3, %s446
      %p448 = pneg %p132
      %p449 = pneg %p129
      %p450 = scmp.lt.s32.totalorder %s26, 1
      %s451 = scalar_select %p450, %s26, 1
      %s452 = smul.addr %s451, 4
      %s453 = smul.addr %s452, 4
      %s454 = scalar_lea.vmem %s4, %s453
      %p455 = pneg %p158
      %p456 = pneg %p155
      %p457 = scmp.lt.s32.totalorder %s26, 1
      %s458 = scalar_select %p457, %s26, 1
      %s459 = smul.addr %s458, 4
      %s460 = smul.addr %s459, 4
      %s461 = scalar_lea.vmem %s5, %s460
      %p462 = pneg %p184
      %p463 = pneg %p181
      %p464 = scmp.lt.s32.totalorder %s26, 1
      %s465 = scalar_select %p464, %s26, 1
      %s466 = smul.addr %s465, 4
      %s467 = smul.addr %s466, 4
      %s468 = scalar_lea.vmem %s6, %s467
      %p469 = pneg %p210
      %p470 = pneg %p207
      %p471 = scmp.lt.s32.totalorder %s26, 1
      %s472 = scalar_select %p471, %s26, 1
      %s473 = smul.addr %s472, 4
      %s474 = smul.addr %s473, 4
      %s475 = scalar_lea.vmem %s7, %s474
      %p476 = pneg %p236
      %p477 = pneg %p233
      %p478 = scmp.lt.s32.totalorder %s26, 1
      %s479 = scalar_select %p478, %s26, 1
      %s480 = smul.addr %s479, 8
      %s481 = smul.addr %s480, 4
      %s482 = scalar_lea.vmem %s8, %s481
      %p483 = pneg %p262
      %p484 = pneg %p259
      %p485 = scmp.lt.s32.totalorder %s26, 1
      %s486 = scalar_select %p485, %s26, 1
      %s487 = smul.addr %s486, 2
      %s488 = smul.addr %s487, 8
      %s489 = scalar_lea.vmem %s9, %s488
      %p490 = pneg %p288
      %p491 = pneg %p285
      %p492 = pneg %p314
      %p493 = pneg %p311
      %s494 = smul.u32 2, %s25
      %p495 = scmp.lt.s32.totalorder %s494, 1
      %s496 = scalar_select %p495, %s494, 1
      %s497 = smul.addr %s496, 8
      %s498 = scalar_lea.vmem %s10, %s497
      %s499 = smul.u32 2, %s25
      %p500 = scmp.lt.s32.totalorder %s499, 1
      %s501 = scalar_select %p500, %s499, 1
      %s502 = smul.addr %s501, 8
      %s503 = scalar_lea.vmem %s0, %s502
      %s504 = smul.u32 2, %s25
      %s505 = smul.u32 2, %s25
      %p506 = scmp.lt.s32.totalorder %s505, 1
      %s507 = scalar_select %p506, %s505, 1
      %s508 = smul.addr %s507, 8
      %s509 = scalar_lea.vmem %s1, %s508
      %s510 = smul.u32 2, %s25
      %p511 = scmp.lt.s32.totalorder %s26, 1
      %s512 = scalar_select %p511, %s26, 1
      %s513 = smul.addr %s512, 4
      %s514 = smul.addr %s513, 4
      %s515 = scalar_lea.vmem %s2, %s514
      %p516 = scmp.lt.s32.totalorder %s26, 1
      %s517 = scalar_select %p516, %s26, 1
      %s518 = smul.addr %s517, 4
      %s519 = smul.addr %s518, 4
      %s520 = scalar_lea.vmem %s3, %s519
      %p521 = scmp.lt.s32.totalorder %s26, 1
      %s522 = scalar_select %p521, %s26, 1
      %s523 = smul.addr %s522, 4
      %s524 = smul.addr %s523, 4
      %s525 = scalar_lea.vmem %s4, %s524
      %p526 = scmp.lt.s32.totalorder %s26, 1
      %s527 = scalar_select %p526, %s26, 1
      %s528 = smul.addr %s527, 4
      %s529 = smul.addr %s528, 4
      %s530 = scalar_lea.vmem %s5, %s529
      %p531 = scmp.lt.s32.totalorder %s26, 1
      %s532 = scalar_select %p531, %s26, 1
      %s533 = smul.addr %s532, 4
      %s534 = smul.addr %s533, 4
      %s535 = scalar_lea.vmem %s6, %s534
      %p536 = scmp.lt.s32.totalorder %s26, 1
      %s537 = scalar_select %p536, %s26, 1
      %s538 = smul.addr %s537, 4
      %s539 = smul.addr %s538, 4
      %s540 = scalar_lea.vmem %s7, %s539
      %p541 = scmp.lt.s32.totalorder %s26, 1
      %s542 = scalar_select %p541, %s26, 1
      %s543 = smul.addr %s542, 8
      %s544 = smul.addr %s543, 4
      %s545 = scalar_lea.vmem %s8, %s544
      %p546 = scmp.lt.s32.totalorder %s26, 1
      %s547 = scalar_select %p546, %s26, 1
      %s548 = smul.addr %s547, 2
      %s549 = smul.addr %s548, 8
      %s550 = scalar_lea.vmem %s9, %s549
      %s551 = smul.u32 2, %s25
      %p552 = scmp.lt.s32.totalorder %s551, 1
      %s553 = scalar_select %p552, %s551, 1
      %s554 = smul.addr %s553, 8
      %s555 = scalar_lea.vmem %s10, %s554
      %s556 = smul.u32 2, %s25
      %p558 = scmp.eq.s32.totalorder %s26, 0
      // Predicated region
      $region61: #{transformer_decoder_forward.2} parent=59 // pred_check
        %p559 = pneg %p558
      $region62: #{transformer_decoder_forward.2} parent=59 // pred_check_branch
        %561 = sbr.rel (%p559) target = $region64
      $region63: #{transformer_decoder_forward.2} parent=59 // pred_region
        %v562 = vld [vmem:[%s503] sm:$0xff]
        %v563 = vld [vmem:[%s503 + $0x8] sm:$0xff]
        %vm564 = vcmask 261120
        %565 = vst.msk [vmem:[%s555] sm:$0xff] %vm564, %v562
        %566 = vst.msk [vmem:[%s555 + $0x8] sm:$0xff] %vm564, %v563
      $region64: #{transformer_decoder_forward.2} parent=59 // pred_fallthru
        _
      %v567 = vld [vmem:[%s550] sm:$0xff]
      %v568 = vld [vmem:[%s550 + $0x8] sm:$0x1f]
      %v569 = vld [vmem:[%s555] sm:$0xff]
      %v570 = vld [vmem:[%s555 + $0x8] sm:$0xff]
      %v571 = vld [vmem:[%s509] sm:$0xff]
      %v572 = vld [vmem:[%s509 + $0x8] sm:$0xff]
      %v573 = vld [vmem:[%s515] sm:$0xf]
      %v574 = vld [vmem:[%s515 + $0x4] sm:$0xf]
      %v575 = vld [vmem:[%s515 + $0x8] sm:$0xf]
      %v576 = vld [vmem:[%s515 + $0xc] sm:$0xf]
      %v577 = vpack.c.bf16 %v570, %v569
      %v578 = vlaneseq
      %v579 = vshrl.u32 %v578, 7
      %v580 = vsub.s32 0, %v579
      %v581 = vrot.slane %v567, %v580
      %v586 = vunpack.c.l.b16 %v573
      %v587 = vunpack.c.l.b16 %v574
      %v588 = vunpack.c.l.b16 %v575
      %v589 = vunpack.c.l.b16 %v576
      %v590 = vpack.c.b16 %v587, %v586
      %v591 = vpack.c.b16 %v589, %v588
      %vm594 = vcmask 261120
      %v596 = vsel %vm594, %v577, 0
      %598 = vmatprep.subr.bf16.mxu0 0
      %599 = vmatpush1.bf16.msra.mxu0 %v590
      %600 = vmatprep.subr.bf16.mxu0 0
      %601 = vmatpush1.bf16.msra.mxu0 %v591
      %602 = vmatprep.subr.bf16.mxu0 0
      %603 = vmatpush1.bf16.msra.mxu0 0
      %604 = vmatprep.subr.bf16.mxu0 0
      %605 = vmatpush1.bf16.msra.mxu0 0
      %606 = vmatprep.subr.bf16.mxu0 0
      %607 = vmatpush1.bf16.msra.mxu0 0
      %608 = vmatprep.subr.bf16.mxu0 0
      %609 = vmatpush1.bf16.msra.mxu0 0
      %610 = vmatprep.subr.bf16.mxu0 0
      %611 = vmatpush1.bf16.msra.mxu0 0
      %612 = vmatprep.subr.bf16.mxu0 0
      %613 = vmatpush1.bf16.msra.mxu0 0
      %614 = vmatprep.subr.bf16.mxu0 0
      %615 = vmatpush1.bf16.msra.mxu0 0
      %616 = vmatprep.subr.bf16.mxu0 0
      %617 = vmatpush1.bf16.msra.mxu0 0
      %618 = vmatprep.subr.bf16.mxu0 0
      %619 = vmatpush1.bf16.msra.mxu0 0
      %620 = vmatprep.subr.bf16.mxu0 0
      %621 = vmatpush1.bf16.msra.mxu0 0
      %622 = vmatprep.subr.bf16.mxu0 0
      %623 = vmatpush1.bf16.msra.mxu0 0
      %624 = vmatprep.subr.bf16.mxu0 0
      %625 = vmatpush1.bf16.msra.mxu0 0
      %626 = vmatprep.subr.bf16.mxu0 0
      %627 = vmatpush1.bf16.msra.mxu0 0
      %628 = vmatprep.subr.bf16.mxu0 0
      %629 = vmatpush1.bf16.msra.mxu0 0
      %630 = vmatprep.mubr.bf16.mxu0 0
      %631 = vmatmul.mubr.bf16.gmra.mrb[0].mxu0 %v596
      %v632 = vpop.f32.mrb[0].mxu0
      %v633 = vadd.f32 %v581, %v632
      %v634 = vpop.f32.mrb[0].mxu0
      %v635 = vpop.f32.mrb[0].mxu0
      %v636 = vadd.f32 %v581, %v635
      %v637 = vpop.f32.mrb[0].mxu0
      %638 = vdwg.mxu0
      %v639 = vlaneseq
      %v640 = vshrl.u32 %v639, 7
      %v641 = vlaneseq
      %v642 = vand.u32 %v641, 127
      %vm643 = vcmp.gt.s32.totalorder %v642, %v640
      %v644 = vsel %vm643, -1e+30, 0.0
      %v645 = vmul.f32 %v633, 0.35355338
      %v646 = vmul.f32 %v636, 0.35355338
      %v647 = vpack.c.bf16 %v645, %v645
      %v648 = vpack.c.bf16 %v646, %v646
      %v649 = vpack.c.bf16 %v633, %v633
      %v650 = vpack.c.bf16 %v636, %v636
      %652 = vrot.lane.b32.xlu0 %v649, 96
      %v653 = vpop.permute.xlu0 %652
      %vm654 = vcmask 64512
      %v656 = vsel %vm654, %v647, 0
      %v659 = vsel %vm654, %v653, 0
      %661 = vmatprep.subr.bf16.mxu0 0
      %662 = vmatpush1.bf16.xpose.msra.mxu0 %v659
      %663 = vmatprep.subr.bf16.mxu0 0
      %664 = vmatpush1.bf16.xpose.msra.mxu0 0
      %665 = vmatprep.subr.bf16.mxu0 0
      %666 = vmatpush1.bf16.xpose.msra.mxu0 0
      %667 = vmatprep.subr.bf16.mxu0 0
      %668 = vmatpush1.bf16.xpose.msra.mxu0 0
      %669 = vmatprep.subr.bf16.mxu0 0
      %670 = vmatpush1.bf16.xpose.msra.mxu0 0
      %671 = vmatprep.subr.bf16.mxu0 0
      %672 = vmatpush1.bf16.xpose.msra.mxu0 0
      %673 = vmatprep.subr.bf16.mxu0 0
      %674 = vmatpush1.bf16.xpose.msra.mxu0 0
      %675 = vmatprep.subr.bf16.mxu0 0
      %676 = vmatpush1.bf16.xpose.msra.mxu0 0
      %677 = vmatprep.subr.bf16.mxu0 0
      %678 = vmatpush1.bf16.xpose.msra.mxu0 0
      %679 = vmatprep.subr.bf16.mxu0 0
      %680 = vmatpush1.bf16.xpose.msra.mxu0 0
      %681 = vmatprep.subr.bf16.mxu0 0
      %682 = vmatpush1.bf16.xpose.msra.mxu0 0
      %683 = vmatprep.subr.bf16.mxu0 0
      %684 = vmatpush1.bf16.xpose.msra.mxu0 0
      %685 = vmatprep.subr.bf16.mxu0 0
      %686 = vmatpush1.bf16.xpose.msra.mxu0 0
      %687 = vmatprep.subr.bf16.mxu0 0
      %688 = vmatpush1.bf16.xpose.msra.mxu0 0
      %689 = vmatprep.subr.bf16.mxu0 0
      %690 = vmatpush1.bf16.xpose.msra.mxu0 0
      %691 = vmatprep.subr.bf16.mxu0 0
      %692 = vmatpush1.bf16.xpose.msra.mxu0 0
      %693 = vmatprep.mubr.bf16.mxu0 0
      %694 = vmatmul.mubr.bf16.gmra.mrb[0].mxu0 %v656
      %v695 = vpop.f32.mrb[0].mxu0
      %v696 = vadd.f32 %v644, %v695
      %v697 = vpop.f32.mrb[0].mxu0
      %v698 = vpop.f32.mrb[0].mxu0
      %v699 = vpop.f32.mrb[0].mxu0
      %700 = vdwg.mxu0
      %702 = vrot.lane.b32.xlu0 %v650, 96
      %v703 = vpop.permute.xlu0 %702
      %v705 = vsel %vm654, %v648, 0
      %v708 = vsel %vm654, %v703, 0
      %710 = vmatprep.subr.bf16.mxu0 0
      %711 = vmatpush1.bf16.xpose.msra.mxu0 %v708
      %712 = vmatprep.subr.bf16.mxu0 0
      %713 = vmatpush1.bf16.xpose.msra.mxu0 0
      %714 = vmatprep.subr.bf16.mxu0 0
      %715 = vmatpush1.bf16.xpose.msra.mxu0 0
      %716 = vmatprep.subr.bf16.mxu0 0
      %717 = vmatpush1.bf16.xpose.msra.mxu0 0
      %718 = vmatprep.subr.bf16.mxu0 0
      %719 = vmatpush1.bf16.xpose.msra.mxu0 0
      %720 = vmatprep.subr.bf16.mxu0 0
      %721 = vmatpush1.bf16.xpose.msra.mxu0 0
      %722 = vmatprep.subr.bf16.mxu0 0
      %723 = vmatpush1.bf16.xpose.msra.mxu0 0
      %724 = vmatprep.subr.bf16.mxu0 0
      %725 = vmatpush1.bf16.xpose.msra.mxu0 0
      %726 = vmatprep.subr.bf16.mxu0 0
      %727 = vmatpush1.bf16.xpose.msra.mxu0 0
      %728 = vmatprep.subr.bf16.mxu0 0
      %729 = vmatpush1.bf16.xpose.msra.mxu0 0
      %730 = vmatprep.subr.bf16.mxu0 0
      %731 = vmatpush1.bf16.xpose.msra.mxu0 0
      %732 = vmatprep.subr.bf16.mxu0 0
      %733 = vmatpush1.bf16.xpose.msra.mxu0 0
      %734 = vmatprep.subr.bf16.mxu0 0
      %735 = vmatpush1.bf16.xpose.msra.mxu0 0
      %736 = vmatprep.subr.bf16.mxu0 0
      %737 = vmatpush1.bf16.xpose.msra.mxu0 0
      %738 = vmatprep.subr.bf16.mxu0 0
      %739 = vmatpush1.bf16.xpose.msra.mxu0 0
      %740 = vmatprep.subr.bf16.mxu0 0
      %741 = vmatpush1.bf16.xpose.msra.mxu0 0
      %742 = vmatprep.mubr.bf16.mxu0 0
      %743 = vmatmul.mubr.bf16.gmra.mrb[0].mxu0 %v705
      %v744 = vpop.f32.mrb[0].mxu0
      %v745 = vadd.f32 %v644, %v744
      %v746 = vpop.f32.mrb[0].mxu0
      %v747 = vpop.f32.mrb[0].mxu0
      %v748 = vpop.f32.mrb[0].mxu0
      %749 = vdwg.mxu0
      %v750 = vsel %vm654, %v696, -inf
      %751 = vmax.xlane.f32.xlu0 %v750
      %v752 = vpop.xlane.xlu0 %751
      %v753 = vsel %vm654, %v745, -inf
      %754 = vmax.xlane.f32.xlu0 %v753
      %v755 = vpop.xlane.xlu0 %754
      %v756 = vsub.f32 %v696, %v752
      %v757 = vsub.f32 %v745, %v755
      %v758 = vmul.f32 %v756, 1.442695
      %v759 = vpow.pop %v758
      %v760 = vmul.f32 %v757, 1.442695
      %v761 = vpow.pop %v760
      %v762 = vsel %vm654, %v759, 0.0
      %763 = vadd.xlane.f32.xlu0 %v762
      %v764 = vpop.xlane.xlu0 %763
      %v765 = vsel %vm654, %v761, 0.0
      %766 = vadd.xlane.f32.xlu0 %v765
      %v767 = vpop.xlane.xlu0 %766
      %v768 = vrcp.pop %v764
      %v769 = vrcp.pop %v767
      %v770 = vmul.f32 %v759, %v768
      %v771 = vmul.f32 %v761, %v769
      %v772 = vpack.c.bf16 %v770, %v770
      %v773 = vpack.c.bf16 %v771, %v771
      %774 = vrot.lane.b32.xlu0 %v649, 64
      %v775 = vpop.permute.xlu0 %774
      %v777 = vsel %vm654, %v772, 0
      %vm779 = vcmask 1043456
      %v781 = vsel %vm779, %v775, 0
      %783 = vmatprep.subr.bf16.mxu0 0
      %784 = vmatpush1.bf16.msra.mxu0 %v781
      %785 = vmatprep.subr.bf16.mxu0 0
      %786 = vmatpush1.bf16.msra.mxu0 0
      %787 = vmatprep.subr.bf16.mxu0 0
      %788 = vmatpush1.bf16.msra.mxu0 0
      %789 = vmatprep.subr.bf16.mxu0 0
      %790 = vmatpush1.bf16.msra.mxu0 0
      %791 = vmatprep.subr.bf16.mxu0 0
      %792 = vmatpush1.bf16.msra.mxu0 0
      %793 = vmatprep.subr.bf16.mxu0 0
      %794 = vmatpush1.bf16.msra.mxu0 0
      %795 = vmatprep.subr.bf16.mxu0 0
      %796 = vmatpush1.bf16.msra.mxu0 0
      %797 = vmatprep.subr.bf16.mxu0 0
      %798 = vmatpush1.bf16.msra.mxu0 0
      %799 = vmatprep.subr.bf16.mxu0 0
      %800 = vmatpush1.bf16.msra.mxu0 0
      %801 = vmatprep.subr.bf16.mxu0 0
      %802 = vmatpush1.bf16.msra.mxu0 0
      %803 = vmatprep.subr.bf16.mxu0 0
      %804 = vmatpush1.bf16.msra.mxu0 0
      %805 = vmatprep.subr.bf16.mxu0 0
      %806 = vmatpush1.bf16.msra.mxu0 0
      %807 = vmatprep.subr.bf16.mxu0 0
      %808 = vmatpush1.bf16.msra.mxu0 0
      %809 = vmatprep.subr.bf16.mxu0 0
      %810 = vmatpush1.bf16.msra.mxu0 0
      %811 = vmatprep.subr.bf16.mxu0 0
      %812 = vmatpush1.bf16.msra.mxu0 0
      %813 = vmatprep.subr.bf16.mxu0 0
      %814 = vmatpush1.bf16.msra.mxu0 0
      %815 = vmatprep.mubr.bf16.mxu0 0
      %816 = vmatmul.mubr.bf16.gmra.mrb[0].mxu0 %v777
      %v817 = vpop.f32.mrb[0].mxu0
      %v818 = vadd.f32 0.0, %v817
      %v819 = vpop.f32.mrb[0].mxu0
      %v820 = vpop.f32.mrb[0].mxu0
      %v821 = vpop.f32.mrb[0].mxu0
      %822 = vdwg.mxu0
      %823 = vrot.lane.b32.xlu0 %v650, 64
      %v824 = vpop.permute.xlu0 %823
      %v826 = vsel %vm654, %v773, 0
      %v829 = vsel %vm779, %v824, 0
      %831 = vmatprep.subr.bf16.mxu0 0
      %832 = vmatpush1.bf16.msra.mxu0 %v829
      %833 = vmatprep.subr.bf16.mxu0 0
      %834 = vmatpush1.bf16.msra.mxu0 0
      %835 = vmatprep.subr.bf16.mxu0 0
      %836 = vmatpush1.bf16.msra.mxu0 0
      %837 = vmatprep.subr.bf16.mxu0 0
      %838 = vmatpush1.bf16.msra.mxu0 0
      %839 = vmatprep.subr.bf16.mxu0 0
      %840 = vmatpush1.bf16.msra.mxu0 0
      %841 = vmatprep.subr.bf16.mxu0 0
      %842 = vmatpush1.bf16.msra.mxu0 0
      %843 = vmatprep.subr.bf16.mxu0 0
      %844 = vmatpush1.bf16.msra.mxu0 0
      %845 = vmatprep.subr.bf16.mxu0 0
      %846 = vmatpush1.bf16.msra.mxu0 0
      %847 = vmatprep.subr.bf16.mxu0 0
      %848 = vmatpush1.bf16.msra.mxu0 0
      %849 = vmatprep.subr.bf16.mxu0 0
      %850 = vmatpush1.bf16.msra.mxu0 0
      %851 = vmatprep.subr.bf16.mxu0 0
      %852 = vmatpush1.bf16.msra.mxu0 0
      %853 = vmatprep.subr.bf16.mxu0 0
      %854 = vmatpush1.bf16.msra.mxu0 0
      %855 = vmatprep.subr.bf16.mxu0 0
      %856 = vmatpush1.bf16.msra.mxu0 0
      %857 = vmatprep.subr.bf16.mxu0 0
      %858 = vmatpush1.bf16.msra.mxu0 0
      %859 = vmatprep.subr.bf16.mxu0 0
      %860 = vmatpush1.bf16.msra.mxu0 0
      %861 = vmatprep.subr.bf16.mxu0 0
      %862 = vmatpush1.bf16.msra.mxu0 0
      %863 = vmatprep.mubr.bf16.mxu0 0
      %864 = vmatmul.mubr.bf16.gmra.mrb[0].mxu0 %v826
      %v865 = vpop.f32.mrb[0].mxu0
      %v866 = vadd.f32 0.0, %v865
      %v867 = vpop.f32.mrb[0].mxu0
      %v868 = vpop.f32.mrb[0].mxu0
      %v869 = vpop.f32.mrb[0].mxu0
      %870 = vdwg.mxu0
      %871 = vst.msk [vmem:[#allocation2] sm:$0xff] %vm654, %v818
      %872 = vst.msk [vmem:[#allocation2 + $0x8] sm:$0xff] %vm654, %v866
      %874 = vrot.lane.b32.xlu0 %v647, 120
      %v875 = vpop.permute.xlu0 %874
      %876 = vrot.lane.b32.xlu0 %v649, 88
      %v877 = vpop.permute.xlu0 %876
      %v879 = vsel %vm654, %v875, 0
      %v882 = vsel %vm654, %v877, 0
      %884 = vmatprep.subr.bf16.mxu0 0
      %885 = vmatpush1.bf16.xpose.msra.mxu0 %v882
      %886 = vmatprep.subr.bf16.mxu0 0
      %887 = vmatpush1.bf16.xpose.msra.mxu0 0
      %888 = vmatprep.subr.bf16.mxu0 0
      %889 = vmatpush1.bf16.xpose.msra.mxu0 0
      %890 = vmatprep.subr.bf16.mxu0 0
      %891 = vmatpush1.bf16.xpose.msra.mxu0 0
      %892 = vmatprep.subr.bf16.mxu0 0
      %893 = vmatpush1.bf16.xpose.msra.mxu0 0
      %894 = vmatprep.subr.bf16.mxu0 0
      %895 = vmatpush1.bf16.xpose.msra.mxu0 0
      %896 = vmatprep.subr.bf16.mxu0 0
      %897 = vmatpush1.bf16.xpose.msra.mxu0 0
      %898 = vmatprep.subr.bf16.mxu0 0
      %899 = vmatpush1.bf16.xpose.msra.mxu0 0
      %900 = vmatprep.subr.bf16.mxu0 0
      %901 = vmatpush1.bf16.xpose.msra.mxu0 0
      %902 = vmatprep.subr.bf16.mxu0 0
      %903 = vmatpush1.bf16.xpose.msra.mxu0 0
      %904 = vmatprep.subr.bf16.mxu0 0
      %905 = vmatpush1.bf16.xpose.msra.mxu0 0
      %906 = vmatprep.subr.bf16.mxu0 0
      %907 = vmatpush1.bf16.xpose.msra.mxu0 0
      %908 = vmatprep.subr.bf16.mxu0 0
      %909 = vmatpush1.bf16.xpose.msra.mxu0 0
      %910 = vmatprep.subr.bf16.mxu0 0
      %911 = vmatpush1.bf16.xpose.msra.mxu0 0
      %912 = vmatprep.subr.bf16.mxu0 0
      %913 = vmatpush1.bf16.xpose.msra.mxu0 0
      %914 = vmatprep.subr.bf16.mxu0 0
      %915 = vmatpush1.bf16.xpose.msra.mxu0 0
      %916 = vmatprep.mubr.bf16.mxu0 0
      %917 = vmatmul.mubr.bf16.gmra.mrb[0].mxu0 %v879
      %v918 = vpop.f32.mrb[0].mxu0
      %v919 = vadd.f32 %v644, %v918
      %v920 = vpop.f32.mrb[0].mxu0
      %v921 = vpop.f32.mrb[0].mxu0
      %v922 = vpop.f32.mrb[0].mxu0
      %923 = vdwg.mxu0
      %925 = vrot.lane.b32.xlu0 %v648, 120
      %v926 = vpop.permute.xlu0 %925
      %927 = vrot.lane.b32.xlu0 %v650, 88
      %v928 = vpop.permute.xlu0 %927
      %v930 = vsel %vm654, %v926, 0
      %v933 = vsel %vm654, %v928, 0
      %935 = vmatprep.subr.bf16.mxu0 0
      %936 = vmatpush1.bf16.xpose.msra.mxu0 %v933
      %937 = vmatprep.subr.bf16.mxu0 0
      %938 = vmatpush1.bf16.xpose.msra.mxu0 0
      %939 = vmatprep.subr.bf16.mxu0 0
      %940 = vmatpush1.bf16.xpose.msra.mxu0 0
      %941 = vmatprep.subr.bf16.mxu0 0
      %942 = vmatpush1.bf16.xpose.msra.mxu0 0
      %943 = vmatprep.subr.bf16.mxu0 0
      %944 = vmatpush1.bf16.xpose.msra.mxu0 0
      %945 = vmatprep.subr.bf16.mxu0 0
      %946 = vmatpush1.bf16.xpose.msra.mxu0 0
      %947 = vmatprep.subr.bf16.mxu0 0
      %948 = vmatpush1.bf16.xpose.msra.mxu0 0
      %949 = vmatprep.subr.bf16.mxu0 0
      %950 = vmatpush1.bf16.xpose.msra.mxu0 0
      %951 = vmatprep.subr.bf16.mxu0 0
      %952 = vmatpush1.bf16.xpose.msra.mxu0 0
      %953 = vmatprep.subr.bf16.mxu0 0
      %954 = vmatpush1.bf16.xpose.msra.mxu0 0
      %955 = vmatprep.subr.bf16.mxu0 0
      %956 = vmatpush1.bf16.xpose.msra.mxu0 0
      %957 = vmatprep.subr.bf16.mxu0 0
      %958 = vmatpush1.bf16.xpose.msra.mxu0 0
      %959 = vmatprep.subr.bf16.mxu0 0
      %960 = vmatpush1.bf16.xpose.msra.mxu0 0
      %961 = vmatprep.subr.bf16.mxu0 0
      %962 = vmatpush1.bf16.xpose.msra.mxu0 0
      %963 = vmatprep.subr.bf16.mxu0 0
      %964 = vmatpush1.bf16.xpose.msra.mxu0 0
      %965 = vmatprep.subr.bf16.mxu0 0
      %966 = vmatpush1.bf16.xpose.msra.mxu0 0
      %967 = vmatprep.mubr.bf16.mxu0 0
      %968 = vmatmul.mubr.bf16.gmra.mrb[0].mxu0 %v930
      %v969 = vpop.f32.mrb[0].mxu0
      %v970 = vadd.f32 %v644, %v969
      %v971 = vpop.f32.mrb[0].mxu0
      %v972 = vpop.f32.mrb[0].mxu0
      %v973 = vpop.f32.mrb[0].mxu0
      %974 = vdwg.mxu0
      %v975 = vsel %vm654, %v919, -inf
      %976 = vmax.xlane.f32.xlu0 %v975
      %v977 = vpop.xlane.xlu0 %976
      %v978 = vsel %vm654, %v970, -inf
      %979 = vmax.xlane.f32.xlu0 %v978
      %v980 = vpop.xlane.xlu0 %979
      %v981 = vsub.f32 %v919, %v977
      %v982 = vsub.f32 %v970, %v980
      %v983 = vmul.f32 %v981, 1.442695
      %v984 = vpow.pop %v983
      %v985 = vmul.f32 %v982, 1.442695
      %v986 = vpow.pop %v985
      %v987 = vsel %vm654, %v984, 0.0
      %988 = vadd.xlane.f32.xlu0 %v987
      %v989 = vpop.xlane.xlu0 %988
      %v990 = vsel %vm654, %v986, 0.0
      %991 = vadd.xlane.f32.xlu0 %v990
      %v992 = vpop.xlane.xlu0 %991
      %v993 = vrcp.pop %v989
      %v994 = vrcp.pop %v992
      %v995 = vmul.f32 %v984, %v993
      %v996 = vmul.f32 %v986, %v994
      %v997 = vpack.c.bf16 %v995, %v995
      %v998 = vpack.c.bf16 %v996, %v996
      %999 = vrot.lane.b32.xlu0 %v649, 56
      %v1000 = vpop.permute.xlu0 %999
      %v1002 = vsel %vm654, %v997, 0
      %v1005 = vsel %vm779, %v1000, 0
      %1007 = vmatprep.subr.bf16.mxu0 0
      %1008 = vmatpush1.bf16.msra.mxu0 %v1005
      %1009 = vmatprep.subr.bf16.mxu0 0
      %1010 = vmatpush1.bf16.msra.mxu0 0
      %1011 = vmatprep.subr.bf16.mxu0 0
      %1012 = vmatpush1.bf16.msra.mxu0 0
      %1013 = vmatprep.subr.bf16.mxu0 0
      %1014 = vmatpush1.bf16.msra.mxu0 0
      %1015 = vmatprep.subr.bf16.mxu0 0
      %1016 = vmatpush1.bf16.msra.mxu0 0
      %1017 = vmatprep.subr.bf16.mxu0 0
      %1018 = vmatpush1.bf16.msra.mxu0 0
      %1019 = vmatprep.subr.bf16.mxu0 0
      %1020 = vmatpush1.bf16.msra.mxu0 0
      %1021 = vmatprep.subr.bf16.mxu0 0
      %1022 = vmatpush1.bf16.msra.mxu0 0
      %1023 = vmatprep.subr.bf16.mxu0 0
      %1024 = vmatpush1.bf16.msra.mxu0 0
      %1025 = vmatprep.subr.bf16.mxu0 0
      %1026 = vmatpush1.bf16.msra.mxu0 0
      %1027 = vmatprep.subr.bf16.mxu0 0
      %1028 = vmatpush1.bf16.msra.mxu0 0
      %1029 = vmatprep.subr.bf16.mxu0 0
      %1030 = vmatpush1.bf16.msra.mxu0 0
      %1031 = vmatprep.subr.bf16.mxu0 0
      %1032 = vmatpush1.bf16.msra.mxu0 0
      %1033 = vmatprep.subr.bf16.mxu0 0
      %1034 = vmatpush1.bf16.msra.mxu0 0
      %1035 = vmatprep.subr.bf16.mxu0 0
      %1036 = vmatpush1.bf16.msra.mxu0 0
      %1037 = vmatprep.subr.bf16.mxu0 0
      %1038 = vmatpush1.bf16.msra.mxu0 0
      %1039 = vmatprep.mubr.bf16.mxu0 0
      %1040 = vmatmul.mubr.bf16.gmra.mrb[0].mxu0 %v1002
      %v1041 = vpop.f32.mrb[0].mxu0
      %v1042 = vadd.f32 0.0, %v1041
      %v1043 = vpop.f32.mrb[0].mxu0
      %v1044 = vpop.f32.mrb[0].mxu0
      %v1045 = vpop.f32.mrb[0].mxu0
      %1046 = vdwg.mxu0
      %1047 = vrot.lane.b32.xlu0 %v650, 56
      %v1048 = vpop.permute.xlu0 %1047
      %v1050 = vsel %vm654, %v998, 0
      %v1053 = vsel %vm779, %v1048, 0
      %1055 = vmatprep.subr.bf16.mxu0 0
      %1056 = vmatpush1.bf16.msra.mxu0 %v1053
      %1057 = vmatprep.subr.bf16.mxu0 0
      %1058 = vmatpush1.bf16.msra.mxu0 0
      %1059 = vmatprep.subr.bf16.mxu0 0
      %1060 = vmatpush1.bf16.msra.mxu0 0
      %1061 = vmatprep.subr.bf16.mxu0 0
      %1062 = vmatpush1.bf16.msra.mxu0 0
      %1063 = vmatprep.subr.bf16.mxu0 0
      %1064 = vmatpush1.bf16.msra.mxu0 0
      %1065 = vmatprep.subr.bf16.mxu0 0
      %1066 = vmatpush1.bf16.msra.mxu0 0
      %1067 = vmatprep.subr.bf16.mxu0 0
      %1068 = vmatpush1.bf16.msra.mxu0 0
      %1069 = vmatprep.subr.bf16.mxu0 0
      %1070 = vmatpush1.bf16.msra.mxu0 0
      %1071 = vmatprep.subr.bf16.mxu0 0
      %1072 = vmatpush1.bf16.msra.mxu0 0
      %1073 = vmatprep.subr.bf16.mxu0 0
      %1074 = vmatpush1.bf16.msra.mxu0 0
      %1075 = vmatprep.subr.bf16.mxu0 0
      %1076 = vmatpush1.bf16.msra.mxu0 0
      %1077 = vmatprep.subr.bf16.mxu0 0
      %1078 = vmatpush1.bf16.msra.mxu0 0
      %1079 = vmatprep.subr.bf16.mxu0 0
      %1080 = vmatpush1.bf16.msra.mxu0 0
      %1081 = vmatprep.subr.bf16.mxu0 0
      %1082 = vmatpush1.bf16.msra.mxu0 0
      %1083 = vmatprep.subr.bf16.mxu0 0
      %1084 = vmatpush1.bf16.msra.mxu0 0
      %1085 = vmatprep.subr.bf16.mxu0 0
      %1086 = vmatpush1.bf16.msra.mxu0 0
      %1087 = vmatprep.mubr.bf16.mxu0 0
      %1088 = vmatmul.mubr.bf16.gmra.mrb[0].mxu0 %v1050
      %v1089 = vpop.f32.mrb[0].mxu0
      %v1090 = vadd.f32 0.0, %v1089
      %v1091 = vpop.f32.mrb[0].mxu0
      %v1092 = vpop.f32.mrb[0].mxu0
      %v1093 = vpop.f32.mrb[0].mxu0
      %1094 = vdwg.mxu0
      %1097 = vrot.lane.b32.xlu0 %v1042, 8
      %v1098 = vpop.permute.xlu0 %1097
      %1099 = vrot.lane.b32.xlu0 %v1090, 8
      %v1100 = vpop.permute.xlu0 %1099
      %vm1103 = vcmask 130112
      %1104 = vst.msk [vmem:[#allocation2] sm:$0xff] %vm1103, %v1098
      %1105 = vst.msk [vmem:[#allocation2 + $0x8] sm:$0xff] %vm1103, %v1100
      %1106 = vrot.lane.b32.xlu0 %v647, 112
      %v1107 = vpop.permute.xlu0 %1106
      %1108 = vrot.lane.b32.xlu0 %v649, 80
      %v1109 = vpop.permute.xlu0 %1108
      %v1111 = vsel %vm654, %v1107, 0
      %v1114 = vsel %vm654, %v1109, 0
      %1116 = vmatprep.subr.bf16.mxu0 0
      %1117 = vmatpush1.bf16.xpose.msra.mxu0 %v1114
      %1118 = vmatprep.subr.bf16.mxu0 0
      %1119 = vmatpush1.bf16.xpose.msra.mxu0 0
      %1120 = vmatprep.subr.bf16.mxu0 0
      %1121 = vmatpush1.bf16.xpose.msra.mxu0 0
      %1122 = vmatprep.subr.bf16.mxu0 0
      %1123 = vmatpush1.bf16.xpose.msra.mxu0 0
      %1124 = vmatprep.subr.bf16.mxu0 0
      %1125 = vmatpush1.bf16.xpose.msra.mxu0 0
      %1126 = vmatprep.subr.bf16.mxu0 0
      %1127 = vmatpush1.bf16.xpose.msra.mxu0 0
      %1128 = vmatprep.subr.bf16.mxu0 0
      %1129 = vmatpush1.bf16.xpose.msra.mxu0 0
      %1130 = vmatprep.subr.bf16.mxu0 0
      %1131 = vmatpush1.bf16.xpose.msra.mxu0 0
      %1132 = vmatprep.subr.bf16.mxu0 0
      %1133 = vmatpush1.bf16.xpose.msra.mxu0 0
      %1134 = vmatprep.subr.bf16.mxu0 0
      %1135 = vmatpush1.bf16.xpose.msra.mxu0 0
      %1136 = vmatprep.subr.bf16.mxu0 0
      %1137 = vmatpush1.bf16.xpose.msra.mxu0 0
      %1138 = vmatprep.subr.bf16.mxu0 0
      %1139 = vmatpush1.bf16.xpose.msra.mxu0 0
      %1140 = vmatprep.subr.bf16.mxu0 0
      %1141 = vmatpush1.bf16.xpose.msra.mxu0 0
      %1142 = vmatprep.subr.bf16.mxu0 0
      %1143 = vmatpush1.bf16.xpose.msra.mxu0 0
      %1144 = vmatprep.subr.bf16.mxu0 0
      %1145 = vmatpush1.bf16.xpose.msra.mxu0 0
      %1146 = vmatprep.subr.bf16.mxu0 0
      %1147 = vmatpush1.bf16.xpose.msra.mxu0 0
      %1148 = vmatprep.mubr.bf16.mxu0 0
      %1149 = vmatmul.mubr.bf16.gmra.mrb[0].mxu0 %v1111
      %v1150 = vpop.f32.mrb[0].mxu0
      %v1151 = vadd.f32 %v644, %v1150
      %v1152 = vpop.f32.mrb[0].mxu0
      %v1153 = vpop.f32.mrb[0].mxu0
      %v1154 = vpop.f32.mrb[0].mxu0
      %1155 = vdwg.mxu0
      %1156 = vrot.lane.b32.xlu0 %v648, 112
      %v1157 = vpop.permute.xlu0 %1156
      %1158 = vrot.lane.b32.xlu0 %v650, 80
      %v1159 = vpop.permute.xlu0 %1158
      %v1161 = vsel %vm654, %v1157, 0
      %v1164 = vsel %vm654, %v1159, 0
      %1166 = vmatprep.subr.bf16.mxu0 0
      %1167 = vmatpush1.bf16.xpose.msra.mxu0 %v1164
      %1168 = vmatprep.subr.bf16.mxu0 0
      %1169 = vmatpush1.bf16.xpose.msra.mxu0 0
      %1170 = vmatprep.subr.bf16.mxu0 0
      %1171 = vmatpush1.bf16.xpose.msra.mxu0 0
      %1172 = vmatprep.subr.bf16.mxu0 0
      %1173 = vmatpush1.bf16.xpose.msra.mxu0 0
      %1174 = vmatprep.subr.bf16.mxu0 0
      %1175 = vmatpush1.bf16.xpose.msra.mxu0 0
      %1176 = vmatprep.subr.bf16.mxu0 0
      %1177 = vmatpush1.bf16.xpose.msra.mxu0 0
      %1178 = vmatprep.subr.bf16.mxu0 0
      %1179 = vmatpush1.bf16.xpose.msra.mxu0 0
      %1180 = vmatprep.subr.bf16.mxu0 0
      %1181 = vmatpush1.bf16.xpose.msra.mxu0 0
      %1182 = vmatprep.subr.bf16.mxu0 0
      %1183 = vmatpush1.bf16.xpose.msra.mxu0 0
      %1184 = vmatprep.subr.bf16.mxu0 0
      %1185 = vmatpush1.bf16.xpose.msra.mxu0 0
      %1186 = vmatprep.subr.bf16.mxu0 0
      %1187 = vmatpush1.bf16.xpose.msra.mxu0 0
      %1188 = vmatprep.subr.bf16.mxu0 0
      %1189 = vmatpush1.bf16.xpose.msra.mxu0 0
      %1190 = vmatprep.subr.bf16.mxu0 0
      %1191 = vmatpush1.bf16.xpose.msra.mxu0 0
      %1192 = vmatprep.subr.bf16.mxu0 0
      %1193 = vmatpush1.bf16.xpose.msra.mxu0 0
      %1194 = vmatprep.subr.bf16.mxu0 0
      %1195 = vmatpush1.bf16.xpose.msra.mxu0 0
      %1196 = vmatprep.subr.bf16.mxu0 0
      %1197 = vmatpush1.bf16.xpose.msra.mxu0 0
      %1198 = vmatprep.mubr.bf16.mxu0 0
      %1199 = vmatmul.mubr.bf16.gmra.mrb[0].mxu0 %v1161
      %v1200 = vpop.f32.mrb[0].mxu0
      %v1201 = vadd.f32 %v644, %v1200
      %v1202 = vpop.f32.mrb[0].mxu0
      %v1203 = vpop.f32.mrb[0].mxu0
      %v1204 = vpop.f32.mrb[0].mxu0
      %1205 = vdwg.mxu0
      %v1206 = vsel %vm654, %v1151, -inf
      %1207 = vmax.xlane.f32.xlu0 %v1206
      %v1208 = vpop.xlane.xlu0 %1207
      %v1209 = vsel %vm654, %v1201, -inf
      %1210 = vmax.xlane.f32.xlu0 %v1209
      %v1211 = vpop.xlane.xlu0 %1210
      %v1212 = vsub.f32 %v1151, %v1208
      %v1213 = vsub.f32 %v1201, %v1211
      %v1214 = vmul.f32 %v1212, 1.442695
      %v1215 = vpow.pop %v1214
      %v1216 = vmul.f32 %v1213, 1.442695
      %v1217 = vpow.pop %v1216
      %v1218 = vsel %vm654, %v1215, 0.0
      %1219 = vadd.xlane.f32.xlu0 %v1218
      %v1220 = vpop.xlane.xlu0 %1219
      %v1221 = vsel %vm654, %v1217, 0.0
      %1222 = vadd.xlane.f32.xlu0 %v1221
      %v1223 = vpop.xlane.xlu0 %1222
      %v1224 = vrcp.pop %v1220
      %v1225 = vrcp.pop %v1223
      %v1226 = vmul.f32 %v1215, %v1224
      %v1227 = vmul.f32 %v1217, %v1225
      %v1228 = vpack.c.bf16 %v1226, %v1226
      %v1229 = vpack.c.bf16 %v1227, %v1227
      %1230 = vrot.lane.b32.xlu0 %v649, 48
      %v1231 = vpop.permute.xlu0 %1230
      %v1233 = vsel %vm654, %v1228, 0
      %v1236 = vsel %vm779, %v1231, 0
      %1238 = vmatprep.subr.bf16.mxu0 0
      %1239 = vmatpush1.bf16.msra.mxu0 %v1236
      %1240 = vmatprep.subr.bf16.mxu0 0
      %1241 = vmatpush1.bf16.msra.mxu0 0
      %1242 = vmatprep.subr.bf16.mxu0 0
      %1243 = vmatpush1.bf16.msra.mxu0 0
      %1244 = vmatprep.subr.bf16.mxu0 0
      %1245 = vmatpush1.bf16.msra.mxu0 0
      %1246 = vmatprep.subr.bf16.mxu0 0
      %1247 = vmatpush1.bf16.msra.mxu0 0
      %1248 = vmatprep.subr.bf16.mxu0 0
      %1249 = vmatpush1.bf16.msra.mxu0 0
      %1250 = vmatprep.subr.bf16.mxu0 0
      %1251 = vmatpush1.bf16.msra.mxu0 0
      %1252 = vmatprep.subr.bf16.mxu0 0
      %1253 = vmatpush1.bf16.msra.mxu0 0
      %1254 = vmatprep.subr.bf16.mxu0 0
      %1255 = vmatpush1.bf16.msra.mxu0 0
      %1256 = vmatprep.subr.bf16.mxu0 0
      %1257 = vmatpush1.bf16.msra.mxu0 0
      %1258 = vmatprep.subr.bf16.mxu0 0
      %1259 = vmatpush1.bf16.msra.mxu0 0
      %1260 = vmatprep.subr.bf16.mxu0 0
      %1261 = vmatpush1.bf16.msra.mxu0 0
      %1262 = vmatprep.subr.bf16.mxu0 0
      %1263 = vmatpush1.bf16.msra.mxu0 0
      %1264 = vmatprep.subr.bf16.mxu0 0
      %1265 = vmatpush1.bf16.msra.mxu0 0
      %1266 = vmatprep.subr.bf16.mxu0 0
      %1267 = vmatpush1.bf16.msra.mxu0 0
      %1268 = vmatprep.subr.bf16.mxu0 0
      %1269 = vmatpush1.bf16.msra.mxu0 0
      %1270 = vmatprep.mubr.bf16.mxu0 0
      %1271 = vmatmul.mubr.bf16.gmra.mrb[0].mxu0 %v1233
      %v1272 = vpop.f32.mrb[0].mxu0
      %v1273 = vadd.f32 0.0, %v1272
      %v1274 = vpop.f32.mrb[0].mxu0
      %v1275 = vpop.f32.mrb[0].mxu0
      %v1276 = vpop.f32.mrb[0].mxu0
      %1277 = vdwg.mxu0
      %1278 = vrot.lane.b32.xlu0 %v650, 48
      %v1279 = vpop.permute.xlu0 %1278
      %v1281 = vsel %vm654, %v1229, 0
      %v1284 = vsel %vm779, %v1279, 0
      %1286 = vmatprep.subr.bf16.mxu0 0
      %1287 = vmatpush1.bf16.msra.mxu0 %v1284
      %1288 = vmatprep.subr.bf16.mxu0 0
      %1289 = vmatpush1.bf16.msra.mxu0 0
      %1290 = vmatprep.subr.bf16.mxu0 0
      %1291 = vmatpush1.bf16.msra.mxu0 0
      %1292 = vmatprep.subr.bf16.mxu0 0
      %1293 = vmatpush1.bf16.msra.mxu0 0
      %1294 = vmatprep.subr.bf16.mxu0 0
      %1295 = vmatpush1.bf16.msra.mxu0 0
      %1296 = vmatprep.subr.bf16.mxu0 0
      %1297 = vmatpush1.bf16.msra.mxu0 0
      %1298 = vmatprep.subr.bf16.mxu0 0
      %1299 = vmatpush1.bf16.msra.mxu0 0
      %1300 = vmatprep.subr.bf16.mxu0 0
      %1301 = vmatpush1.bf16.msra.mxu0 0
      %1302 = vmatprep.subr.bf16.mxu0 0
      %1303 = vmatpush1.bf16.msra.mxu0 0
      %1304 = vmatprep.subr.bf16.mxu0 0
      %1305 = vmatpush1.bf16.msra.mxu0 0
      %1306 = vmatprep.subr.bf16.mxu0 0
      %1307 = vmatpush1.bf16.msra.mxu0 0
      %1308 = vmatprep.subr.bf16.mxu0 0
      %1309 = vmatpush1.bf16.msra.mxu0 0
      %1310 = vmatprep.subr.bf16.mxu0 0
      %1311 = vmatpush1.bf16.msra.mxu0 0
      %1312 = vmatprep.subr.bf16.mxu0 0
      %1313 = vmatpush1.bf16.msra.mxu0 0
      %1314 = vmatprep.subr.bf16.mxu0 0
      %1315 = vmatpush1.bf16.msra.mxu0 0
      %1316 = vmatprep.subr.bf16.mxu0 0
      %1317 = vmatpush1.bf16.msra.mxu0 0
      %1318 = vmatprep.mubr.bf16.mxu0 0
      %1319 = vmatmul.mubr.bf16.gmra.mrb[0].mxu0 %v1281
      %v1320 = vpop.f32.mrb[0].mxu0
      %v1321 = vadd.f32 0.0, %v1320
      %v1322 = vpop.f32.mrb[0].mxu0
      %v1323 = vpop.f32.mrb[0].mxu0
      %v1324 = vpop.f32.mrb[0].mxu0
      %1325 = vdwg.mxu0
      %1328 = vrot.lane.b32.xlu0 %v1273, 16
      %v1329 = vpop.permute.xlu0 %1328
      %1330 = vrot.lane.b32.xlu0 %v1321, 16
      %v1331 = vpop.permute.xlu0 %1330
      %vm1334 = vcmask 195712
      %1335 = vst.msk [vmem:[#allocation2] sm:$0xff] %vm1334, %v1329
      %1336 = vst.msk [vmem:[#allocation2 + $0x8] sm:$0xff] %vm1334, %v1331
      %1337 = vrot.lane.b32.xlu0 %v647, 104
      %v1338 = vpop.permute.xlu0 %1337
      %1339 = vrot.lane.b32.xlu0 %v649, 72
      %v1340 = vpop.permute.xlu0 %1339
      %v1342 = vsel %vm654, %v1338, 0
      %v1345 = vsel %vm654, %v1340, 0
      %1347 = vmatprep.subr.bf16.mxu0 0
      %1348 = vmatpush1.bf16.xpose.msra.mxu0 %v1345
      %1349 = vmatprep.subr.bf16.mxu0 0
      %1350 = vmatpush1.bf16.xpose.msra.mxu0 0
      %1351 = vmatprep.subr.bf16.mxu0 0
      %1352 = vmatpush1.bf16.xpose.msra.mxu0 0
      %1353 = vmatprep.subr.bf16.mxu0 0
      %1354 = vmatpush1.bf16.xpose.msra.mxu0 0
      %1355 = vmatprep.subr.bf16.mxu0 0
      %1356 = vmatpush1.bf16.xpose.msra.mxu0 0
      %1357 = vmatprep.subr.bf16.mxu0 0
      %1358 = vmatpush1.bf16.xpose.msra.mxu0 0
      %1359 = vmatprep.subr.bf16.mxu0 0
      %1360 = vmatpush1.bf16.xpose.msra.mxu0 0
      %1361 = vmatprep.subr.bf16.mxu0 0
      %1362 = vmatpush1.bf16.xpose.msra.mxu0 0
      %1363 = vmatprep.subr.bf16.mxu0 0
      %1364 = vmatpush1.bf16.xpose.msra.mxu0 0
      %1365 = vmatprep.subr.bf16.mxu0 0
      %1366 = vmatpush1.bf16.xpose.msra.mxu0 0
      %1367 = vmatprep.subr.bf16.mxu0 0
      %1368 = vmatpush1.bf16.xpose.msra.mxu0 0
      %1369 = vmatprep.subr.bf16.mxu0 0
      %1370 = vmatpush1.bf16.xpose.msra.mxu0 0
      %1371 = vmatprep.subr.bf16.mxu0 0
      %1372 = vmatpush1.bf16.xpose.msra.mxu0 0
      %1373 = vmatprep.subr.bf16.mxu0 0
      %1374 = vmatpush1.bf16.xpose.msra.mxu0 0
      %1375 = vmatprep.subr.bf16.mxu0 0
      %1376 = vmatpush1.bf16.xpose.msra.mxu0 0
      %1377 = vmatprep.subr.bf16.mxu0 0
      %1378 = vmatpush1.bf16.xpose.msra.mxu0 0
      %1379 = vmatprep.mubr.bf16.mxu0 0
      %1380 = vmatmul.mubr.bf16.gmra.mrb[0].mxu0 %v1342
      %v1381 = vpop.f32.mrb[0].mxu0
      %v1382 = vadd.f32 %v644, %v1381
      %v1383 = vpop.f32.mrb[0].mxu0
      %v1384 = vpop.f32.mrb[0].mxu0
      %v1385 = vpop.f32.mrb[0].mxu0
      %1386 = vdwg.mxu0
      %1387 = vrot.lane.b32.xlu0 %v648, 104
      %v1388 = vpop.permute.xlu0 %1387
      %1389 = vrot.lane.b32.xlu0 %v650, 72
      %v1390 = vpop.permute.xlu0 %1389
      %v1392 = vsel %vm654, %v1388, 0
      %v1395 = vsel %vm654, %v1390, 0
      %1397 = vmatprep.subr.bf16.mxu0 0
      %1398 = vmatpush1.bf16.xpose.msra.mxu0 %v1395
      %1399 = vmatprep.subr.bf16.mxu0 0
      %1400 = vmatpush1.bf16.xpose.msra.mxu0 0
      %1401 = vmatprep.subr.bf16.mxu0 0
      %1402 = vmatpush1.bf16.xpose.msra.mxu0 0
      %1403 = vmatprep.subr.bf16.mxu0 0
      %1404 = vmatpush1.bf16.xpose.msra.mxu0 0
      %1405 = vmatprep.subr.bf16.mxu0 0
      %1406 = vmatpush1.bf16.xpose.msra.mxu0 0
      %1407 = vmatprep.subr.bf16.mxu0 0
      %1408 = vmatpush1.bf16.xpose.msra.mxu0 0
      %1409 = vmatprep.subr.bf16.mxu0 0
      %1410 = vmatpush1.bf16.xpose.msra.mxu0 0
      %1411 = vmatprep.subr.bf16.mxu0 0
      %1412 = vmatpush1.bf16.xpose.msra.mxu0 0
      %1413 = vmatprep.subr.bf16.mxu0 0
      %1414 = vmatpush1.bf16.xpose.msra.mxu0 0
      %1415 = vmatprep.subr.bf16.mxu0 0
      %1416 = vmatpush1.bf16.xpose.msra.mxu0 0
      %1417 = vmatprep.subr.bf16.mxu0 0
      %1418 = vmatpush1.bf16.xpose.msra.mxu0 0
      %1419 = vmatprep.subr.bf16.mxu0 0
      %1420 = vmatpush1.bf16.xpose.msra.mxu0 0
      %1421 = vmatprep.subr.bf16.mxu0 0
      %1422 = vmatpush1.bf16.xpose.msra.mxu0 0
      %1423 = vmatprep.subr.bf16.mxu0 0
      %1424 = vmatpush1.bf16.xpose.msra.mxu0 0
      %1425 = vmatprep.subr.bf16.mxu0 0
      %1426 = vmatpush1.bf16.xpose.msra.mxu0 0
      %1427 = vmatprep.subr.bf16.mxu0 0
      %1428 = vmatpush1.bf16.xpose.msra.mxu0 0
      %1429 = vmatprep.mubr.bf16.mxu0 0
      %1430 = vmatmul.mubr.bf16.gmra.mrb[0].mxu0 %v1392
      %v1431 = vpop.f32.mrb[0].mxu0
      %v1432 = vadd.f32 %v644, %v1431
      %v1433 = vpop.f32.mrb[0].mxu0
      %v1434 = vpop.f32.mrb[0].mxu0
      %v1435 = vpop.f32.mrb[0].mxu0
      %1436 = vdwg.mxu0
      %v1437 = vsel %vm654, %v1382, -inf
      %1438 = vmax.xlane.f32.xlu0 %v1437
      %v1439 = vpop.xlane.xlu0 %1438
      %v1440 = vsel %vm654, %v1432, -inf
      %1441 = vmax.xlane.f32.xlu0 %v1440
      %v1442 = vpop.xlane.xlu0 %1441
      %v1443 = vsub.f32 %v1382, %v1439
      %v1444 = vsub.f32 %v1432, %v1442
      %v1445 = vmul.f32 %v1443, 1.442695
      %v1446 = vpow.pop %v1445
      %v1447 = vmul.f32 %v1444, 1.442695
      %v1448 = vpow.pop %v1447
      %v1449 = vsel %vm654, %v1446, 0.0
      %1450 = vadd.xlane.f32.xlu0 %v1449
      %v1451 = vpop.xlane.xlu0 %1450
      %v1452 = vsel %vm654, %v1448, 0.0
      %1453 = vadd.xlane.f32.xlu0 %v1452
      %v1454 = vpop.xlane.xlu0 %1453
      %v1455 = vrcp.pop %v1451
      %v1456 = vrcp.pop %v1454
      %v1457 = vmul.f32 %v1446, %v1455
      %v1458 = vmul.f32 %v1448, %v1456
      %v1459 = vpack.c.bf16 %v1457, %v1457
      %v1460 = vpack.c.bf16 %v1458, %v1458
      %1461 = vrot.lane.b32.xlu0 %v649, 40
      %v1462 = vpop.permute.xlu0 %1461
      %v1464 = vsel %vm654, %v1459, 0
      %v1467 = vsel %vm779, %v1462, 0
      %1469 = vmatprep.subr.bf16.mxu0 0
      %1470 = vmatpush1.bf16.msra.mxu0 %v1467
      %1471 = vmatprep.subr.bf16.mxu0 0
      %1472 = vmatpush1.bf16.msra.mxu0 0
      %1473 = vmatprep.subr.bf16.mxu0 0
      %1474 = vmatpush1.bf16.msra.mxu0 0
      %1475 = vmatprep.subr.bf16.mxu0 0
      %1476 = vmatpush1.bf16.msra.mxu0 0
      %1477 = vmatprep.subr.bf16.mxu0 0
      %1478 = vmatpush1.bf16.msra.mxu0 0
      %1479 = vmatprep.subr.bf16.mxu0 0
      %1480 = vmatpush1.bf16.msra.mxu0 0
      %1481 = vmatprep.subr.bf16.mxu0 0
      %1482 = vmatpush1.bf16.msra.mxu0 0
      %1483 = vmatprep.subr.bf16.mxu0 0
      %1484 = vmatpush1.bf16.msra.mxu0 0
      %1485 = vmatprep.subr.bf16.mxu0 0
      %1486 = vmatpush1.bf16.msra.mxu0 0
      %1487 = vmatprep.subr.bf16.mxu0 0
      %1488 = vmatpush1.bf16.msra.mxu0 0
      %1489 = vmatprep.subr.bf16.mxu0 0
      %1490 = vmatpush1.bf16.msra.mxu0 0
      %1491 = vmatprep.subr.bf16.mxu0 0
      %1492 = vmatpush1.bf16.msra.mxu0 0
      %1493 = vmatprep.subr.bf16.mxu0 0
      %1494 = vmatpush1.bf16.msra.mxu0 0
      %1495 = vmatprep.subr.bf16.mxu0 0
      %1496 = vmatpush1.bf16.msra.mxu0 0
      %1497 = vmatprep.subr.bf16.mxu0 0
      %1498 = vmatpush1.bf16.msra.mxu0 0
      %1499 = vmatprep.subr.bf16.mxu0 0
      %1500 = vmatpush1.bf16.msra.mxu0 0
      %1501 = vmatprep.mubr.bf16.mxu0 0
      %1502 = vmatmul.mubr.bf16.gmra.mrb[0].mxu0 %v1464
      %v1503 = vpop.f32.mrb[0].mxu0
      %v1504 = vadd.f32 0.0, %v1503
      %v1505 = vpop.f32.mrb[0].mxu0
      %v1506 = vpop.f32.mrb[0].mxu0
      %v1507 = vpop.f32.mrb[0].mxu0
      %1508 = vdwg.mxu0
      %1509 = vrot.lane.b32.xlu0 %v650, 40
      %v1510 = vpop.permute.xlu0 %1509
      %v1512 = vsel %vm654, %v1460, 0
      %v1515 = vsel %vm779, %v1510, 0
      %1517 = vmatprep.subr.bf16.mxu0 0
      %1518 = vmatpush1.bf16.msra.mxu0 %v1515
      %1519 = vmatprep.subr.bf16.mxu0 0
      %1520 = vmatpush1.bf16.msra.mxu0 0
      %1521 = vmatprep.subr.bf16.mxu0 0
      %1522 = vmatpush1.bf16.msra.mxu0 0
      %1523 = vmatprep.subr.bf16.mxu0 0
      %1524 = vmatpush1.bf16.msra.mxu0 0
      %1525 = vmatprep.subr.bf16.mxu0 0
      %1526 = vmatpush1.bf16.msra.mxu0 0
      %1527 = vmatprep.subr.bf16.mxu0 0
      %1528 = vmatpush1.bf16.msra.mxu0 0
      %1529 = vmatprep.subr.bf16.mxu0 0
      %1530 = vmatpush1.bf16.msra.mxu0 0
      %1531 = vmatprep.subr.bf16.mxu0 0
      %1532 = vmatpush1.bf16.msra.mxu0 0
      %1533 = vmatprep.subr.bf16.mxu0 0
      %1534 = vmatpush1.bf16.msra.mxu0 0
      %1535 = vmatprep.subr.bf16.mxu0 0
      %1536 = vmatpush1.bf16.msra.mxu0 0
      %1537 = vmatprep.subr.bf16.mxu0 0
      %1538 = vmatpush1.bf16.msra.mxu0 0
      %1539 = vmatprep.subr.bf16.mxu0 0
      %1540 = vmatpush1.bf16.msra.mxu0 0
      %1541 = vmatprep.subr.bf16.mxu0 0
      %1542 = vmatpush1.bf16.msra.mxu0 0
      %1543 = vmatprep.subr.bf16.mxu0 0
      %1544 = vmatpush1.bf16.msra.mxu0 0
      %1545 = vmatprep.subr.bf16.mxu0 0
      %1546 = vmatpush1.bf16.msra.mxu0 0
      %1547 = vmatprep.subr.bf16.mxu0 0
      %1548 = vmatpush1.bf16.msra.mxu0 0
      %1549 = vmatprep.mubr.bf16.mxu0 0
      %1550 = vmatmul.mubr.bf16.gmra.mrb[0].mxu0 %v1512
      %v1551 = vpop.f32.mrb[0].mxu0
      %v1552 = vadd.f32 0.0, %v1551
      %v1553 = vpop.f32.mrb[0].mxu0
      %v1554 = vpop.f32.mrb[0].mxu0
      %v1555 = vpop.f32.mrb[0].mxu0
      %1556 = vdwg.mxu0
      %1559 = vrot.lane.b32.xlu0 %v1504, 24
      %v1560 = vpop.permute.xlu0 %1559
      %1561 = vrot.lane.b32.xlu0 %v1552, 24
      %v1562 = vpop.permute.xlu0 %1561
      %vm1565 = vcmask 261312
      %1566 = vst.msk [vmem:[#allocation2] sm:$0xff] %vm1565, %v1560
      %1567 = vst.msk [vmem:[#allocation2 + $0x8] sm:$0xff] %vm1565, %v1562
      %v1568 = vld [vmem:[#allocation2] sm:$0xff]
      %v1569 = vld [vmem:[#allocation2 + $0x8] sm:$0xff]
      %v1570 = vld [vmem:[%s520] sm:$0xf]
      %v1571 = vld [vmem:[%s520 + $0x4] sm:$0xf]
      %v1572 = vld [vmem:[%s520 + $0x8] sm:$0xf]
      %v1573 = vld [vmem:[%s520 + $0xc] sm:$0xf]
      %v1574 = vpack.c.bf16 %v1569, %v1568
      %v1575 = vlaneseq
      %v1576 = vshrl.u32 %v1575, 7
      %v1577 = vsub.s32 1, %v1576
      %v1578 = vrot.slane %v567, %v1577
      %v1583 = vunpack.c.l.b16 %v1570
      %v1584 = vunpack.c.l.b16 %v1571
      %v1585 = vunpack.c.l.b16 %v1572
      %v1586 = vunpack.c.l.b16 %v1573
      %v1587 = vpack.c.b16 %v1584, %v1583
      %v1588 = vpack.c.b16 %v1586, %v1585
      %v1592 = vsel %vm594, %v1574, 0
      %1594 = vmatprep.subr.bf16.mxu0 0
      %1595 = vmatpush1.bf16.msra.mxu0 %v1587
      %1596 = vmatprep.subr.bf16.mxu0 0
      %1597 = vmatpush1.bf16.msra.mxu0 %v1588
      %1598 = vmatprep.subr.bf16.mxu0 0
      %1599 = vmatpush1.bf16.msra.mxu0 0
      %1600 = vmatprep.subr.bf16.mxu0 0
      %1601 = vmatpush1.bf16.msra.mxu0 0
      %1602 = vmatprep.subr.bf16.mxu0 0
      %1603 = vmatpush1.bf16.msra.mxu0 0
      %1604 = vmatprep.subr.bf16.mxu0 0
      %1605 = vmatpush1.bf16.msra.mxu0 0
      %1606 = vmatprep.subr.bf16.mxu0 0
      %1607 = vmatpush1.bf16.msra.mxu0 0
      %1608 = vmatprep.subr.bf16.mxu0 0
      %1609 = vmatpush1.bf16.msra.mxu0 0
      %1610 = vmatprep.subr.bf16.mxu0 0
      %1611 = vmatpush1.bf16.msra.mxu0 0
      %1612 = vmatprep.subr.bf16.mxu0 0
      %1613 = vmatpush1.bf16.msra.mxu0 0
      %1614 = vmatprep.subr.bf16.mxu0 0
      %1615 = vmatpush1.bf16.msra.mxu0 0
      %1616 = vmatprep.subr.bf16.mxu0 0
      %1617 = vmatpush1.bf16.msra.mxu0 0
      %1618 = vmatprep.subr.bf16.mxu0 0
      %1619 = vmatpush1.bf16.msra.mxu0 0
      %1620 = vmatprep.subr.bf16.mxu0 0
      %1621 = vmatpush1.bf16.msra.mxu0 0
      %1622 = vmatprep.subr.bf16.mxu0 0
      %1623 = vmatpush1.bf16.msra.mxu0 0
      %1624 = vmatprep.subr.bf16.mxu0 0
      %1625 = vmatpush1.bf16.msra.mxu0 0
      %1626 = vmatprep.mubr.bf16.mxu0 0
      %1627 = vmatmul.mubr.bf16.gmra.mrb[0].mxu0 %v1592
      %v1628 = vpop.f32.mrb[0].mxu0
      %v1629 = vadd.f32 %v1578, %v1628
      %v1630 = vpop.f32.mrb[0].mxu0
      %v1631 = vpop.f32.mrb[0].mxu0
      %v1632 = vadd.f32 %v1578, %v1631
      %v1633 = vpop.f32.mrb[0].mxu0
      %1634 = vdwg.mxu0
      %v1635 = vadd.f32 %v569, %v1629
      %v1636 = vadd.f32 %v570, %v1632
      %v1637 = vsel %vm594, %v1635, 0.0
      %1638 = vadd.xlane.f32.xlu0 %v1637
      %v1639 = vpop.xlane.xlu0 %1638
      %v1640 = vsel %vm594, %v1636, 0.0
      %1641 = vadd.xlane.f32.xlu0 %v1640
      %v1642 = vpop.xlane.xlu0 %1641
      %v1643 = vrcp.pop 32.0
      %v1644 = vmul.f32 %v1639, %v1643
      %v1645 = vmul.f32 %v1642, %v1643
      %v1646 = vsub.f32 %v1635, %v1644
      %v1647 = vsub.f32 %v1636, %v1645
      %v1648 = vmul.f32 %v1646, %v1646
      %v1649 = vmul.f32 %v1647, %v1647
      %v1650 = vsel %vm594, %v1648, 0.0
      %1651 = vadd.xlane.f32.xlu0 %v1650
      %v1652 = vpop.xlane.xlu0 %1651
      %v1653 = vsel %vm594, %v1649, 0.0
      %1654 = vadd.xlane.f32.xlu0 %v1653
      %v1655 = vpop.xlane.xlu0 %1654
      %v1656 = vmul.f32 %v1652, %v1643
      %v1657 = vmul.f32 %v1655, %v1643
      %v1658 = vadd.f32 %v1656, 1e-05
      %v1659 = vadd.f32 %v1657, 1e-05
      %v1660 = vrsqrt.pop %v1658
      %v1661 = vrsqrt.pop %v1659
      %v1662 = vmul.f32 %v1646, %v1660
      %v1663 = vmul.f32 %v1647, %v1661
      %v1664 = vlaneseq
      %v1665 = vshrl.u32 %v1664, 7
      %v1666 = vsub.s32 7, %v1665
      %v1667 = vrot.slane %v567, %v1666
      %v1668 = vmul.f32 %v1662, %v1667
      %v1669 = vmul.f32 %v1663, %v1667
      %v1670 = vlaneseq
      %v1671 = vshrl.u32 %v1670, 7
      %v1672 = vsub.s32 0, %v1671
      %v1673 = vrot.slane %v568, %v1672
      %v1674 = vadd.f32 %v1668, %v1673
      %v1675 = vadd.f32 %v1669, %v1673
      %v1676 = vld [vmem:[%s525] sm:$0xf]
      %v1677 = vld [vmem:[%s525 + $0x4] sm:$0xf]
      %v1678 = vld [vmem:[%s525 + $0x8] sm:$0xf]
      %v1679 = vld [vmem:[%s525 + $0xc] sm:$0xf]
      %v1680 = vpack.c.bf16 %v1675, %v1674
      %v1681 = vlaneseq
      %v1682 = vshrl.u32 %v1681, 7
      %v1683 = vsub.s32 2, %v1682
      %v1684 = vrot.slane %v567, %v1683
      %v1689 = vunpack.c.l.b16 %v1676
      %v1690 = vunpack.c.l.b16 %v1677
      %v1691 = vunpack.c.l.b16 %v1678
      %v1692 = vunpack.c.l.b16 %v1679
      %v1693 = vpack.c.b16 %v1690, %v1689
      %v1694 = vpack.c.b16 %v1692, %v1691
      %v1698 = vsel %vm594, %v1680, 0
      %1700 = vmatprep.subr.bf16.mxu0 0
      %1701 = vmatpush1.bf16.msra.mxu0 %v1693
      %1702 = vmatprep.subr.bf16.mxu0 0
      %1703 = vmatpush1.bf16.msra.mxu0 %v1694
      %1704 = vmatprep.subr.bf16.mxu0 0
      %1705 = vmatpush1.bf16.msra.mxu0 0
      %1706 = vmatprep.subr.bf16.mxu0 0
      %1707 = vmatpush1.bf16.msra.mxu0 0
      %1708 = vmatprep.subr.bf16.mxu0 0
      %1709 = vmatpush1.bf16.msra.mxu0 0
      %1710 = vmatprep.subr.bf16.mxu0 0
      %1711 = vmatpush1.bf16.msra.mxu0 0
      %1712 = vmatprep.subr.bf16.mxu0 0
      %1713 = vmatpush1.bf16.msra.mxu0 0
      %1714 = vmatprep.subr.bf16.mxu0 0
      %1715 = vmatpush1.bf16.msra.mxu0 0
      %1716 = vmatprep.subr.bf16.mxu0 0
      %1717 = vmatpush1.bf16.msra.mxu0 0
      %1718 = vmatprep.subr.bf16.mxu0 0
      %1719 = vmatpush1.bf16.msra.mxu0 0
      %1720 = vmatprep.subr.bf16.mxu0 0
      %1721 = vmatpush1.bf16.msra.mxu0 0
      %1722 = vmatprep.subr.bf16.mxu0 0
      %1723 = vmatpush1.bf16.msra.mxu0 0
      %1724 = vmatprep.subr.bf16.mxu0 0
      %1725 = vmatpush1.bf16.msra.mxu0 0
      %1726 = vmatprep.subr.bf16.mxu0 0
      %1727 = vmatpush1.bf16.msra.mxu0 0
      %1728 = vmatprep.subr.bf16.mxu0 0
      %1729 = vmatpush1.bf16.msra.mxu0 0
      %1730 = vmatprep.subr.bf16.mxu0 0
      %1731 = vmatpush1.bf16.msra.mxu0 0
      %1732 = vmatprep.mubr.bf16.mxu0 0
      %1733 = vmatmul.mubr.bf16.gmra.mrb[0].mxu0 %v1698
      %v1734 = vpop.f32.mrb[0].mxu0
      %v1735 = vadd.f32 %v1684, %v1734
      %v1736 = vpop.f32.mrb[0].mxu0
      %v1737 = vpop.f32.mrb[0].mxu0
      %v1738 = vadd.f32 %v1684, %v1737
      %v1739 = vpop.f32.mrb[0].mxu0
      %1740 = vdwg.mxu0
      %v1741 = vld [vmem:[%s530] sm:$0xf]
      %v1742 = vld [vmem:[%s530 + $0x4] sm:$0xf]
      %v1743 = vld [vmem:[%s530 + $0x8] sm:$0xf]
      %v1744 = vld [vmem:[%s530 + $0xc] sm:$0xf]
      %v1745 = vpack.c.bf16 %v572, %v571
      %v1746 = vlaneseq
      %v1747 = vshrl.u32 %v1746, 7
      %v1748 = vsub.s32 3, %v1747
      %v1749 = vrot.slane %v567, %v1748
      %v1754 = vunpack.c.l.b16 %v1741
      %v1755 = vunpack.c.l.b16 %v1742
      %v1756 = vunpack.c.l.b16 %v1743
      %v1757 = vunpack.c.l.b16 %v1744
      %v1758 = vpack.c.b16 %v1755, %v1754
      %v1759 = vpack.c.b16 %v1757, %v1756
      %v1763 = vsel %vm594, %v1745, 0
      %1765 = vmatprep.subr.bf16.mxu0 0
      %1766 = vmatpush1.bf16.msra.mxu0 %v1758
      %1767 = vmatprep.subr.bf16.mxu0 0
      %1768 = vmatpush1.bf16.msra.mxu0 %v1759
      %1769 = vmatprep.subr.bf16.mxu0 0
      %1770 = vmatpush1.bf16.msra.mxu0 0
      %1771 = vmatprep.subr.bf16.mxu0 0
      %1772 = vmatpush1.bf16.msra.mxu0 0
      %1773 = vmatprep.subr.bf16.mxu0 0
      %1774 = vmatpush1.bf16.msra.mxu0 0
      %1775 = vmatprep.subr.bf16.mxu0 0
      %1776 = vmatpush1.bf16.msra.mxu0 0
      %1777 = vmatprep.subr.bf16.mxu0 0
      %1778 = vmatpush1.bf16.msra.mxu0 0
      %1779 = vmatprep.subr.bf16.mxu0 0
      %1780 = vmatpush1.bf16.msra.mxu0 0
      %1781 = vmatprep.subr.bf16.mxu0 0
      %1782 = vmatpush1.bf16.msra.mxu0 0
      %1783 = vmatprep.subr.bf16.mxu0 0
      %1784 = vmatpush1.bf16.msra.mxu0 0
      %1785 = vmatprep.subr.bf16.mxu0 0
      %1786 = vmatpush1.bf16.msra.mxu0 0
      %1787 = vmatprep.subr.bf16.mxu0 0
      %1788 = vmatpush1.bf16.msra.mxu0 0
      %1789 = vmatprep.subr.bf16.mxu0 0
      %1790 = vmatpush1.bf16.msra.mxu0 0
      %1791 = vmatprep.subr.bf16.mxu0 0
      %1792 = vmatpush1.bf16.msra.mxu0 0
      %1793 = vmatprep.subr.bf16.mxu0 0
      %1794 = vmatpush1.bf16.msra.mxu0 0
      %1795 = vmatprep.subr.bf16.mxu0 0
      %1796 = vmatpush1.bf16.msra.mxu0 0
      %1797 = vmatprep.mubr.bf16.mxu0 0
      %1798 = vmatmul.mubr.bf16.gmra.mrb[0].mxu0 %v1763
      %v1799 = vpop.f32.mrb[0].mxu0
      %v1800 = vadd.f32 %v1749, %v1799
      %v1801 = vpop.f32.mrb[0].mxu0
      %v1802 = vpop.f32.mrb[0].mxu0
      %v1803 = vadd.f32 %v1749, %v1802
      %v1804 = vpop.f32.mrb[0].mxu0
      %1805 = vdwg.mxu0
      %vm1806 = vcmp.ge.s32.totalorder %v642, 6
      %v1807 = vsel %vm1806, -1e+30, 0.0
      %v1808 = vmul.f32 %v1735, 0.35355338
      %v1809 = vmul.f32 %v1738, 0.35355338
      %v1810 = vpack.c.bf16 %v1808, %v1808
      %v1811 = vpack.c.bf16 %v1809, %v1809
      %v1812 = vpack.c.bf16 %v1800, %v1800
      %v1813 = vpack.c.bf16 %v1803, %v1803
      %v1815 = vsel %vm654, %v1810, 0
      %v1818 = vsel %vm654, %v1812, 0
      %1820 = vmatprep.subr.bf16.mxu0 0
      %1821 = vmatpush1.bf16.xpose.msra.mxu0 %v1818
      %1822 = vmatprep.subr.bf16.mxu0 0
      %1823 = vmatpush1.bf16.xpose.msra.mxu0 0
      %1824 = vmatprep.subr.bf16.mxu0 0
      %1825 = vmatpush1.bf16.xpose.msra.mxu0 0
      %1826 = vmatprep.subr.bf16.mxu0 0
      %1827 = vmatpush1.bf16.xpose.msra.mxu0 0
      %1828 = vmatprep.subr.bf16.mxu0 0
      %1829 = vmatpush1.bf16.xpose.msra.mxu0 0
      %1830 = vmatprep.subr.bf16.mxu0 0
      %1831 = vmatpush1.bf16.xpose.msra.mxu0 0
      %1832 = vmatprep.subr.bf16.mxu0 0
      %1833 = vmatpush1.bf16.xpose.msra.mxu0 0
      %1834 = vmatprep.subr.bf16.mxu0 0
      %1835 = vmatpush1.bf16.xpose.msra.mxu0 0
      %1836 = vmatprep.subr.bf16.mxu0 0
      %1837 = vmatpush1.bf16.xpose.msra.mxu0 0
      %1838 = vmatprep.subr.bf16.mxu0 0
      %1839 = vmatpush1.bf16.xpose.msra.mxu0 0
      %1840 = vmatprep.subr.bf16.mxu0 0
      %1841 = vmatpush1.bf16.xpose.msra.mxu0 0
      %1842 = vmatprep.subr.bf16.mxu0 0
      %1843 = vmatpush1.bf16.xpose.msra.mxu0 0
      %1844 = vmatprep.subr.bf16.mxu0 0
      %1845 = vmatpush1.bf16.xpose.msra.mxu0 0
      %1846 = vmatprep.subr.bf16.mxu0 0
      %1847 = vmatpush1.bf16.xpose.msra.mxu0 0
      %1848 = vmatprep.subr.bf16.mxu0 0
      %1849 = vmatpush1.bf16.xpose.msra.mxu0 0
      %1850 = vmatprep.subr.bf16.mxu0 0
      %1851 = vmatpush1.bf16.xpose.msra.mxu0 0
      %1852 = vmatprep.mubr.bf16.mxu0 0
      %1853 = vmatmul.mubr.bf16.gmra.mrb[0].mxu0 %v1815
      %v1854 = vpop.f32.mrb[0].mxu0
      %v1855 = vadd.f32 %v1807, %v1854
      %v1856 = vpop.f32.mrb[0].mxu0
      %v1857 = vpop.f32.mrb[0].mxu0
      %v1858 = vpop.f32.mrb[0].mxu0
      %1859 = vdwg.mxu0
      %v1861 = vsel %vm654, %v1811, 0
      %v1864 = vsel %vm654, %v1813, 0
      %1866 = vmatprep.subr.bf16.mxu0 0
      %1867 = vmatpush1.bf16.xpose.msra.mxu0 %v1864
      %1868 = vmatprep.subr.bf16.mxu0 0
      %1869 = vmatpush1.bf16.xpose.msra.mxu0 0
      %1870 = vmatprep.subr.bf16.mxu0 0
      %1871 = vmatpush1.bf16.xpose.msra.mxu0 0
      %1872 = vmatprep.subr.bf16.mxu0 0
      %1873 = vmatpush1.bf16.xpose.msra.mxu0 0
      %1874 = vmatprep.subr.bf16.mxu0 0
      %1875 = vmatpush1.bf16.xpose.msra.mxu0 0
      %1876 = vmatprep.subr.bf16.mxu0 0
      %1877 = vmatpush1.bf16.xpose.msra.mxu0 0
      %1878 = vmatprep.subr.bf16.mxu0 0
      %1879 = vmatpush1.bf16.xpose.msra.mxu0 0
      %1880 = vmatprep.subr.bf16.mxu0 0
      %1881 = vmatpush1.bf16.xpose.msra.mxu0 0
      %1882 = vmatprep.subr.bf16.mxu0 0
      %1883 = vmatpush1.bf16.xpose.msra.mxu0 0
      %1884 = vmatprep.subr.bf16.mxu0 0
      %1885 = vmatpush1.bf16.xpose.msra.mxu0 0
      %1886 = vmatprep.subr.bf16.mxu0 0
      %1887 = vmatpush1.bf16.xpose.msra.mxu0 0
      %1888 = vmatprep.subr.bf16.mxu0 0
      %1889 = vmatpush1.bf16.xpose.msra.mxu0 0
      %1890 = vmatprep.subr.bf16.mxu0 0
      %1891 = vmatpush1.bf16.xpose.msra.mxu0 0
      %1892 = vmatprep.subr.bf16.mxu0 0
      %1893 = vmatpush1.bf16.xpose.msra.mxu0 0
      %1894 = vmatprep.subr.bf16.mxu0 0
      %1895 = vmatpush1.bf16.xpose.msra.mxu0 0
      %1896 = vmatprep.subr.bf16.mxu0 0
      %1897 = vmatpush1.bf16.xpose.msra.mxu0 0
      %1898 = vmatprep.mubr.bf16.mxu0 0
      %1899 = vmatmul.mubr.bf16.gmra.mrb[0].mxu0 %v1861
      %v1900 = vpop.f32.mrb[0].mxu0
      %v1901 = vadd.f32 %v1807, %v1900
      %v1902 = vpop.f32.mrb[0].mxu0
      %v1903 = vpop.f32.mrb[0].mxu0
      %v1904 = vpop.f32.mrb[0].mxu0
      %1905 = vdwg.mxu0
      %v1906 = vsel %vm654, %v1855, -inf
      %1907 = vmax.xlane.f32.xlu0 %v1906
      %v1908 = vpop.xlane.xlu0 %1907
      %v1909 = vsel %vm654, %v1901, -inf
      %1910 = vmax.xlane.f32.xlu0 %v1909
      %v1911 = vpop.xlane.xlu0 %1910
      %v1912 = vsub.f32 %v1855, %v1908
      %v1913 = vsub.f32 %v1901, %v1911
      %v1914 = vmul.f32 %v1912, 1.442695
      %v1915 = vpow.pop %v1914
      %v1916 = vmul.f32 %v1913, 1.442695
      %v1917 = vpow.pop %v1916
      %v1918 = vsel %vm654, %v1915, 0.0
      %1919 = vadd.xlane.f32.xlu0 %v1918
      %v1920 = vpop.xlane.xlu0 %1919
      %v1921 = vsel %vm654, %v1917, 0.0
      %1922 = vadd.xlane.f32.xlu0 %v1921
      %v1923 = vpop.xlane.xlu0 %1922
      %v1924 = vrcp.pop %v1920
      %v1925 = vrcp.pop %v1923
      %v1926 = vmul.f32 %v1915, %v1924
      %v1927 = vmul.f32 %v1917, %v1925
      %v1928 = vpack.c.bf16 %v1926, %v1926
      %v1929 = vpack.c.bf16 %v1927, %v1927
      %1931 = vrot.lane.b32.xlu0 %v1812, 96
      %v1932 = vpop.permute.xlu0 %1931
      %v1934 = vsel %vm654, %v1928, 0
      %v1937 = vsel %vm779, %v1932, 0
      %1939 = vmatprep.subr.bf16.mxu0 0
      %1940 = vmatpush1.bf16.msra.mxu0 %v1937
      %1941 = vmatprep.subr.bf16.mxu0 0
      %1942 = vmatpush1.bf16.msra.mxu0 0
      %1943 = vmatprep.subr.bf16.mxu0 0
      %1944 = vmatpush1.bf16.msra.mxu0 0
      %1945 = vmatprep.subr.bf16.mxu0 0
      %1946 = vmatpush1.bf16.msra.mxu0 0
      %1947 = vmatprep.subr.bf16.mxu0 0
      %1948 = vmatpush1.bf16.msra.mxu0 0
      %1949 = vmatprep.subr.bf16.mxu0 0
      %1950 = vmatpush1.bf16.msra.mxu0 0
      %1951 = vmatprep.subr.bf16.mxu0 0
      %1952 = vmatpush1.bf16.msra.mxu0 0
      %1953 = vmatprep.subr.bf16.mxu0 0
      %1954 = vmatpush1.bf16.msra.mxu0 0
      %1955 = vmatprep.subr.bf16.mxu0 0
      %1956 = vmatpush1.bf16.msra.mxu0 0
      %1957 = vmatprep.subr.bf16.mxu0 0
      %1958 = vmatpush1.bf16.msra.mxu0 0
      %1959 = vmatprep.subr.bf16.mxu0 0
      %1960 = vmatpush1.bf16.msra.mxu0 0
      %1961 = vmatprep.subr.bf16.mxu0 0
      %1962 = vmatpush1.bf16.msra.mxu0 0
      %1963 = vmatprep.subr.bf16.mxu0 0
      %1964 = vmatpush1.bf16.msra.mxu0 0
      %1965 = vmatprep.subr.bf16.mxu0 0
      %1966 = vmatpush1.bf16.msra.mxu0 0
      %1967 = vmatprep.subr.bf16.mxu0 0
      %1968 = vmatpush1.bf16.msra.mxu0 0
      %1969 = vmatprep.subr.bf16.mxu0 0
      %1970 = vmatpush1.bf16.msra.mxu0 0
      %1971 = vmatprep.mubr.bf16.mxu0 0
      %1972 = vmatmul.mubr.bf16.gmra.mrb[0].mxu0 %v1934
      %v1973 = vpop.f32.mrb[0].mxu0
      %v1974 = vadd.f32 0.0, %v1973
      %v1975 = vpop.f32.mrb[0].mxu0
      %v1976 = vpop.f32.mrb[0].mxu0
      %v1977 = vpop.f32.mrb[0].mxu0
      %1978 = vdwg.mxu0
      %1980 = vrot.lane.b32.xlu0 %v1813, 96
      %v1981 = vpop.permute.xlu0 %1980
      %v1983 = vsel %vm654, %v1929, 0
      %v1986 = vsel %vm779, %v1981, 0
      %1988 = vmatprep.subr.bf16.mxu0 0
      %1989 = vmatpush1.bf16.msra.mxu0 %v1986
      %1990 = vmatprep.subr.bf16.mxu0 0
      %1991 = vmatpush1.bf16.msra.mxu0 0
      %1992 = vmatprep.subr.bf16.mxu0 0
      %1993 = vmatpush1.bf16.msra.mxu0 0
      %1994 = vmatprep.subr.bf16.mxu0 0
      %1995 = vmatpush1.bf16.msra.mxu0 0
      %1996 = vmatprep.subr.bf16.mxu0 0
      %1997 = vmatpush1.bf16.msra.mxu0 0
      %1998 = vmatprep.subr.bf16.mxu0 0
      %1999 = vmatpush1.bf16.msra.mxu0 0
      %2000 = vmatprep.subr.bf16.mxu0 0
      %2001 = vmatpush1.bf16.msra.mxu0 0
      %2002 = vmatprep.subr.bf16.mxu0 0
      %2003 = vmatpush1.bf16.msra.mxu0 0
      %2004 = vmatprep.subr.bf16.mxu0 0
      %2005 = vmatpush1.bf16.msra.mxu0 0
      %2006 = vmatprep.subr.bf16.mxu0 0
      %2007 = vmatpush1.bf16.msra.mxu0 0
      %2008 = vmatprep.subr.bf16.mxu0 0
      %2009 = vmatpush1.bf16.msra.mxu0 0
      %2010 = vmatprep.subr.bf16.mxu0 0
      %2011 = vmatpush1.bf16.msra.mxu0 0
      %2012 = vmatprep.subr.bf16.mxu0 0
      %2013 = vmatpush1.bf16.msra.mxu0 0
      %2014 = vmatprep.subr.bf16.mxu0 0
      %2015 = vmatpush1.bf16.msra.mxu0 0
      %2016 = vmatprep.subr.bf16.mxu0 0
      %2017 = vmatpush1.bf16.msra.mxu0 0
      %2018 = vmatprep.subr.bf16.mxu0 0
      %2019 = vmatpush1.bf16.msra.mxu0 0
      %2020 = vmatprep.mubr.bf16.mxu0 0
      %2021 = vmatmul.mubr.bf16.gmra.mrb[0].mxu0 %v1983
      %v2022 = vpop.f32.mrb[0].mxu0
      %v2023 = vadd.f32 0.0, %v2022
      %v2024 = vpop.f32.mrb[0].mxu0
      %v2025 = vpop.f32.mrb[0].mxu0
      %v2026 = vpop.f32.mrb[0].mxu0
      %2027 = vdwg.mxu0
      %2028 = vst.msk [vmem:[#allocation2] sm:$0xff] %vm654, %v1974
      %2029 = vst.msk [vmem:[#allocation2 + $0x8] sm:$0xff] %vm654, %v2023
      %2031 = vrot.lane.b32.xlu0 %v1810, 120
      %v2032 = vpop.permute.xlu0 %2031
      %2033 = vrot.lane.b32.xlu0 %v1812, 120
      %v2034 = vpop.permute.xlu0 %2033
      %v2036 = vsel %vm654, %v2032, 0
      %v2039 = vsel %vm654, %v2034, 0
      %2041 = vmatprep.subr.bf16.mxu0 0
      %2042 = vmatpush1.bf16.xpose.msra.mxu0 %v2039
      %2043 = vmatprep.subr.bf16.mxu0 0
      %2044 = vmatpush1.bf16.xpose.msra.mxu0 0
      %2045 = vmatprep.subr.bf16.mxu0 0
      %2046 = vmatpush1.bf16.xpose.msra.mxu0 0
      %2047 = vmatprep.subr.bf16.mxu0 0
      %2048 = vmatpush1.bf16.xpose.msra.mxu0 0
      %2049 = vmatprep.subr.bf16.mxu0 0
      %2050 = vmatpush1.bf16.xpose.msra.mxu0 0
      %2051 = vmatprep.subr.bf16.mxu0 0
      %2052 = vmatpush1.bf16.xpose.msra.mxu0 0
      %2053 = vmatprep.subr.bf16.mxu0 0
      %2054 = vmatpush1.bf16.xpose.msra.mxu0 0
      %2055 = vmatprep.subr.bf16.mxu0 0
      %2056 = vmatpush1.bf16.xpose.msra.mxu0 0
      %2057 = vmatprep.subr.bf16.mxu0 0
      %2058 = vmatpush1.bf16.xpose.msra.mxu0 0
      %2059 = vmatprep.subr.bf16.mxu0 0
      %2060 = vmatpush1.bf16.xpose.msra.mxu0 0
      %2061 = vmatprep.subr.bf16.mxu0 0
      %2062 = vmatpush1.bf16.xpose.msra.mxu0 0
      %2063 = vmatprep.subr.bf16.mxu0 0
      %2064 = vmatpush1.bf16.xpose.msra.mxu0 0
      %2065 = vmatprep.subr.bf16.mxu0 0
      %2066 = vmatpush1.bf16.xpose.msra.mxu0 0
      %2067 = vmatprep.subr.bf16.mxu0 0
      %2068 = vmatpush1.bf16.xpose.msra.mxu0 0
      %2069 = vmatprep.subr.bf16.mxu0 0
      %2070 = vmatpush1.bf16.xpose.msra.mxu0 0
      %2071 = vmatprep.subr.bf16.mxu0 0
      %2072 = vmatpush1.bf16.xpose.msra.mxu0 0
      %2073 = vmatprep.mubr.bf16.mxu0 0
      %2074 = vmatmul.mubr.bf16.gmra.mrb[0].mxu0 %v2036
      %v2075 = vpop.f32.mrb[0].mxu0
      %v2076 = vadd.f32 %v1807, %v2075
      %v2077 = vpop.f32.mrb[0].mxu0
      %v2078 = vpop.f32.mrb[0].mxu0
      %v2079 = vpop.f32.mrb[0].mxu0
      %2080 = vdwg.mxu0
      %2082 = vrot.lane.b32.xlu0 %v1811, 120
      %v2083 = vpop.permute.xlu0 %2082
      %2084 = vrot.lane.b32.xlu0 %v1813, 120
      %v2085 = vpop.permute.xlu0 %2084
      %v2087 = vsel %vm654, %v2083, 0
      %v2090 = vsel %vm654, %v2085, 0
      %2092 = vmatprep.subr.bf16.mxu0 0
      %2093 = vmatpush1.bf16.xpose.msra.mxu0 %v2090
      %2094 = vmatprep.subr.bf16.mxu0 0
      %2095 = vmatpush1.bf16.xpose.msra.mxu0 0
      %2096 = vmatprep.subr.bf16.mxu0 0
      %2097 = vmatpush1.bf16.xpose.msra.mxu0 0
      %2098 = vmatprep.subr.bf16.mxu0 0
      %2099 = vmatpush1.bf16.xpose.msra.mxu0 0
      %2100 = vmatprep.subr.bf16.mxu0 0
      %2101 = vmatpush1.bf16.xpose.msra.mxu0 0
      %2102 = vmatprep.subr.bf16.mxu0 0
      %2103 = vmatpush1.bf16.xpose.msra.mxu0 0
      %2104 = vmatprep.subr.bf16.mxu0 0
      %2105 = vmatpush1.bf16.xpose.msra.mxu0 0
      %2106 = vmatprep.subr.bf16.mxu0 0
      %2107 = vmatpush1.bf16.xpose.msra.mxu0 0
      %2108 = vmatprep.subr.bf16.mxu0 0
      %2109 = vmatpush1.bf16.xpose.msra.mxu0 0
      %2110 = vmatprep.subr.bf16.mxu0 0
      %2111 = vmatpush1.bf16.xpose.msra.mxu0 0
      %2112 = vmatprep.subr.bf16.mxu0 0
      %2113 = vmatpush1.bf16.xpose.msra.mxu0 0
      %2114 = vmatprep.subr.bf16.mxu0 0
      %2115 = vmatpush1.bf16.xpose.msra.mxu0 0
      %2116 = vmatprep.subr.bf16.mxu0 0
      %2117 = vmatpush1.bf16.xpose.msra.mxu0 0
      %2118 = vmatprep.subr.bf16.mxu0 0
      %2119 = vmatpush1.bf16.xpose.msra.mxu0 0
      %2120 = vmatprep.subr.bf16.mxu0 0
      %2121 = vmatpush1.bf16.xpose.msra.mxu0 0
      %2122 = vmatprep.subr.bf16.mxu0 0
      %2123 = vmatpush1.bf16.xpose.msra.mxu0 0
      %2124 = vmatprep.mubr.bf16.mxu0 0
      %2125 = vmatmul.mubr.bf16.gmra.mrb[0].mxu0 %v2087
      %v2126 = vpop.f32.mrb[0].mxu0
      %v2127 = vadd.f32 %v1807, %v2126
      %v2128 = vpop.f32.mrb[0].mxu0
      %v2129 = vpop.f32.mrb[0].mxu0
      %v2130 = vpop.f32.mrb[0].mxu0
      %2131 = vdwg.mxu0
      %v2132 = vsel %vm654, %v2076, -inf
      %2133 = vmax.xlane.f32.xlu0 %v2132
      %v2134 = vpop.xlane.xlu0 %2133
      %v2135 = vsel %vm654, %v2127, -inf
      %2136 = vmax.xlane.f32.xlu0 %v2135
      %v2137 = vpop.xlane.xlu0 %2136
      %v2138 = vsub.f32 %v2076, %v2134
      %v2139 = vsub.f32 %v2127, %v2137
      %v2140 = vmul.f32 %v2138, 1.442695
      %v2141 = vpow.pop %v2140
      %v2142 = vmul.f32 %v2139, 1.442695
      %v2143 = vpow.pop %v2142
      %v2144 = vsel %vm654, %v2141, 0.0
      %2145 = vadd.xlane.f32.xlu0 %v2144
      %v2146 = vpop.xlane.xlu0 %2145
      %v2147 = vsel %vm654, %v2143, 0.0
      %2148 = vadd.xlane.f32.xlu0 %v2147
      %v2149 = vpop.xlane.xlu0 %2148
      %v2150 = vrcp.pop %v2146
      %v2151 = vrcp.pop %v2149
      %v2152 = vmul.f32 %v2141, %v2150
      %v2153 = vmul.f32 %v2143, %v2151
      %v2154 = vpack.c.bf16 %v2152, %v2152
      %v2155 = vpack.c.bf16 %v2153, %v2153
      %2156 = vrot.lane.b32.xlu0 %v1812, 88
      %v2157 = vpop.permute.xlu0 %2156
      %v2159 = vsel %vm654, %v2154, 0
      %v2162 = vsel %vm779, %v2157, 0
      %2164 = vmatprep.subr.bf16.mxu0 0
      %2165 = vmatpush1.bf16.msra.mxu0 %v2162
      %2166 = vmatprep.subr.bf16.mxu0 0
      %2167 = vmatpush1.bf16.msra.mxu0 0
      %2168 = vmatprep.subr.bf16.mxu0 0
      %2169 = vmatpush1.bf16.msra.mxu0 0
      %2170 = vmatprep.subr.bf16.mxu0 0
      %2171 = vmatpush1.bf16.msra.mxu0 0
      %2172 = vmatprep.subr.bf16.mxu0 0
      %2173 = vmatpush1.bf16.msra.mxu0 0
      %2174 = vmatprep.subr.bf16.mxu0 0
      %2175 = vmatpush1.bf16.msra.mxu0 0
      %2176 = vmatprep.subr.bf16.mxu0 0
      %2177 = vmatpush1.bf16.msra.mxu0 0
      %2178 = vmatprep.subr.bf16.mxu0 0
      %2179 = vmatpush1.bf16.msra.mxu0 0
      %2180 = vmatprep.subr.bf16.mxu0 0
      %2181 = vmatpush1.bf16.msra.mxu0 0
      %2182 = vmatprep.subr.bf16.mxu0 0
      %2183 = vmatpush1.bf16.msra.mxu0 0
      %2184 = vmatprep.subr.bf16.mxu0 0
      %2185 = vmatpush1.bf16.msra.mxu0 0
      %2186 = vmatprep.subr.bf16.mxu0 0
      %2187 = vmatpush1.bf16.msra.mxu0 0
      %2188 = vmatprep.subr.bf16.mxu0 0
      %2189 = vmatpush1.bf16.msra.mxu0 0
      %2190 = vmatprep.subr.bf16.mxu0 0
      %2191 = vmatpush1.bf16.msra.mxu0 0
      %2192 = vmatprep.subr.bf16.mxu0 0
      %2193 = vmatpush1.bf16.msra.mxu0 0
      %2194 = vmatprep.subr.bf16.mxu0 0
      %2195 = vmatpush1.bf16.msra.mxu0 0
      %2196 = vmatprep.mubr.bf16.mxu0 0
      %2197 = vmatmul.mubr.bf16.gmra.mrb[0].mxu0 %v2159
      %v2198 = vpop.f32.mrb[0].mxu0
      %v2199 = vadd.f32 0.0, %v2198
      %v2200 = vpop.f32.mrb[0].mxu0
      %v2201 = vpop.f32.mrb[0].mxu0
      %v2202 = vpop.f32.mrb[0].mxu0
      %2203 = vdwg.mxu0
      %2204 = vrot.lane.b32.xlu0 %v1813, 88
      %v2205 = vpop.permute.xlu0 %2204
      %v2207 = vsel %vm654, %v2155, 0
      %v2210 = vsel %vm779, %v2205, 0
      %2212 = vmatprep.subr.bf16.mxu0 0
      %2213 = vmatpush1.bf16.msra.mxu0 %v2210
      %2214 = vmatprep.subr.bf16.mxu0 0
      %2215 = vmatpush1.bf16.msra.mxu0 0
      %2216 = vmatprep.subr.bf16.mxu0 0
      %2217 = vmatpush1.bf16.msra.mxu0 0
      %2218 = vmatprep.subr.bf16.mxu0 0
      %2219 = vmatpush1.bf16.msra.mxu0 0
      %2220 = vmatprep.subr.bf16.mxu0 0
      %2221 = vmatpush1.bf16.msra.mxu0 0
      %2222 = vmatprep.subr.bf16.mxu0 0
      %2223 = vmatpush1.bf16.msra.mxu0 0
      %2224 = vmatprep.subr.bf16.mxu0 0
      %2225 = vmatpush1.bf16.msra.mxu0 0
      %2226 = vmatprep.subr.bf16.mxu0 0
      %2227 = vmatpush1.bf16.msra.mxu0 0
      %2228 = vmatprep.subr.bf16.mxu0 0
      %2229 = vmatpush1.bf16.msra.mxu0 0
      %2230 = vmatprep.subr.bf16.mxu0 0
      %2231 = vmatpush1.bf16.msra.mxu0 0
      %2232 = vmatprep.subr.bf16.mxu0 0
      %2233 = vmatpush1.bf16.msra.mxu0 0
      %2234 = vmatprep.subr.bf16.mxu0 0
      %2235 = vmatpush1.bf16.msra.mxu0 0
      %2236 = vmatprep.subr.bf16.mxu0 0
      %2237 = vmatpush1.bf16.msra.mxu0 0
      %2238 = vmatprep.subr.bf16.mxu0 0
      %2239 = vmatpush1.bf16.msra.mxu0 0
      %2240 = vmatprep.subr.bf16.mxu0 0
      %2241 = vmatpush1.bf16.msra.mxu0 0
      %2242 = vmatprep.subr.bf16.mxu0 0
      %2243 = vmatpush1.bf16.msra.mxu0 0
      %2244 = vmatprep.mubr.bf16.mxu0 0
      %2245 = vmatmul.mubr.bf16.gmra.mrb[0].mxu0 %v2207
      %v2246 = vpop.f32.mrb[0].mxu0
      %v2247 = vadd.f32 0.0, %v2246
      %v2248 = vpop.f32.mrb[0].mxu0
      %v2249 = vpop.f32.mrb[0].mxu0
      %v2250 = vpop.f32.mrb[0].mxu0
      %2251 = vdwg.mxu0
      %2254 = vrot.lane.b32.xlu0 %v2199, 8
      %v2255 = vpop.permute.xlu0 %2254
      %2256 = vrot.lane.b32.xlu0 %v2247, 8
      %v2257 = vpop.permute.xlu0 %2256
      %2260 = vst.msk [vmem:[#allocation2] sm:$0xff] %vm1103, %v2255
      %2261 = vst.msk [vmem:[#allocation2 + $0x8] sm:$0xff] %vm1103, %v2257
      %2262 = vrot.lane.b32.xlu0 %v1810, 112
      %v2263 = vpop.permute.xlu0 %2262
      %2264 = vrot.lane.b32.xlu0 %v1812, 112
      %v2265 = vpop.permute.xlu0 %2264
      %v2267 = vsel %vm654, %v2263, 0
      %v2270 = vsel %vm654, %v2265, 0
      %2272 = vmatprep.subr.bf16.mxu0 0
      %2273 = vmatpush1.bf16.xpose.msra.mxu0 %v2270
      %2274 = vmatprep.subr.bf16.mxu0 0
      %2275 = vmatpush1.bf16.xpose.msra.mxu0 0
      %2276 = vmatprep.subr.bf16.mxu0 0
      %2277 = vmatpush1.bf16.xpose.msra.mxu0 0
      %2278 = vmatprep.subr.bf16.mxu0 0
      %2279 = vmatpush1.bf16.xpose.msra.mxu0 0
      %2280 = vmatprep.subr.bf16.mxu0 0
      %2281 = vmatpush1.bf16.xpose.msra.mxu0 0
      %2282 = vmatprep.subr.bf16.mxu0 0
      %2283 = vmatpush1.bf16.xpose.msra.mxu0 0
      %2284 = vmatprep.subr.bf16.mxu0 0
      %2285 = vmatpush1.bf16.xpose.msra.mxu0 0
      %2286 = vmatprep.subr.bf16.mxu0 0
      %2287 = vmatpush1.bf16.xpose.msra.mxu0 0
      %2288 = vmatprep.subr.bf16.mxu0 0
      %2289 = vmatpush1.bf16.xpose.msra.mxu0 0
      %2290 = vmatprep.subr.bf16.mxu0 0
      %2291 = vmatpush1.bf16.xpose.msra.mxu0 0
      %2292 = vmatprep.subr.bf16.mxu0 0
      %2293 = vmatpush1.bf16.xpose.msra.mxu0 0
      %2294 = vmatprep.subr.bf16.mxu0 0
      %2295 = vmatpush1.bf16.xpose.msra.mxu0 0
      %2296 = vmatprep.subr.bf16.mxu0 0
      %2297 = vmatpush1.bf16.xpose.msra.mxu0 0
      %2298 = vmatprep.subr.bf16.mxu0 0
      %2299 = vmatpush1.bf16.xpose.msra.mxu0 0
      %2300 = vmatprep.subr.bf16.mxu0 0
      %2301 = vmatpush1.bf16.xpose.msra.mxu0 0
      %2302 = vmatprep.subr.bf16.mxu0 0
      %2303 = vmatpush1.bf16.xpose.msra.mxu0 0
      %2304 = vmatprep.mubr.bf16.mxu0 0
      %2305 = vmatmul.mubr.bf16.gmra.mrb[0].mxu0 %v2267
      %v2306 = vpop.f32.mrb[0].mxu0
      %v2307 = vadd.f32 %v1807, %v2306
      %v2308 = vpop.f32.mrb[0].mxu0
      %v2309 = vpop.f32.mrb[0].mxu0
      %v2310 = vpop.f32.mrb[0].mxu0
      %2311 = vdwg.mxu0
      %2312 = vrot.lane.b32.xlu0 %v1811, 112
      %v2313 = vpop.permute.xlu0 %2312
      %2314 = vrot.lane.b32.xlu0 %v1813, 112
      %v2315 = vpop.permute.xlu0 %2314
      %v2317 = vsel %vm654, %v2313, 0
      %v2320 = vsel %vm654, %v2315, 0
      %2322 = vmatprep.subr.bf16.mxu0 0
      %2323 = vmatpush1.bf16.xpose.msra.mxu0 %v2320
      %2324 = vmatprep.subr.bf16.mxu0 0
      %2325 = vmatpush1.bf16.xpose.msra.mxu0 0
      %2326 = vmatprep.subr.bf16.mxu0 0
      %2327 = vmatpush1.bf16.xpose.msra.mxu0 0
      %2328 = vmatprep.subr.bf16.mxu0 0
      %2329 = vmatpush1.bf16.xpose.msra.mxu0 0
      %2330 = vmatprep.subr.bf16.mxu0 0
      %2331 = vmatpush1.bf16.xpose.msra.mxu0 0
      %2332 = vmatprep.subr.bf16.mxu0 0
      %2333 = vmatpush1.bf16.xpose.msra.mxu0 0
      %2334 = vmatprep.subr.bf16.mxu0 0
      %2335 = vmatpush1.bf16.xpose.msra.mxu0 0
      %2336 = vmatprep.subr.bf16.mxu0 0
      %2337 = vmatpush1.bf16.xpose.msra.mxu0 0
      %2338 = vmatprep.subr.bf16.mxu0 0
      %2339 = vmatpush1.bf16.xpose.msra.mxu0 0
      %2340 = vmatprep.subr.bf16.mxu0 0
      %2341 = vmatpush1.bf16.xpose.msra.mxu0 0
      %2342 = vmatprep.subr.bf16.mxu0 0
      %2343 = vmatpush1.bf16.xpose.msra.mxu0 0
      %2344 = vmatprep.subr.bf16.mxu0 0
      %2345 = vmatpush1.bf16.xpose.msra.mxu0 0
      %2346 = vmatprep.subr.bf16.mxu0 0
      %2347 = vmatpush1.bf16.xpose.msra.mxu0 0
      %2348 = vmatprep.subr.bf16.mxu0 0
      %2349 = vmatpush1.bf16.xpose.msra.mxu0 0
      %2350 = vmatprep.subr.bf16.mxu0 0
      %2351 = vmatpush1.bf16.xpose.msra.mxu0 0
      %2352 = vmatprep.subr.bf16.mxu0 0
      %2353 = vmatpush1.bf16.xpose.msra.mxu0 0
      %2354 = vmatprep.mubr.bf16.mxu0 0
      %2355 = vmatmul.mubr.bf16.gmra.mrb[0].mxu0 %v2317
      %v2356 = vpop.f32.mrb[0].mxu0
      %v2357 = vadd.f32 %v1807, %v2356
      %v2358 = vpop.f32.mrb[0].mxu0
      %v2359 = vpop.f32.mrb[0].mxu0
      %v2360 = vpop.f32.mrb[0].mxu0
      %2361 = vdwg.mxu0
      %v2362 = vsel %vm654, %v2307, -inf
      %2363 = vmax.xlane.f32.xlu0 %v2362
      %v2364 = vpop.xlane.xlu0 %2363
      %v2365 = vsel %vm654, %v2357, -inf
      %2366 = vmax.xlane.f32.xlu0 %v2365
      %v2367 = vpop.xlane.xlu0 %2366
      %v2368 = vsub.f32 %v2307, %v2364
      %v2369 = vsub.f32 %v2357, %v2367
      %v2370 = vmul.f32 %v2368, 1.442695
      %v2371 = vpow.pop %v2370
      %v2372 = vmul.f32 %v2369, 1.442695
      %v2373 = vpow.pop %v2372
      %v2374 = vsel %vm654, %v2371, 0.0
      %2375 = vadd.xlane.f32.xlu0 %v2374
      %v2376 = vpop.xlane.xlu0 %2375
      %v2377 = vsel %vm654, %v2373, 0.0
      %2378 = vadd.xlane.f32.xlu0 %v2377
      %v2379 = vpop.xlane.xlu0 %2378
      %v2380 = vrcp.pop %v2376
      %v2381 = vrcp.pop %v2379
      %v2382 = vmul.f32 %v2371, %v2380
      %v2383 = vmul.f32 %v2373, %v2381
      %v2384 = vpack.c.bf16 %v2382, %v2382
      %v2385 = vpack.c.bf16 %v2383, %v2383
      %2386 = vrot.lane.b32.xlu0 %v1812, 80
      %v2387 = vpop.permute.xlu0 %2386
      %v2389 = vsel %vm654, %v2384, 0
      %v2392 = vsel %vm779, %v2387, 0
      %2394 = vmatprep.subr.bf16.mxu0 0
      %2395 = vmatpush1.bf16.msra.mxu0 %v2392
      %2396 = vmatprep.subr.bf16.mxu0 0
      %2397 = vmatpush1.bf16.msra.mxu0 0
      %2398 = vmatprep.subr.bf16.mxu0 0
      %2399 = vmatpush1.bf16.msra.mxu0 0
      %2400 = vmatprep.subr.bf16.mxu0 0
      %2401 = vmatpush1.bf16.msra.mxu0 0
      %2402 = vmatprep.subr.bf16.mxu0 0
      %2403 = vmatpush1.bf16.msra.mxu0 0
      %2404 = vmatprep.subr.bf16.mxu0 0
      %2405 = vmatpush1.bf16.msra.mxu0 0
      %2406 = vmatprep.subr.bf16.mxu0 0
      %2407 = vmatpush1.bf16.msra.mxu0 0
      %2408 = vmatprep.subr.bf16.mxu0 0
      %2409 = vmatpush1.bf16.msra.mxu0 0
      %2410 = vmatprep.subr.bf16.mxu0 0
      %2411 = vmatpush1.bf16.msra.mxu0 0
      %2412 = vmatprep.subr.bf16.mxu0 0
      %2413 = vmatpush1.bf16.msra.mxu0 0
      %2414 = vmatprep.subr.bf16.mxu0 0
      %2415 = vmatpush1.bf16.msra.mxu0 0
      %2416 = vmatprep.subr.bf16.mxu0 0
      %2417 = vmatpush1.bf16.msra.mxu0 0
      %2418 = vmatprep.subr.bf16.mxu0 0
      %2419 = vmatpush1.bf16.msra.mxu0 0
      %2420 = vmatprep.subr.bf16.mxu0 0
      %2421 = vmatpush1.bf16.msra.mxu0 0
      %2422 = vmatprep.subr.bf16.mxu0 0
      %2423 = vmatpush1.bf16.msra.mxu0 0
      %2424 = vmatprep.subr.bf16.mxu0 0
      %2425 = vmatpush1.bf16.msra.mxu0 0
      %2426 = vmatprep.mubr.bf16.mxu0 0
      %2427 = vmatmul.mubr.bf16.gmra.mrb[0].mxu0 %v2389
      %v2428 = vpop.f32.mrb[0].mxu0
      %v2429 = vadd.f32 0.0, %v2428
      %v2430 = vpop.f32.mrb[0].mxu0
      %v2431 = vpop.f32.mrb[0].mxu0
      %v2432 = vpop.f32.mrb[0].mxu0
      %2433 = vdwg.mxu0
      %2434 = vrot.lane.b32.xlu0 %v1813, 80
      %v2435 = vpop.permute.xlu0 %2434
      %v2437 = vsel %vm654, %v2385, 0
      %v2440 = vsel %vm779, %v2435, 0
      %2442 = vmatprep.subr.bf16.mxu0 0
      %2443 = vmatpush1.bf16.msra.mxu0 %v2440
      %2444 = vmatprep.subr.bf16.mxu0 0
      %2445 = vmatpush1.bf16.msra.mxu0 0
      %2446 = vmatprep.subr.bf16.mxu0 0
      %2447 = vmatpush1.bf16.msra.mxu0 0
      %2448 = vmatprep.subr.bf16.mxu0 0
      %2449 = vmatpush1.bf16.msra.mxu0 0
      %2450 = vmatprep.subr.bf16.mxu0 0
      %2451 = vmatpush1.bf16.msra.mxu0 0
      %2452 = vmatprep.subr.bf16.mxu0 0
      %2453 = vmatpush1.bf16.msra.mxu0 0
      %2454 = vmatprep.subr.bf16.mxu0 0
      %2455 = vmatpush1.bf16.msra.mxu0 0
      %2456 = vmatprep.subr.bf16.mxu0 0
      %2457 = vmatpush1.bf16.msra.mxu0 0
      %2458 = vmatprep.subr.bf16.mxu0 0
      %2459 = vmatpush1.bf16.msra.mxu0 0
      %2460 = vmatprep.subr.bf16.mxu0 0
      %2461 = vmatpush1.bf16.msra.mxu0 0
      %2462 = vmatprep.subr.bf16.mxu0 0
      %2463 = vmatpush1.bf16.msra.mxu0 0
      %2464 = vmatprep.subr.bf16.mxu0 0
      %2465 = vmatpush1.bf16.msra.mxu0 0
      %2466 = vmatprep.subr.bf16.mxu0 0
      %2467 = vmatpush1.bf16.msra.mxu0 0
      %2468 = vmatprep.subr.bf16.mxu0 0
      %2469 = vmatpush1.bf16.msra.mxu0 0
      %2470 = vmatprep.subr.bf16.mxu0 0
      %2471 = vmatpush1.bf16.msra.mxu0 0
      %2472 = vmatprep.subr.bf16.mxu0 0
      %2473 = vmatpush1.bf16.msra.mxu0 0
      %2474 = vmatprep.mubr.bf16.mxu0 0
      %2475 = vmatmul.mubr.bf16.gmra.mrb[0].mxu0 %v2437
      %v2476 = vpop.f32.mrb[0].mxu0
      %v2477 = vadd.f32 0.0, %v2476
      %v2478 = vpop.f32.mrb[0].mxu0
      %v2479 = vpop.f32.mrb[0].mxu0
      %v2480 = vpop.f32.mrb[0].mxu0
      %2481 = vdwg.mxu0
      %2484 = vrot.lane.b32.xlu0 %v2429, 16
      %v2485 = vpop.permute.xlu0 %2484
      %2486 = vrot.lane.b32.xlu0 %v2477, 16
      %v2487 = vpop.permute.xlu0 %2486
      %2490 = vst.msk [vmem:[#allocation2] sm:$0xff] %vm1334, %v2485
      %2491 = vst.msk [vmem:[#allocation2 + $0x8] sm:$0xff] %vm1334, %v2487
      %2492 = vrot.lane.b32.xlu0 %v1810, 104
      %v2493 = vpop.permute.xlu0 %2492
      %2494 = vrot.lane.b32.xlu0 %v1812, 104
      %v2495 = vpop.permute.xlu0 %2494
      %v2497 = vsel %vm654, %v2493, 0
      %v2500 = vsel %vm654, %v2495, 0
      %2502 = vmatprep.subr.bf16.mxu0 0
      %2503 = vmatpush1.bf16.xpose.msra.mxu0 %v2500
      %2504 = vmatprep.subr.bf16.mxu0 0
      %2505 = vmatpush1.bf16.xpose.msra.mxu0 0
      %2506 = vmatprep.subr.bf16.mxu0 0
      %2507 = vmatpush1.bf16.xpose.msra.mxu0 0
      %2508 = vmatprep.subr.bf16.mxu0 0
      %2509 = vmatpush1.bf16.xpose.msra.mxu0 0
      %2510 = vmatprep.subr.bf16.mxu0 0
      %2511 = vmatpush1.bf16.xpose.msra.mxu0 0
      %2512 = vmatprep.subr.bf16.mxu0 0
      %2513 = vmatpush1.bf16.xpose.msra.mxu0 0
      %2514 = vmatprep.subr.bf16.mxu0 0
      %2515 = vmatpush1.bf16.xpose.msra.mxu0 0
      %2516 = vmatprep.subr.bf16.mxu0 0
      %2517 = vmatpush1.bf16.xpose.msra.mxu0 0
      %2518 = vmatprep.subr.bf16.mxu0 0
      %2519 = vmatpush1.bf16.xpose.msra.mxu0 0
      %2520 = vmatprep.subr.bf16.mxu0 0
      %2521 = vmatpush1.bf16.xpose.msra.mxu0 0
      %2522 = vmatprep.subr.bf16.mxu0 0
      %2523 = vmatpush1.bf16.xpose.msra.mxu0 0
      %2524 = vmatprep.subr.bf16.mxu0 0
      %2525 = vmatpush1.bf16.xpose.msra.mxu0 0
      %2526 = vmatprep.subr.bf16.mxu0 0
      %2527 = vmatpush1.bf16.xpose.msra.mxu0 0
      %2528 = vmatprep.subr.bf16.mxu0 0
      %2529 = vmatpush1.bf16.xpose.msra.mxu0 0
      %2530 = vmatprep.subr.bf16.mxu0 0
      %2531 = vmatpush1.bf16.xpose.msra.mxu0 0
      %2532 = vmatprep.subr.bf16.mxu0 0
      %2533 = vmatpush1.bf16.xpose.msra.mxu0 0
      %2534 = vmatprep.mubr.bf16.mxu0 0
      %2535 = vmatmul.mubr.bf16.gmra.mrb[0].mxu0 %v2497
      %v2536 = vpop.f32.mrb[0].mxu0
      %v2537 = vadd.f32 %v1807, %v2536
      %v2538 = vpop.f32.mrb[0].mxu0
      %v2539 = vpop.f32.mrb[0].mxu0
      %v2540 = vpop.f32.mrb[0].mxu0
      %2541 = vdwg.mxu0
      %2542 = vrot.lane.b32.xlu0 %v1811, 104
      %v2543 = vpop.permute.xlu0 %2542
      %2544 = vrot.lane.b32.xlu0 %v1813, 104
      %v2545 = vpop.permute.xlu0 %2544
      %v2547 = vsel %vm654, %v2543, 0
      %v2550 = vsel %vm654, %v2545, 0
      %2552 = vmatprep.subr.bf16.mxu0 0
      %2553 = vmatpush1.bf16.xpose.msra.mxu0 %v2550
      %2554 = vmatprep.subr.bf16.mxu0 0
      %2555 = vmatpush1.bf16.xpose.msra.mxu0 0
      %2556 = vmatprep.subr.bf16.mxu0 0
      %2557 = vmatpush1.bf16.xpose.msra.mxu0 0
      %2558 = vmatprep.subr.bf16.mxu0 0
      %2559 = vmatpush1.bf16.xpose.msra.mxu0 0
      %2560 = vmatprep.subr.bf16.mxu0 0
      %2561 = vmatpush1.bf16.xpose.msra.mxu0 0
      %2562 = vmatprep.subr.bf16.mxu0 0
      %2563 = vmatpush1.bf16.xpose.msra.mxu0 0
      %2564 = vmatprep.subr.bf16.mxu0 0
      %2565 = vmatpush1.bf16.xpose.msra.mxu0 0
      %2566 = vmatprep.subr.bf16.mxu0 0
      %2567 = vmatpush1.bf16.xpose.msra.mxu0 0
      %2568 = vmatprep.subr.bf16.mxu0 0
      %2569 = vmatpush1.bf16.xpose.msra.mxu0 0
      %2570 = vmatprep.subr.bf16.mxu0 0
      %2571 = vmatpush1.bf16.xpose.msra.mxu0 0
      %2572 = vmatprep.subr.bf16.mxu0 0
      %2573 = vmatpush1.bf16.xpose.msra.mxu0 0
      %2574 = vmatprep.subr.bf16.mxu0 0
      %2575 = vmatpush1.bf16.xpose.msra.mxu0 0
      %2576 = vmatprep.subr.bf16.mxu0 0
      %2577 = vmatpush1.bf16.xpose.msra.mxu0 0
      %2578 = vmatprep.subr.bf16.mxu0 0
      %2579 = vmatpush1.bf16.xpose.msra.mxu0 0
      %2580 = vmatprep.subr.bf16.mxu0 0
      %2581 = vmatpush1.bf16.xpose.msra.mxu0 0
      %2582 = vmatprep.subr.bf16.mxu0 0
      %2583 = vmatpush1.bf16.xpose.msra.mxu0 0
      %2584 = vmatprep.mubr.bf16.mxu0 0
      %2585 = vmatmul.mubr.bf16.gmra.mrb[0].mxu0 %v2547
      %v2586 = vpop.f32.mrb[0].mxu0
      %v2587 = vadd.f32 %v1807, %v2586
      %v2588 = vpop.f32.mrb[0].mxu0
      %v2589 = vpop.f32.mrb[0].mxu0
      %v2590 = vpop.f32.mrb[0].mxu0
      %2591 = vdwg.mxu0
      %v2592 = vsel %vm654, %v2537, -inf
      %2593 = vmax.xlane.f32.xlu0 %v2592
      %v2594 = vpop.xlane.xlu0 %2593
      %v2595 = vsel %vm654, %v2587, -inf
      %2596 = vmax.xlane.f32.xlu0 %v2595
      %v2597 = vpop.xlane.xlu0 %2596
      %v2598 = vsub.f32 %v2537, %v2594
      %v2599 = vsub.f32 %v2587, %v2597
      %v2600 = vmul.f32 %v2598, 1.442695
      %v2601 = vpow.pop %v2600
      %v2602 = vmul.f32 %v2599, 1.442695
      %v2603 = vpow.pop %v2602
      %v2604 = vsel %vm654, %v2601, 0.0
      %2605 = vadd.xlane.f32.xlu0 %v2604
      %v2606 = vpop.xlane.xlu0 %2605
      %v2607 = vsel %vm654, %v2603, 0.0
      %2608 = vadd.xlane.f32.xlu0 %v2607
      %v2609 = vpop.xlane.xlu0 %2608
      %v2610 = vrcp.pop %v2606
      %v2611 = vrcp.pop %v2609
      %v2612 = vmul.f32 %v2601, %v2610
      %v2613 = vmul.f32 %v2603, %v2611
      %v2614 = vpack.c.bf16 %v2612, %v2612
      %v2615 = vpack.c.bf16 %v2613, %v2613
      %2616 = vrot.lane.b32.xlu0 %v1812, 72
      %v2617 = vpop.permute.xlu0 %2616
      %v2619 = vsel %vm654, %v2614, 0
      %v2622 = vsel %vm779, %v2617, 0
      %2624 = vmatprep.subr.bf16.mxu0 0
      %2625 = vmatpush1.bf16.msra.mxu0 %v2622
      %2626 = vmatprep.subr.bf16.mxu0 0
      %2627 = vmatpush1.bf16.msra.mxu0 0
      %2628 = vmatprep.subr.bf16.mxu0 0
      %2629 = vmatpush1.bf16.msra.mxu0 0
      %2630 = vmatprep.subr.bf16.mxu0 0
      %2631 = vmatpush1.bf16.msra.mxu0 0
      %2632 = vmatprep.subr.bf16.mxu0 0
      %2633 = vmatpush1.bf16.msra.mxu0 0
      %2634 = vmatprep.subr.bf16.mxu0 0
      %2635 = vmatpush1.bf16.msra.mxu0 0
      %2636 = vmatprep.subr.bf16.mxu0 0
      %2637 = vmatpush1.bf16.msra.mxu0 0
      %2638 = vmatprep.subr.bf16.mxu0 0
      %2639 = vmatpush1.bf16.msra.mxu0 0
      %2640 = vmatprep.subr.bf16.mxu0 0
      %2641 = vmatpush1.bf16.msra.mxu0 0
      %2642 = vmatprep.subr.bf16.mxu0 0
      %2643 = vmatpush1.bf16.msra.mxu0 0
      %2644 = vmatprep.subr.bf16.mxu0 0
      %2645 = vmatpush1.bf16.msra.mxu0 0
      %2646 = vmatprep.subr.bf16.mxu0 0
      %2647 = vmatpush1.bf16.msra.mxu0 0
      %2648 = vmatprep.subr.bf16.mxu0 0
      %2649 = vmatpush1.bf16.msra.mxu0 0
      %2650 = vmatprep.subr.bf16.mxu0 0
      %2651 = vmatpush1.bf16.msra.mxu0 0
      %2652 = vmatprep.subr.bf16.mxu0 0
      %2653 = vmatpush1.bf16.msra.mxu0 0
      %2654 = vmatprep.subr.bf16.mxu0 0
      %2655 = vmatpush1.bf16.msra.mxu0 0
      %2656 = vmatprep.mubr.bf16.mxu0 0
      %2657 = vmatmul.mubr.bf16.gmra.mrb[0].mxu0 %v2619
      %v2658 = vpop.f32.mrb[0].mxu0
      %v2659 = vadd.f32 0.0, %v2658
      %v2660 = vpop.f32.mrb[0].mxu0
      %v2661 = vpop.f32.mrb[0].mxu0
      %v2662 = vpop.f32.mrb[0].mxu0
      %2663 = vdwg.mxu0
      %2664 = vrot.lane.b32.xlu0 %v1813, 72
      %v2665 = vpop.permute.xlu0 %2664
      %v2667 = vsel %vm654, %v2615, 0
      %v2670 = vsel %vm779, %v2665, 0
      %2672 = vmatprep.subr.bf16.mxu0 0
      %2673 = vmatpush1.bf16.msra.mxu0 %v2670
      %2674 = vmatprep.subr.bf16.mxu0 0
      %2675 = vmatpush1.bf16.msra.mxu0 0
      %2676 = vmatprep.subr.bf16.mxu0 0
      %2677 = vmatpush1.bf16.msra.mxu0 0
      %2678 = vmatprep.subr.bf16.mxu0 0
      %2679 = vmatpush1.bf16.msra.mxu0 0
      %2680 = vmatprep.subr.bf16.mxu0 0
      %2681 = vmatpush1.bf16.msra.mxu0 0
      %2682 = vmatprep.subr.bf16.mxu0 0
      %2683 = vmatpush1.bf16.msra.mxu0 0
      %2684 = vmatprep.subr.bf16.mxu0 0
      %2685 = vmatpush1.bf16.msra.mxu0 0
      %2686 = vmatprep.subr.bf16.mxu0 0
      %2687 = vmatpush1.bf16.msra.mxu0 0
      %2688 = vmatprep.subr.bf16.mxu0 0
      %2689 = vmatpush1.bf16.msra.mxu0 0
      %2690 = vmatprep.subr.bf16.mxu0 0
      %2691 = vmatpush1.bf16.msra.mxu0 0
      %2692 = vmatprep.subr.bf16.mxu0 0
      %2693 = vmatpush1.bf16.msra.mxu0 0
      %2694 = vmatprep.subr.bf16.mxu0 0
      %2695 = vmatpush1.bf16.msra.mxu0 0
      %2696 = vmatprep.subr.bf16.mxu0 0
      %2697 = vmatpush1.bf16.msra.mxu0 0
      %2698 = vmatprep.subr.bf16.mxu0 0
      %2699 = vmatpush1.bf16.msra.mxu0 0
      %2700 = vmatprep.subr.bf16.mxu0 0
      %2701 = vmatpush1.bf16.msra.mxu0 0
      %2702 = vmatprep.subr.bf16.mxu0 0
      %2703 = vmatpush1.bf16.msra.mxu0 0
      %2704 = vmatprep.mubr.bf16.mxu0 0
      %2705 = vmatmul.mubr.bf16.gmra.mrb[0].mxu0 %v2667
      %v2706 = vpop.f32.mrb[0].mxu0
      %v2707 = vadd.f32 0.0, %v2706
      %v2708 = vpop.f32.mrb[0].mxu0
      %v2709 = vpop.f32.mrb[0].mxu0
      %v2710 = vpop.f32.mrb[0].mxu0
      %2711 = vdwg.mxu0
      %2714 = vrot.lane.b32.xlu0 %v2659, 24
      %v2715 = vpop.permute.xlu0 %2714
      %2716 = vrot.lane.b32.xlu0 %v2707, 24
      %v2717 = vpop.permute.xlu0 %2716
      %2720 = vst.msk [vmem:[#allocation2] sm:$0xff] %vm1565, %v2715
      %2721 = vst.msk [vmem:[#allocation2 + $0x8] sm:$0xff] %vm1565, %v2717
      %v2722 = vld [vmem:[#allocation2] sm:$0xff]
      %v2723 = vld [vmem:[#allocation2 + $0x8] sm:$0xff]
      %v2724 = vld [vmem:[%s535] sm:$0xf]
      %v2725 = vld [vmem:[%s535 + $0x4] sm:$0xf]
      %v2726 = vld [vmem:[%s535 + $0x8] sm:$0xf]
      %v2727 = vld [vmem:[%s535 + $0xc] sm:$0xf]
      %v2728 = vpack.c.bf16 %v2723, %v2722
      %v2729 = vlaneseq
      %v2730 = vshrl.u32 %v2729, 7
      %v2731 = vsub.s32 4, %v2730
      %v2732 = vrot.slane %v567, %v2731
      %v2737 = vunpack.c.l.b16 %v2724
      %v2738 = vunpack.c.l.b16 %v2725
      %v2739 = vunpack.c.l.b16 %v2726
      %v2740 = vunpack.c.l.b16 %v2727
      %v2741 = vpack.c.b16 %v2738, %v2737
      %v2742 = vpack.c.b16 %v2740, %v2739
      %v2746 = vsel %vm594, %v2728, 0
      %2748 = vmatprep.subr.bf16.mxu0 0
      %2749 = vmatpush1.bf16.msra.mxu0 %v2741
      %2750 = vmatprep.subr.bf16.mxu0 0
      %2751 = vmatpush1.bf16.msra.mxu0 %v2742
      %2752 = vmatprep.subr.bf16.mxu0 0
      %2753 = vmatpush1.bf16.msra.mxu0 0
      %2754 = vmatprep.subr.bf16.mxu0 0
      %2755 = vmatpush1.bf16.msra.mxu0 0
      %2756 = vmatprep.subr.bf16.mxu0 0
      %2757 = vmatpush1.bf16.msra.mxu0 0
      %2758 = vmatprep.subr.bf16.mxu0 0
      %2759 = vmatpush1.bf16.msra.mxu0 0
      %2760 = vmatprep.subr.bf16.mxu0 0
      %2761 = vmatpush1.bf16.msra.mxu0 0
      %2762 = vmatprep.subr.bf16.mxu0 0
      %2763 = vmatpush1.bf16.msra.mxu0 0
      %2764 = vmatprep.subr.bf16.mxu0 0
      %2765 = vmatpush1.bf16.msra.mxu0 0
      %2766 = vmatprep.subr.bf16.mxu0 0
      %2767 = vmatpush1.bf16.msra.mxu0 0
      %2768 = vmatprep.subr.bf16.mxu0 0
      %2769 = vmatpush1.bf16.msra.mxu0 0
      %2770 = vmatprep.subr.bf16.mxu0 0
      %2771 = vmatpush1.bf16.msra.mxu0 0
      %2772 = vmatprep.subr.bf16.mxu0 0
      %2773 = vmatpush1.bf16.msra.mxu0 0
      %2774 = vmatprep.subr.bf16.mxu0 0
      %2775 = vmatpush1.bf16.msra.mxu0 0
      %2776 = vmatprep.subr.bf16.mxu0 0
      %2777 = vmatpush1.bf16.msra.mxu0 0
      %2778 = vmatprep.subr.bf16.mxu0 0
      %2779 = vmatpush1.bf16.msra.mxu0 0
      %2780 = vmatprep.mubr.bf16.mxu0 0
      %2781 = vmatmul.mubr.bf16.gmra.mrb[0].mxu0 %v2746
      %v2782 = vpop.f32.mrb[0].mxu0
      %v2783 = vadd.f32 %v2732, %v2782
      %v2784 = vpop.f32.mrb[0].mxu0
      %v2785 = vpop.f32.mrb[0].mxu0
      %v2786 = vadd.f32 %v2732, %v2785
      %v2787 = vpop.f32.mrb[0].mxu0
      %2788 = vdwg.mxu0
      %v2789 = vadd.f32 %v1674, %v2783
      %v2790 = vadd.f32 %v1675, %v2786
      %v2791 = vsel %vm594, %v2789, 0.0
      %2792 = vadd.xlane.f32.xlu0 %v2791
      %v2793 = vpop.xlane.xlu0 %2792
      %v2794 = vsel %vm594, %v2790, 0.0
      %2795 = vadd.xlane.f32.xlu0 %v2794
      %v2796 = vpop.xlane.xlu0 %2795
      %v2797 = vmul.f32 %v2793, %v1643
      %v2798 = vmul.f32 %v2796, %v1643
      %v2799 = vsub.f32 %v2789, %v2797
      %v2800 = vsub.f32 %v2790, %v2798
      %v2801 = vmul.f32 %v2799, %v2799
      %v2802 = vmul.f32 %v2800, %v2800
      %v2803 = vsel %vm594, %v2801, 0.0
      %2804 = vadd.xlane.f32.xlu0 %v2803
      %v2805 = vpop.xlane.xlu0 %2804
      %v2806 = vsel %vm594, %v2802, 0.0
      %2807 = vadd.xlane.f32.xlu0 %v2806
      %v2808 = vpop.xlane.xlu0 %2807
      %v2809 = vmul.f32 %v2805, %v1643
      %v2810 = vmul.f32 %v2808, %v1643
      %v2811 = vadd.f32 %v2809, 1e-05
      %v2812 = vadd.f32 %v2810, 1e-05
      %v2813 = vrsqrt.pop %v2811
      %v2814 = vrsqrt.pop %v2812
      %v2815 = vmul.f32 %v2799, %v2813
      %v2816 = vmul.f32 %v2800, %v2814
      %v2817 = vlaneseq
      %v2818 = vshrl.u32 %v2817, 7
      %v2819 = vsub.s32 1, %v2818
      %v2820 = vrot.slane %v568, %v2819
      %v2821 = vmul.f32 %v2815, %v2820
      %v2822 = vmul.f32 %v2816, %v2820
      %v2823 = vlaneseq
      %v2824 = vshrl.u32 %v2823, 7
      %v2825 = vsub.s32 2, %v2824
      %v2826 = vrot.slane %v568, %v2825
      %v2827 = vadd.f32 %v2821, %v2826
      %v2828 = vadd.f32 %v2822, %v2826
      %v2829 = vld [vmem:[%s540] sm:$0xf]
      %v2830 = vld [vmem:[%s540 + $0x4] sm:$0xf]
      %v2831 = vld [vmem:[%s540 + $0x8] sm:$0xf]
      %v2832 = vld [vmem:[%s540 + $0xc] sm:$0xf]
      %v2833 = vpack.c.bf16 %v2828, %v2827
      %v2834 = vlaneseq
      %v2835 = vshrl.u32 %v2834, 7
      %v2836 = vsub.s32 5, %v2835
      %v2837 = vrot.slane %v567, %v2836
      %v2842 = vunpack.c.l.b16 %v2829
      %v2843 = vunpack.c.l.b16 %v2830
      %v2844 = vunpack.c.l.b16 %v2831
      %v2845 = vunpack.c.l.b16 %v2832
      %v2846 = vpack.c.b16 %v2843, %v2842
      %v2847 = vpack.c.b16 %v2845, %v2844
      %v2851 = vsel %vm594, %v2833, 0
      %2853 = vmatprep.subr.bf16.mxu0 0
      %2854 = vmatpush1.bf16.msra.mxu0 %v2846
      %2855 = vmatprep.subr.bf16.mxu0 0
      %2856 = vmatpush1.bf16.msra.mxu0 %v2847
      %2857 = vmatprep.subr.bf16.mxu0 0
      %2858 = vmatpush1.bf16.msra.mxu0 0
      %2859 = vmatprep.subr.bf16.mxu0 0
      %2860 = vmatpush1.bf16.msra.mxu0 0
      %2861 = vmatprep.subr.bf16.mxu0 0
      %2862 = vmatpush1.bf16.msra.mxu0 0
      %2863 = vmatprep.subr.bf16.mxu0 0
      %2864 = vmatpush1.bf16.msra.mxu0 0
      %2865 = vmatprep.subr.bf16.mxu0 0
      %2866 = vmatpush1.bf16.msra.mxu0 0
      %2867 = vmatprep.subr.bf16.mxu0 0
      %2868 = vmatpush1.bf16.msra.mxu0 0
      %2869 = vmatprep.subr.bf16.mxu0 0
      %2870 = vmatpush1.bf16.msra.mxu0 0
      %2871 = vmatprep.subr.bf16.mxu0 0
      %2872 = vmatpush1.bf16.msra.mxu0 0
      %2873 = vmatprep.subr.bf16.mxu0 0
      %2874 = vmatpush1.bf16.msra.mxu0 0
      %2875 = vmatprep.subr.bf16.mxu0 0
      %2876 = vmatpush1.bf16.msra.mxu0 0
      %2877 = vmatprep.subr.bf16.mxu0 0
      %2878 = vmatpush1.bf16.msra.mxu0 0
      %2879 = vmatprep.subr.bf16.mxu0 0
      %2880 = vmatpush1.bf16.msra.mxu0 0
      %2881 = vmatprep.subr.bf16.mxu0 0
      %2882 = vmatpush1.bf16.msra.mxu0 0
      %2883 = vmatprep.subr.bf16.mxu0 0
      %2884 = vmatpush1.bf16.msra.mxu0 0
      %2885 = vmatprep.mubr.bf16.mxu0 0
      %2886 = vmatmul.mubr.bf16.gmra.mrb[0].mxu0 %v2851
      %v2887 = vpop.f32.mrb[0].mxu0
      %v2888 = vadd.f32 %v2837, %v2887
      %v2889 = vpop.f32.mrb[0].mxu0
      %v2890 = vpop.f32.mrb[0].mxu0
      %v2891 = vadd.f32 %v2837, %v2890
      %v2892 = vpop.f32.mrb[0].mxu0
      %2893 = vdwg.mxu0
      %v2894 = vmax.f32 %v2888, 0.0
      %v2895 = vmax.f32 %v2891, 0.0
      %v2896 = vld [vmem:[%s545] sm:$0xf]
      %v2897 = vld [vmem:[%s545 + $0x4] sm:$0xf]
      %v2898 = vld [vmem:[%s545 + $0x8] sm:$0xf]
      %v2899 = vld [vmem:[%s545 + $0xc] sm:$0xf]
      %v2900 = vld [vmem:[%s545 + $0x10] sm:$0xf]
      %v2901 = vld [vmem:[%s545 + $0x14] sm:$0xf]
      %v2902 = vld [vmem:[%s545 + $0x18] sm:$0xf]
      %v2903 = vld [vmem:[%s545 + $0x1c] sm:$0xf]
      %v2904 = vpack.c.bf16 %v2895, %v2894
      %v2905 = vlaneseq
      %v2906 = vshrl.u32 %v2905, 7
      %v2907 = vsub.s32 6, %v2906
      %v2908 = vrot.slane %v567, %v2907
      %v2917 = vunpack.c.l.b16 %v2896
      %v2918 = vunpack.c.l.b16 %v2897
      %v2919 = vunpack.c.l.b16 %v2898
      %v2920 = vunpack.c.l.b16 %v2899
      %v2921 = vunpack.c.l.b16 %v2900
      %v2922 = vunpack.c.l.b16 %v2901
      %v2923 = vunpack.c.l.b16 %v2902
      %v2924 = vunpack.c.l.b16 %v2903
      %v2925 = vpack.c.b16 %v2918, %v2917
      %v2926 = vpack.c.b16 %v2920, %v2919
      %v2927 = vpack.c.b16 %v2922, %v2921
      %v2928 = vpack.c.b16 %v2924, %v2923
      %vm2933 = vcmask 523264
      %v2935 = vsel %vm2933, %v2904, 0
      %2937 = vmatprep.subr.bf16.mxu0 0
      %2938 = vmatpush1.bf16.msra.mxu0 %v2925
      %2939 = vmatprep.subr.bf16.mxu0 0
      %2940 = vmatpush1.bf16.msra.mxu0 %v2926
      %2941 = vmatprep.subr.bf16.mxu0 0
      %2942 = vmatpush1.bf16.msra.mxu0 %v2927
      %2943 = vmatprep.subr.bf16.mxu0 0
      %2944 = vmatpush1.bf16.msra.mxu0 %v2928
      %2945 = vmatprep.subr.bf16.mxu0 0
      %2946 = vmatpush1.bf16.msra.mxu0 0
      %2947 = vmatprep.subr.bf16.mxu0 0
      %2948 = vmatpush1.bf16.msra.mxu0 0
      %2949 = vmatprep.subr.bf16.mxu0 0
      %2950 = vmatpush1.bf16.msra.mxu0 0
      %2951 = vmatprep.subr.bf16.mxu0 0
      %2952 = vmatpush1.bf16.msra.mxu0 0
      %2953 = vmatprep.subr.bf16.mxu0 0
      %2954 = vmatpush1.bf16.msra.mxu0 0
      %2955 = vmatprep.subr.bf16.mxu0 0
      %2956 = vmatpush1.bf16.msra.mxu0 0
      %2957 = vmatprep.subr.bf16.mxu0 0
      %2958 = vmatpush1.bf16.msra.mxu0 0
      %2959 = vmatprep.subr.bf16.mxu0 0
      %2960 = vmatpush1.bf16.msra.mxu0 0
      %2961 = vmatprep.subr.bf16.mxu0 0
      %2962 = vmatpush1.bf16.msra.mxu0 0
      %2963 = vmatprep.subr.bf16.mxu0 0
      %2964 = vmatpush1.bf16.msra.mxu0 0
      %2965 = vmatprep.subr.bf16.mxu0 0
      %2966 = vmatpush1.bf16.msra.mxu0 0
      %2967 = vmatprep.subr.bf16.mxu0 0
      %2968 = vmatpush1.bf16.msra.mxu0 0
      %2969 = vmatprep.mubr.bf16.mxu0 0
      %2970 = vmatmul.mubr.bf16.gmra.mrb[0].mxu0 %v2935
      %v2971 = vpop.f32.mrb[0].mxu0
      %v2972 = vadd.f32 %v2908, %v2971
      %v2973 = vpop.f32.mrb[0].mxu0
      %v2974 = vpop.f32.mrb[0].mxu0
      %v2975 = vadd.f32 %v2908, %v2974
      %v2976 = vpop.f32.mrb[0].mxu0
      %2977 = vdwg.mxu0
      %v2978 = vadd.f32 %v2827, %v2972
      %v2979 = vadd.f32 %v2828, %v2975
      %v2980 = vsel %vm594, %v2978, 0.0
      %2981 = vadd.xlane.f32.xlu0 %v2980
      %v2982 = vpop.xlane.xlu0 %2981
      %v2983 = vsel %vm594, %v2979, 0.0
      %2984 = vadd.xlane.f32.xlu0 %v2983
      %v2985 = vpop.xlane.xlu0 %2984
      %v2986 = vmul.f32 %v2982, %v1643
      %v2987 = vmul.f32 %v2985, %v1643
      %v2988 = vsub.f32 %v2978, %v2986
      %v2989 = vsub.f32 %v2979, %v2987
      %v2990 = vmul.f32 %v2988, %v2988
      %v2991 = vmul.f32 %v2989, %v2989
      %v2992 = vsel %vm594, %v2990, 0.0
      %2993 = vadd.xlane.f32.xlu0 %v2992
      %v2994 = vpop.xlane.xlu0 %2993
      %v2995 = vsel %vm594, %v2991, 0.0
      %2996 = vadd.xlane.f32.xlu0 %v2995
      %v2997 = vpop.xlane.xlu0 %2996
      %v2998 = vmul.f32 %v2994, %v1643
      %v2999 = vmul.f32 %v2997, %v1643
      %v3000 = vadd.f32 %v2998, 1e-05
      %v3001 = vadd.f32 %v2999, 1e-05
      %v3002 = vrsqrt.pop %v3000
      %v3003 = vrsqrt.pop %v3001
      %v3004 = vmul.f32 %v2988, %v3002
      %v3005 = vmul.f32 %v2989, %v3003
      %v3006 = vlaneseq
      %v3007 = vshrl.u32 %v3006, 7
      %v3008 = vsub.s32 3, %v3007
      %v3009 = vrot.slane %v568, %v3008
      %v3010 = vmul.f32 %v3004, %v3009
      %v3011 = vmul.f32 %v3005, %v3009
      %v3012 = vlaneseq
      %v3013 = vshrl.u32 %v3012, 7
      %v3014 = vsub.s32 4, %v3013
      %v3015 = vrot.slane %v568, %v3014
      %v3016 = vadd.f32 %v3010, %v3015
      %v3017 = vadd.f32 %v3011, %v3015
      %3018 = vst.msk [vmem:[%s555] sm:$0xff] %vm594, %v3016
      %3019 = vst.msk [vmem:[%s555 + $0x8] sm:$0xff] %vm594, %v3017
      %s3020 = smul.u32 2, %s25
      %p3021 = scmp.lt.s32.totalorder %s3020, 1
      %s3022 = scalar_select %p3021, %s3020, 1
      %s3023 = smul.addr %s3022, 8
      %s3024 = scalar_lea.vmem %s10, %s3023
      // Predicated region
      $region65: #{transformer_decoder_forward.2} parent=59 // pred_check
        %p3025 = pneg %p311
      $region66: #{transformer_decoder_forward.2} parent=59 // pred_check_branch
        %3027 = sbr.rel (%p3025) target = $region68
      $region67: #{transformer_decoder_forward.2} parent=59 // pred_region
        %s3028 = smul.u32 2, %s25
      $region68: #{transformer_decoder_forward.2} parent=59 // pred_fallthru
        _
      // Predicated region
      $region69: #{transformer_decoder_forward.2} parent=59 // pred_check
        %p3029 = pneg %p311
      $region70: #{transformer_decoder_forward.2} parent=59 // pred_check_branch
        %3031 = sbr.rel (%p3029) target = $region72
      $region71: #{transformer_decoder_forward.2} parent=59 // pred_region
        %s3032 = smul.u32 2, %s25
        %p3033 = scmp.lt.s32.totalorder %s3032, 1
        %s3034 = scalar_select %p3033, %s3032, 1
        %s3035 = smul.addr %s3034, 8
        %s3036 = scalar_lea.vmem %s10, %s3035
      $region72: #{transformer_decoder_forward.2} parent=59 // pred_fallthru
        _
    $region60: #{transformer_decoder_forward.2} parent=5 // pred_fallthru
      _
    %p3037 = scmp.le.s32.totalorder 2, %s16
    // Predicated region
    $region73: #{transformer_decoder_forward.2} parent=5 // pred_check
      %p3038 = pneg %p3037
    $region74: #{transformer_decoder_forward.2} parent=5 // pred_check_branch
      %3040 = sbr.rel (%p3038) target = $region76
    $region75: #{transformer_decoder_forward.2} parent=5 // pred_region
      %s3041 = ssub.s32 %s16, 2
    $region76: #{transformer_decoder_forward.2} parent=5 // pred_fallthru
      _
  $region6: #{transformer_decoder_forward.2} parent=0 // loop_footer
    %s20 = sadd.s32 1, %s16
  $region7: #{transformer_decoder_forward.2} parent=0 // loop_footer_branch
    %15 = sbr.rel target = $region3
  $region8: #{transformer_decoder_forward.2} parent=0 // loop_exit
    _

</llo_original>
